<compile_context>
chip_gen: v7x
topology: tpu7x:2x2x1
jax: 0.10.0
libtpu: 0.0.40
codegen_flags: <defaults>
</compile_context>

<pallas_src>
import jax
import jax.numpy as jnp
import numpy as np
from jax import lax
from jax.experimental import pallas as pl
from jax.experimental.pallas import tpu as pltpu

MASK_VALUE = -10000000000.0
PADDING = 0
START = 1  # start-of-sequence token (global constant in the original repo)

# ---------------- model sizes (small, consistent with the module) -----------
B = 2            # batch
S_SRC = 8        # max_length_src
T_TRG = 8        # max_length_trg  (decoder runs T_TRG - 1 steps)
E_OUT = 16       # encoder_out_size
H = 32           # rnn_hidden_size (decoder)
EMB = 8          # embedding_size
V = 16           # target_vocab_size
NUM_LAYERS = 1   # num_rnn_layers (kernel implements the single-layer case)


# ---------------------------- Pallas kernel ---------------------------------
def decoder_kernel(encp_ref, mask_ref, woc_ref, wh_ref, bh_ref,
                   wk_ref, bk_ref, wlin_ref, blin_ref, out_ref):
    nb, s, ve = encp_ref.shape          # ve = V + E (encoder padded to V+E lanes)
    e = wk_ref.shape[1]                 # E
    h4 = woc_ref.shape[1]               # 4H
    hdim = wh_ref.shape[0]              # H
    wh_cols = wh_ref.shape[1]           # 256
    steps = out_ref.shape[1]
    v = out_ref.shape[2]

    # ---------------- loop-invariant work (computed once) -------------------
    encp = encp_ref[...]                                            # (nb,S,V+E)
    keys = (jnp.dot(encp.reshape(nb * s, ve), wk_ref[...],
                    preferred_element_type=jnp.float32)
            + bk_ref[...]).reshape(nb, s, e)                        # (nb,S,E)
    # masked_fill(-1e10) as additive bias; identical softmax result because
    # of the max-subtraction (keep the max-subtract!).
    mask_bias = jnp.where(mask_ref[:, 0, :] > 0.5,
                          jnp.float32(MASK_VALUE), jnp.float32(0.0))  # (nb,S)

    w_oc = woc_ref[...]                 # (V+E, 4H)  = [emb@Wih_emb ; Wih_ctx]
    w_h = wh_ref[...]                   # (H, 256)   = [Whh | Wq/sqrt(E) | 0]
    wlin = wlin_ref[...]                # (H, V)

    # hoisted bias broadcasts (JAX does not CSE broadcast_in_dim in a loop)
    bh_b = jnp.broadcast_to(bh_ref[...], (nb, wh_cols))            # (nb,256)
    blin_b = jnp.broadcast_to(blin_ref[...], (nb, v))              # (nb,V)

    vocab_ids = lax.broadcasted_iota(jnp.int32, (nb, v), 1)        # (nb,V)
    wide_ids = lax.broadcasted_iota(jnp.int32, (nb, ve), 1)        # (nb,V+E)

    h = jnp.zeros((nb, hdim), jnp.float32)
    c = jnp.zeros((nb, hdim), jnp.float32)
    pred = jnp.full((nb, 1), START, jnp.int32)

    # ---------------- autoregressive greedy decode (unrolled) ---------------
    for t in range(steps):
        # fused h matmul: lanes [:4H] = h@Whh + (bih+bhh), lanes [4H:4H+E] =
        # h@Wq/sqrt(E) + bq/sqrt(E)   (one MXU push/pop instead of two)
        hw = jnp.dot(h, w_h, preferred_element_type=jnp.float32) + bh_b  # (nb,256)
        q = hw[:, h4:h4 + e]                                             # (nb,E)

        # --- dot-product attention (VPU multiply + XLU reduce; no MXU) ---
        energy = jnp.sum(q[:, None, :] * keys, axis=2) + mask_bias       # (nb,S)
        shifted = energy - jnp.max(energy, axis=1, keepdims=True)
        expd = jnp.exp(shifted)
        inv_sum = pl.reciprocal(jnp.sum(expd, axis=1, keepdims=True),
                                approx=True)
        alphas = expd * inv_sum                                          # (nb,S)
        # context lands directly in lanes [V:V+E) of the fused LHS
        ctx_wide = jnp.sum(alphas[:, :, None] * encp, axis=1)            # (nb,V+E)

        # --- fused [onehot | context] @ [emb@Wih_emb ; Wih_ctx] (one MXU op)
        # pred < V always, so the one-hot is zero in lanes >= V; ctx_wide is
        # zero in lanes < V -> plain add builds the concatenated LHS.
        onehot_wide = (wide_ids == pred).astype(jnp.float32)             # (nb,V+E)
        lhs = onehot_wide + ctx_wide
        gates = (jnp.dot(lhs, w_oc, preferred_element_type=jnp.float32)
                 + hw[:, :h4])                                           # (nb,4H)
        sig = jax.nn.sigmoid(gates)                 # one sigmoid on full vreg
        i_g = sig[:, 0:hdim]
        f_g = sig[:, hdim:2 * hdim]
        o_g = sig[:, 3 * hdim:4 * hdim]
        g_g = jnp.tanh(gates[:, 2 * hdim:3 * hdim])
        c = f_g * c + i_g * g_g
        h = o_g * jnp.tanh(c)

        # --- output projection (dropout identity at inference) ---
        logits = jnp.dot(h, wlin, preferred_element_type=jnp.float32) + blin_b
        out_ref[:, t, :] = logits

        # --- greedy next token (ties -> lowest index like torch.max) ---
        m = jnp.max(logits, axis=1, keepdims=True)
        cand = jnp.where(logits == m, vocab_ids, v)
        pred = jnp.min(cand, axis=1, keepdims=True)   # int32, no extra cast


# ------------------------------ wrapper --------------------------------------
def _num_tensorcores():
    """Best-effort chip detection; fall back to 1 (safe / correct)."""
    try:
        kind = (jax.devices()[0].device_kind or "").lower()
    except Exception:
        return 1
    return 2 if ("v7" in kind or "tpu7" in kind) else 1


def rnn_decoder_forward(encoder_output, mask_f, params):
    """Runs the full greedy decode. Returns (B, V, T_TRG-1) like PyTorch."""
    steps = T_TRG - 1
    f32 = jnp.float32
    inv_sqrt_e = f32(1.0 / np.sqrt(np.float32(E_OUT)))

    # ----- one-time exact algebraic weight folds -----
    emb_gates = jnp.dot(params["emb"], params["wih"][:EMB, :])          # (V,4H)
    wih_ctx = params["wih"][EMB:, :]                                     # (E,4H)
    w_oc = jnp.concatenate([emb_gates, wih_ctx], axis=0)                 # (V+E,4H)

    w_h = jnp.zeros((H, 2 * 4 * H), f32)                                 # (H,256)
    w_h = w_h.at[:, :4 * H].set(params["whh"])
    w_h = w_h.at[:, 4 * H:4 * H + E_OUT].set(params["wq"] * inv_sqrt_e)

    b_h = jnp.zeros((1, 2 * 4 * H), f32)                                 # (1,256)
    b_h = b_h.at[:, :4 * H].set(params["bih"] + params["bhh"])
    b_h = b_h.at[:, 4 * H:4 * H + E_OUT].set(params["bq"] * inv_sqrt_e)

    # Encoder output padded to V+E lanes so the per-step context reduce lands
    # directly in the fused-LHS lanes (no per-step concat / lane shift).
    enc_pad = jnp.concatenate(
        [jnp.zeros((B, S_SRC, V), f32), encoder_output], axis=-1)        # (B,S,V+E)
    wk_pad = jnp.concatenate(
        [jnp.zeros((V, E_OUT), f32), params["wk"]], axis=0)              # (V+E,E)

    mask3 = mask_f.reshape(B, 1, S_SRC)                                  # (B,1,S)

    in_arrays = (enc_pad, mask3, w_oc, w_h, b_h,
                 wk_pad, params["bk"], params["wlin"], params["blin"])

    def full_spec(shape):
        nd = len(shape)
        return pl.BlockSpec(shape, lambda i, _nd=nd: (0,) * _nd)

    # v7x: shard the independent batch rows across the 2 TensorCores.
    # v5e/v6e: single invocation (a batch grid only adds per-step overhead).
    split_batch = (_num_tensorcores() >= 2) and (B > 1)
    if split_batch:
        grid = (B,)
        sem = ("parallel",)
        enc_spec = pl.BlockSpec((1, S_SRC, V + E_OUT), lambda i: (i, 0, 0))
        mask_spec = pl.BlockSpec((1, 1, S_SRC), lambda i: (i, 0, 0))
        out_spec = pl.BlockSpec((1, steps, V), lambda i: (i, 0, 0))
    else:
        grid = (1,)
        sem = ("arbitrary",)
        enc_spec = pl.BlockSpec((B, S_SRC, V + E_OUT), lambda i: (0, 0, 0))
        mask_spec = pl.BlockSpec((B, 1, S_SRC), lambda i: (0, 0, 0))
        out_spec = pl.BlockSpec((B, steps, V), lambda i: (0, 0, 0))

    in_specs = [enc_spec, mask_spec] + [full_spec(a.shape) for a in in_arrays[2:]]

    out = pl.pallas_call(
        decoder_kernel,
        out_shape=jax.ShapeDtypeStruct((B, steps, V), f32),
        grid_spec=pltpu.PrefetchScalarGridSpec(
            num_scalar_prefetch=0,
            grid=grid,
            in_specs=in_specs,
            out_specs=out_spec,
        ),
        compiler_params=pltpu.CompilerParams(dimension_semantics=sem),
    )(*in_arrays)
    return jnp.transpose(out, (0, 2, 1))                                 # (B,V,T-1)


# --------------------------- pure-JAX reference ------------------------------
def reference_forward(encoder_output, mask_f, params):
    steps = T_TRG - 1
    h = jnp.zeros((B, H), jnp.float32)
    c = jnp.zeros((B, H), jnp.float32)
    pred = jnp.full((B, 1), START, jnp.int32)
    outs = []
    vocab_ids = jnp.arange(V, dtype=jnp.int32)[None, :]
    for _ in range(steps):
        onehot = (vocab_ids == pred).astype(jnp.float32)
        embedded = onehot @ params["emb"]
        q = h @ params["wq"] + params["bq"]
        keys = (encoder_output.reshape(B * S_SRC, E_OUT) @ params["wk"]
                + params["bk"]).reshape(B, S_SRC, E_OUT)
        energy = jnp.sum(q[:, None, :] * keys, axis=2) / np.sqrt(E_OUT)
        energy = jnp.where(mask_f > 0.5, MASK_VALUE, energy)
        alphas = jax.nn.softmax(energy, axis=1)
        context = jnp.sum(alphas[:, :, None] * encoder_output, axis=1)
        x = jnp.concatenate([embedded, context], axis=1)
        gates = x @ params["wih"] + params["bih"] + h @ params["whh"] + params["bhh"]
        i_g = jax.nn.sigmoid(gates[:, 0:H])
        f_g = jax.nn.sigmoid(gates[:, H:2 * H])
        g_g = jnp.tanh(gates[:, 2 * H:3 * H])
        o_g = jax.nn.sigmoid(gates[:, 3 * H:4 * H])
        c = f_g * c + i_g * g_g
        h = o_g * jnp.tanh(c)
        logits = h @ params["wlin"] + params["blin"]
        outs.append(logits)
        pred = jnp.argmax(logits, axis=1).astype(jnp.int32)[:, None]
    return jnp.stack(outs, axis=2)                                        # (B,V,T-1)


# ------------------------------- main ----------------------------------------
if __name__ == "__main__":
    key = jax.random.PRNGKey(0)
    ks = jax.random.split(key, 16)

    def rnd(k, shape, scale=0.1):
        return (scale * jax.random.normal(k, shape)).astype(jnp.float32)

    # Parameters (PyTorch Linear weights are (out,in); stored here pre-transposed
    # as (in,out) so the kernel computes x @ W + b). Biases are (1,out).
    emb = rnd(ks[0], (V, EMB))
    emb = emb.at[PADDING].set(0.0)                     # padding_idx=0 row is zero
    params = dict(
        emb=emb,
        wq=rnd(ks[1], (H, E_OUT)),      bq=rnd(ks[2], (1, E_OUT)),
        wk=rnd(ks[3], (E_OUT, E_OUT)),  bk=rnd(ks[4], (1, E_OUT)),
        wih=rnd(ks[5], (EMB + E_OUT, 4 * H)), bih=rnd(ks[6], (1, 4 * H)),
        whh=rnd(ks[7], (H, 4 * H)),           bhh=rnd(ks[8], (1, 4 * H)),
        wlin=rnd(ks[9], (H, V)),              blin=rnd(ks[10], (1, V)),
    )

    encoder_output = rnd(ks[11], (B, S_SRC, E_OUT), scale=1.0)
    # mask: True (==1.0) on padded source positions; batch 0 unpadded, batch 1
    # has its last two positions padded.
    src_lengths = jnp.array([S_SRC, S_SRC - 2])
    positions = jnp.arange(S_SRC)[None, :]
    mask_f = (positions >= src_lengths[:, None]).astype(jnp.float32)

    # TODO(synk): dropout (train-mode) and teacher forcing (ratio>0 with
    # python random()) are stochastic; this kernel implements the default
    # eval / greedy path (dropout=identity, teacher_forcing_ratio=0.0).

    out = rnn_decoder_forward(encoder_output, mask_f, params)
    out = jax.block_until_ready(out)

    ref = jax.block_until_ready(reference_forward(encoder_output, mask_f, params))

    assert out.shape == (B, V, T_TRG - 1), out.shape
    assert bool(jnp.all(jnp.isfinite(out)))
    np.testing.assert_allclose(np.asarray(out), np.asarray(ref),
                               rtol=2e-3, atol=2e-3)
    print("KERNEL_OK")
</pallas_src>

<mosaic_0001>
module attributes {stable_mosaic.version = 11 : i64} {
  func.func @decoder_kernel(%arg0: i32, %arg1: memref<2x8x32xf32, #tpu.memory_space<vmem>>, %arg2: memref<2x1x8xf32, #tpu.memory_space<vmem>>, %arg3: memref<32x128xf32, #tpu.memory_space<vmem>>, %arg4: memref<32x256xf32, #tpu.memory_space<vmem>>, %arg5: memref<1x256xf32, #tpu.memory_space<vmem>>, %arg6: memref<32x16xf32, #tpu.memory_space<vmem>>, %arg7: memref<1x16xf32, #tpu.memory_space<vmem>>, %arg8: memref<32x16xf32, #tpu.memory_space<vmem>>, %arg9: memref<1x16xf32, #tpu.memory_space<vmem>>, %arg10: memref<2x7x16xf32, #tpu.memory_space<vmem>>) attributes {dimension_semantics = [#tpu.dimension_semantics<arbitrary>], iteration_bounds = array<i64: 1>, scalar_prefetch = 0 : i64, scratch_operands = 0 : i64, tpu.core_type = #tpu.core_type<tc>, window_params = [{pipeline_mode = #tpu.pipeline_mode<synchronous>, transform_indices = @transform_0, window_bounds = array<i64: 2, 8, 32>}, {pipeline_mode = #tpu.pipeline_mode<synchronous>, transform_indices = @transform_1, window_bounds = array<i64: 2, 1, 8>}, {pipeline_mode = #tpu.pipeline_mode<synchronous>, transform_indices = @transform_2, window_bounds = array<i64: 32, 128>}, {pipeline_mode = #tpu.pipeline_mode<synchronous>, transform_indices = @transform_3, window_bounds = array<i64: 32, 256>}, {pipeline_mode = #tpu.pipeline_mode<synchronous>, transform_indices = @transform_4, window_bounds = array<i64: 1, 256>}, {pipeline_mode = #tpu.pipeline_mode<synchronous>, transform_indices = @transform_5, window_bounds = array<i64: 32, 16>}, {pipeline_mode = #tpu.pipeline_mode<synchronous>, transform_indices = @transform_6, window_bounds = array<i64: 1, 16>}, {pipeline_mode = #tpu.pipeline_mode<synchronous>, transform_indices = @transform_7, window_bounds = array<i64: 32, 16>}, {pipeline_mode = #tpu.pipeline_mode<synchronous>, transform_indices = @transform_8, window_bounds = array<i64: 1, 16>}, {pipeline_mode = #tpu.pipeline_mode<synchronous>, transform_indices = @transform_9, window_bounds = array<i64: 2, 7, 16>}]} {
    %c0 = arith.constant 0 : index
    %c0_0 = arith.constant 0 : index
    %c0_1 = arith.constant 0 : index
    %0 = vector.load %arg1[%c0, %c0_0, %c0_1] : memref<2x8x32xf32, #tpu.memory_space<vmem>>, vector<2x8x32xf32>
    %1 = vector.shape_cast %0 : vector<2x8x32xf32> to vector<16x32xf32>
    %c0_2 = arith.constant 0 : index
    %c0_3 = arith.constant 0 : index
    %2 = vector.load %arg6[%c0_2, %c0_3] : memref<32x16xf32, #tpu.memory_space<vmem>>, vector<32x16xf32>
    %cst = arith.constant dense<0.000000e+00> : vector<16x16xf32>
    %3 = tpu.matmul %1, %2, %cst {dimension_numbers = #tpu.dot_dimension_numbers<[1], [0], [0], [1], [0, 0, 1, 1], [], []>} : vector<16x32xf32>, vector<32x16xf32>, vector<16x16xf32> -> vector<16x16xf32>
    %c0_4 = arith.constant 0 : index
    %c0_5 = arith.constant 0 : index
    %4 = vector.load %arg7[%c0_4, %c0_5] : memref<1x16xf32, #tpu.memory_space<vmem>>, vector<1x16xf32>
    %5 = vector.broadcast %4 : vector<1x16xf32> to vector<16x16xf32>
    %6 = arith.addf %3, %5 : vector<16x16xf32>
    %7 = vector.shape_cast %6 : vector<16x16xf32> to vector<2x8x16xf32>
    %c0_6 = arith.constant 0 : index
    %c0_7 = arith.constant 0 : index
    %c0_8 = arith.constant 0 : index
    %8 = vector.load %arg2[%c0_6, %c0_7, %c0_8] : memref<2x1x8xf32, #tpu.memory_space<vmem>>, vector<2x1x8xf32>
    %9 = vector.shape_cast %8 : vector<2x1x8xf32> to vector<2x8xf32>
    %cst_9 = arith.constant 5.000000e-01 : f32
    %10 = vector.broadcast %cst_9 : f32 to vector<2x8xf32>
    %11 = arith.cmpf ogt, %9, %10 : vector<2x8xf32>
    %cst_10 = arith.constant -1.000000e+10 : f32
    %cst_11 = arith.constant 0.000000e+00 : f32
    %12 = vector.broadcast %cst_10 : f32 to vector<2x8xf32>
    %13 = vector.broadcast %cst_11 : f32 to vector<2x8xf32>
    %14 = arith.select %11, %12, %13 : vector<2x8xi1>, vector<2x8xf32>
    %c0_12 = arith.constant 0 : index
    %c0_13 = arith.constant 0 : index
    %15 = vector.load %arg3[%c0_12, %c0_13] : memref<32x128xf32, #tpu.memory_space<vmem>>, vector<32x128xf32>
    %c0_14 = arith.constant 0 : index
    %c0_15 = arith.constant 0 : index
    %16 = vector.load %arg4[%c0_14, %c0_15] : memref<32x256xf32, #tpu.memory_space<vmem>>, vector<32x256xf32>
    %c0_16 = arith.constant 0 : index
    %c0_17 = arith.constant 0 : index
    %17 = vector.load %arg8[%c0_16, %c0_17] : memref<32x16xf32, #tpu.memory_space<vmem>>, vector<32x16xf32>
    %c0_18 = arith.constant 0 : index
    %c0_19 = arith.constant 0 : index
    %18 = vector.load %arg5[%c0_18, %c0_19] : memref<1x256xf32, #tpu.memory_space<vmem>>, vector<1x256xf32>
    %19 = vector.shape_cast %18 : vector<1x256xf32> to vector<1x256xf32>
    %20 = vector.broadcast %19 : vector<1x256xf32> to vector<2x256xf32>
    %c0_20 = arith.constant 0 : index
    %c0_21 = arith.constant 0 : index
    %21 = vector.load %arg9[%c0_20, %c0_21] : memref<1x16xf32, #tpu.memory_space<vmem>>, vector<1x16xf32>
    %22 = vector.shape_cast %21 : vector<1x16xf32> to vector<1x16xf32>
    %23 = vector.broadcast %22 : vector<1x16xf32> to vector<2x16xf32>
    %24 = tpu.iota {dimensions = array<i32: 1>} : vector<2x16xi32>
    %25 = tpu.iota {dimensions = array<i32: 1>} : vector<2x32xi32>
    %cst_22 = arith.constant 0.000000e+00 : f32
    %26 = vector.broadcast %cst_22 : f32 to vector<2x32xf32>
    %cst_23 = arith.constant 0.000000e+00 : f32
    %27 = vector.broadcast %cst_23 : f32 to vector<2x32xf32>
    %c1_i32 = arith.constant 1 : i32
    %28 = vector.broadcast %c1_i32 : i32 to vector<2x1xi32>
    %cst_24 = arith.constant dense<0.000000e+00> : vector<2x256xf32>
    %29 = tpu.matmul %26, %16, %cst_24 {dimension_numbers = #tpu.dot_dimension_numbers<[1], [0], [0], [1], [0, 0, 1, 1], [], []>} : vector<2x32xf32>, vector<32x256xf32>, vector<2x256xf32> -> vector<2x256xf32>
    %30 = arith.addf %29, %20 : vector<2x256xf32>
    %31 = vector.extract_strided_slice %30 {offsets = [0, 128], sizes = [2, 16], strides = [1, 1]} : vector<2x256xf32> to vector<2x16xf32>
    %32 = vector.shape_cast %31 : vector<2x16xf32> to vector<2x1x16xf32>
    %33 = vector.broadcast %32 : vector<2x1x16xf32> to vector<2x8x16xf32>
    %34 = arith.mulf %33, %7 : vector<2x8x16xf32>
    %cst_25 = arith.constant dense<0.000000e+00> : vector<2x8xf32>
    %35 = vector.multi_reduction <add>, %34, %cst_25 [2] : vector<2x8x16xf32> to vector<2x8xf32>
    %36 = arith.addf %35, %14 : vector<2x8xf32>
    %cst_26 = arith.constant dense<0xFF800000> : vector<2xf32>
    %37 = vector.multi_reduction <maximumf>, %36, %cst_26 [1] : vector<2x8xf32> to vector<2xf32>
    %38 = vector.shape_cast %37 : vector<2xf32> to vector<2x1xf32>
    %39 = vector.broadcast %38 : vector<2x1xf32> to vector<2x8xf32>
    %40 = arith.subf %36, %39 : vector<2x8xf32>
    %41 = math.exp %40 : vector<2x8xf32>
    %cst_27 = arith.constant dense<0.000000e+00> : vector<2xf32>
    %42 = vector.multi_reduction <add>, %41, %cst_27 [1] : vector<2x8xf32> to vector<2xf32>
    %43 = vector.shape_cast %42 : vector<2xf32> to vector<2x1xf32>
    %44 = tpu.reciprocal %43 {approx = true} : vector<2x1xf32> -> vector<2x1xf32>
    %45 = vector.broadcast %44 : vector<2x1xf32> to vector<2x8xf32>
    %46 = arith.mulf %41, %45 : vector<2x8xf32>
    %47 = vector.shape_cast %46 : vector<2x8xf32> to vector<2x8x1xf32>
    %48 = vector.broadcast %47 : vector<2x8x1xf32> to vector<2x8x32xf32>
    %49 = arith.mulf %48, %0 : vector<2x8x32xf32>
    %cst_28 = arith.constant dense<0.000000e+00> : vector<2x32xf32>
    %50 = vector.multi_reduction <add>, %49, %cst_28 [1] : vector<2x8x32xf32> to vector<2x32xf32>
    %51 = vector.broadcast %28 : vector<2x1xi32> to vector<2x32xi32>
    %52 = arith.cmpi eq, %25, %51 : vector<2x32xi32>
    %53 = arith.extui %52 : vector<2x32xi1> to vector<2x32xi32>
    %54 = arith.sitofp %53 : vector<2x32xi32> to vector<2x32xf32>
    %55 = arith.addf %54, %50 : vector<2x32xf32>
    %cst_29 = arith.constant dense<0.000000e+00> : vector<2x128xf32>
    %56 = tpu.matmul %55, %15, %cst_29 {dimension_numbers = #tpu.dot_dimension_numbers<[1], [0], [0], [1], [0, 0, 1, 1], [], []>} : vector<2x32xf32>, vector<32x128xf32>, vector<2x128xf32> -> vector<2x128xf32>
    %57 = vector.extract_strided_slice %30 {offsets = [0, 0], sizes = [2, 128], strides = [1, 1]} : vector<2x256xf32> to vector<2x128xf32>
    %58 = arith.addf %56, %57 : vector<2x128xf32>
    %59 = arith.negf %58 : vector<2x128xf32>
    %60 = math.exp %59 : vector<2x128xf32>
    %cst_30 = arith.constant 1.000000e+00 : f32
    %61 = vector.broadcast %cst_30 : f32 to vector<2x128xf32>
    %62 = arith.addf %61, %60 : vector<2x128xf32>
    %63 = arith.divf %61, %62 : vector<2x128xf32>
    %64 = vector.extract_strided_slice %63 {offsets = [0, 0], sizes = [2, 32], strides = [1, 1]} : vector<2x128xf32> to vector<2x32xf32>
    %65 = vector.extract_strided_slice %63 {offsets = [0, 32], sizes = [2, 32], strides = [1, 1]} : vector<2x128xf32> to vector<2x32xf32>
    %66 = vector.extract_strided_slice %63 {offsets = [0, 96], sizes = [2, 32], strides = [1, 1]} : vector<2x128xf32> to vector<2x32xf32>
    %67 = vector.extract_strided_slice %58 {offsets = [0, 64], sizes = [2, 32], strides = [1, 1]} : vector<2x128xf32> to vector<2x32xf32>
    %68 = math.tanh %67 : vector<2x32xf32>
    %69 = arith.mulf %65, %27 : vector<2x32xf32>
    %70 = arith.mulf %64, %68 : vector<2x32xf32>
    %71 = arith.addf %69, %70 : vector<2x32xf32>
    %72 = math.tanh %71 : vector<2x32xf32>
    %73 = arith.mulf %66, %72 : vector<2x32xf32>
    %cst_31 = arith.constant dense<0.000000e+00> : vector<2x16xf32>
    %74 = tpu.matmul %73, %17, %cst_31 {dimension_numbers = #tpu.dot_dimension_numbers<[1], [0], [0], [1], [0, 0, 1, 1], [], []>} : vector<2x32xf32>, vector<32x16xf32>, vector<2x16xf32> -> vector<2x16xf32>
    %75 = arith.addf %74, %23 : vector<2x16xf32>
    %c0_32 = arith.constant 0 : index
    %c0_33 = arith.constant 0 : index
    %c0_34 = arith.constant 0 : index
    %76 = vector.load %arg10[%c0_32, %c0_33, %c0_34] : memref<2x7x16xf32, #tpu.memory_space<vmem>>, vector<2x1x16xf32>
    %77 = vector.shape_cast %76 : vector<2x1x16xf32> to vector<2x16xf32>
    %78 = vector.shape_cast %75 : vector<2x16xf32> to vector<2x1x16xf32>
    tpu.vector_store %arg10[%c0_32, %c0_33, %c0_34], %78 {strides = array<i32>} : memref<2x7x16xf32, #tpu.memory_space<vmem>>, vector<2x1x16xf32>,
    %cst_35 = arith.constant dense<0xFF800000> : vector<2xf32>
    %79 = vector.multi_reduction <maximumf>, %75, %cst_35 [1] : vector<2x16xf32> to vector<2xf32>
    %80 = vector.shape_cast %79 : vector<2xf32> to vector<2x1xf32>
    %81 = vector.broadcast %80 : vector<2x1xf32> to vector<2x16xf32>
    %82 = arith.cmpf oeq, %75, %81 : vector<2x16xf32>
    %c16_i32 = arith.constant 16 : i32
    %83 = vector.broadcast %c16_i32 : i32 to vector<2x16xi32>
    %84 = arith.select %82, %24, %83 : vector<2x16xi1>, vector<2x16xi32>
    %cst_36 = arith.constant dense<2147483647> : vector<2xi32>
    %85 = vector.multi_reduction <minsi>, %84, %cst_36 [1] : vector<2x16xi32> to vector<2xi32>
    %86 = vector.shape_cast %85 : vector<2xi32> to vector<2x1xi32>
    %cst_37 = arith.constant dense<0.000000e+00> : vector<2x256xf32>
    %87 = tpu.matmul %73, %16, %cst_37 {dimension_numbers = #tpu.dot_dimension_numbers<[1], [0], [0], [1], [0, 0, 1, 1], [], []>} : vector<2x32xf32>, vector<32x256xf32>, vector<2x256xf32> -> vector<2x256xf32>
    %88 = arith.addf %87, %20 : vector<2x256xf32>
    %89 = vector.extract_strided_slice %88 {offsets = [0, 128], sizes = [2, 16], strides = [1, 1]} : vector<2x256xf32> to vector<2x16xf32>
    %90 = vector.shape_cast %89 : vector<2x16xf32> to vector<2x1x16xf32>
    %91 = vector.broadcast %90 : vector<2x1x16xf32> to vector<2x8x16xf32>
    %92 = arith.mulf %91, %7 : vector<2x8x16xf32>
    %cst_38 = arith.constant dense<0.000000e+00> : vector<2x8xf32>
    %93 = vector.multi_reduction <add>, %92, %cst_38 [2] : vector<2x8x16xf32> to vector<2x8xf32>
    %94 = arith.addf %93, %14 : vector<2x8xf32>
    %cst_39 = arith.constant dense<0xFF800000> : vector<2xf32>
    %95 = vector.multi_reduction <maximumf>, %94, %cst_39 [1] : vector<2x8xf32> to vector<2xf32>
    %96 = vector.shape_cast %95 : vector<2xf32> to vector<2x1xf32>
    %97 = vector.broadcast %96 : vector<2x1xf32> to vector<2x8xf32>
    %98 = arith.subf %94, %97 : vector<2x8xf32>
    %99 = math.exp %98 : vector<2x8xf32>
    %cst_40 = arith.constant dense<0.000000e+00> : vector<2xf32>
    %100 = vector.multi_reduction <add>, %99, %cst_40 [1] : vector<2x8xf32> to vector<2xf32>
    %101 = vector.shape_cast %100 : vector<2xf32> to vector<2x1xf32>
    %102 = tpu.reciprocal %101 {approx = true} : vector<2x1xf32> -> vector<2x1xf32>
    %103 = vector.broadcast %102 : vector<2x1xf32> to vector<2x8xf32>
    %104 = arith.mulf %99, %103 : vector<2x8xf32>
    %105 = vector.shape_cast %104 : vector<2x8xf32> to vector<2x8x1xf32>
    %106 = vector.broadcast %105 : vector<2x8x1xf32> to vector<2x8x32xf32>
    %107 = arith.mulf %106, %0 : vector<2x8x32xf32>
    %cst_41 = arith.constant dense<0.000000e+00> : vector<2x32xf32>
    %108 = vector.multi_reduction <add>, %107, %cst_41 [1] : vector<2x8x32xf32> to vector<2x32xf32>
    %109 = vector.broadcast %86 : vector<2x1xi32> to vector<2x32xi32>
    %110 = arith.cmpi eq, %25, %109 : vector<2x32xi32>
    %111 = arith.extui %110 : vector<2x32xi1> to vector<2x32xi32>
    %112 = arith.sitofp %111 : vector<2x32xi32> to vector<2x32xf32>
    %113 = arith.addf %112, %108 : vector<2x32xf32>
    %cst_42 = arith.constant dense<0.000000e+00> : vector<2x128xf32>
    %114 = tpu.matmul %113, %15, %cst_42 {dimension_numbers = #tpu.dot_dimension_numbers<[1], [0], [0], [1], [0, 0, 1, 1], [], []>} : vector<2x32xf32>, vector<32x128xf32>, vector<2x128xf32> -> vector<2x128xf32>
    %115 = vector.extract_strided_slice %88 {offsets = [0, 0], sizes = [2, 128], strides = [1, 1]} : vector<2x256xf32> to vector<2x128xf32>
    %116 = arith.addf %114, %115 : vector<2x128xf32>
    %117 = arith.negf %116 : vector<2x128xf32>
    %118 = math.exp %117 : vector<2x128xf32>
    %cst_43 = arith.constant 1.000000e+00 : f32
    %119 = vector.broadcast %cst_43 : f32 to vector<2x128xf32>
    %120 = arith.addf %119, %118 : vector<2x128xf32>
    %121 = arith.divf %119, %120 : vector<2x128xf32>
    %122 = vector.extract_strided_slice %121 {offsets = [0, 0], sizes = [2, 32], strides = [1, 1]} : vector<2x128xf32> to vector<2x32xf32>
    %123 = vector.extract_strided_slice %121 {offsets = [0, 32], sizes = [2, 32], strides = [1, 1]} : vector<2x128xf32> to vector<2x32xf32>
    %124 = vector.extract_strided_slice %121 {offsets = [0, 96], sizes = [2, 32], strides = [1, 1]} : vector<2x128xf32> to vector<2x32xf32>
    %125 = vector.extract_strided_slice %116 {offsets = [0, 64], sizes = [2, 32], strides = [1, 1]} : vector<2x128xf32> to vector<2x32xf32>
    %126 = math.tanh %125 : vector<2x32xf32>
    %127 = arith.mulf %123, %71 : vector<2x32xf32>
    %128 = arith.mulf %122, %126 : vector<2x32xf32>
    %129 = arith.addf %127, %128 : vector<2x32xf32>
    %130 = math.tanh %129 : vector<2x32xf32>
    %131 = arith.mulf %124, %130 : vector<2x32xf32>
    %cst_44 = arith.constant dense<0.000000e+00> : vector<2x16xf32>
    %132 = tpu.matmul %131, %17, %cst_44 {dimension_numbers = #tpu.dot_dimension_numbers<[1], [0], [0], [1], [0, 0, 1, 1], [], []>} : vector<2x32xf32>, vector<32x16xf32>, vector<2x16xf32> -> vector<2x16xf32>
    %133 = arith.addf %132, %23 : vector<2x16xf32>
    %c0_45 = arith.constant 0 : index
    %c1 = arith.constant 1 : index
    %c0_46 = arith.constant 0 : index
    %134 = vector.load %arg10[%c0_45, %c1, %c0_46] : memref<2x7x16xf32, #tpu.memory_space<vmem>>, vector<2x1x16xf32>
    %135 = vector.shape_cast %134 : vector<2x1x16xf32> to vector<2x16xf32>
    %136 = vector.shape_cast %133 : vector<2x16xf32> to vector<2x1x16xf32>
    tpu.vector_store %arg10[%c0_45, %c1, %c0_46], %136 {strides = array<i32>} : memref<2x7x16xf32, #tpu.memory_space<vmem>>, vector<2x1x16xf32>,
    %cst_47 = arith.constant dense<0xFF800000> : vector<2xf32>
    %137 = vector.multi_reduction <maximumf>, %133, %cst_47 [1] : vector<2x16xf32> to vector<2xf32>
    %138 = vector.shape_cast %137 : vector<2xf32> to vector<2x1xf32>
    %139 = vector.broadcast %138 : vector<2x1xf32> to vector<2x16xf32>
    %140 = arith.cmpf oeq, %133, %139 : vector<2x16xf32>
    %c16_i32_48 = arith.constant 16 : i32
    %141 = vector.broadcast %c16_i32_48 : i32 to vector<2x16xi32>
    %142 = arith.select %140, %24, %141 : vector<2x16xi1>, vector<2x16xi32>
    %cst_49 = arith.constant dense<2147483647> : vector<2xi32>
    %143 = vector.multi_reduction <minsi>, %142, %cst_49 [1] : vector<2x16xi32> to vector<2xi32>
    %144 = vector.shape_cast %143 : vector<2xi32> to vector<2x1xi32>
    %cst_50 = arith.constant dense<0.000000e+00> : vector<2x256xf32>
    %145 = tpu.matmul %131, %16, %cst_50 {dimension_numbers = #tpu.dot_dimension_numbers<[1], [0], [0], [1], [0, 0, 1, 1], [], []>} : vector<2x32xf32>, vector<32x256xf32>, vector<2x256xf32> -> vector<2x256xf32>
    %146 = arith.addf %145, %20 : vector<2x256xf32>
    %147 = vector.extract_strided_slice %146 {offsets = [0, 128], sizes = [2, 16], strides = [1, 1]} : vector<2x256xf32> to vector<2x16xf32>
    %148 = vector.shape_cast %147 : vector<2x16xf32> to vector<2x1x16xf32>
    %149 = vector.broadcast %148 : vector<2x1x16xf32> to vector<2x8x16xf32>
    %150 = arith.mulf %149, %7 : vector<2x8x16xf32>
    %cst_51 = arith.constant dense<0.000000e+00> : vector<2x8xf32>
    %151 = vector.multi_reduction <add>, %150, %cst_51 [2] : vector<2x8x16xf32> to vector<2x8xf32>
    %152 = arith.addf %151, %14 : vector<2x8xf32>
    %cst_52 = arith.constant dense<0xFF800000> : vector<2xf32>
    %153 = vector.multi_reduction <maximumf>, %152, %cst_52 [1] : vector<2x8xf32> to vector<2xf32>
    %154 = vector.shape_cast %153 : vector<2xf32> to vector<2x1xf32>
    %155 = vector.broadcast %154 : vector<2x1xf32> to vector<2x8xf32>
    %156 = arith.subf %152, %155 : vector<2x8xf32>
    %157 = math.exp %156 : vector<2x8xf32>
    %cst_53 = arith.constant dense<0.000000e+00> : vector<2xf32>
    %158 = vector.multi_reduction <add>, %157, %cst_53 [1] : vector<2x8xf32> to vector<2xf32>
    %159 = vector.shape_cast %158 : vector<2xf32> to vector<2x1xf32>
    %160 = tpu.reciprocal %159 {approx = true} : vector<2x1xf32> -> vector<2x1xf32>
    %161 = vector.broadcast %160 : vector<2x1xf32> to vector<2x8xf32>
    %162 = arith.mulf %157, %161 : vector<2x8xf32>
    %163 = vector.shape_cast %162 : vector<2x8xf32> to vector<2x8x1xf32>
    %164 = vector.broadcast %163 : vector<2x8x1xf32> to vector<2x8x32xf32>
    %165 = arith.mulf %164, %0 : vector<2x8x32xf32>
    %cst_54 = arith.constant dense<0.000000e+00> : vector<2x32xf32>
    %166 = vector.multi_reduction <add>, %165, %cst_54 [1] : vector<2x8x32xf32> to vector<2x32xf32>
    %167 = vector.broadcast %144 : vector<2x1xi32> to vector<2x32xi32>
    %168 = arith.cmpi eq, %25, %167 : vector<2x32xi32>
    %169 = arith.extui %168 : vector<2x32xi1> to vector<2x32xi32>
    %170 = arith.sitofp %169 : vector<2x32xi32> to vector<2x32xf32>
    %171 = arith.addf %170, %166 : vector<2x32xf32>
    %cst_55 = arith.constant dense<0.000000e+00> : vector<2x128xf32>
    %172 = tpu.matmul %171, %15, %cst_55 {dimension_numbers = #tpu.dot_dimension_numbers<[1], [0], [0], [1], [0, 0, 1, 1], [], []>} : vector<2x32xf32>, vector<32x128xf32>, vector<2x128xf32> -> vector<2x128xf32>
    %173 = vector.extract_strided_slice %146 {offsets = [0, 0], sizes = [2, 128], strides = [1, 1]} : vector<2x256xf32> to vector<2x128xf32>
    %174 = arith.addf %172, %173 : vector<2x128xf32>
    %175 = arith.negf %174 : vector<2x128xf32>
    %176 = math.exp %175 : vector<2x128xf32>
    %cst_56 = arith.constant 1.000000e+00 : f32
    %177 = vector.broadcast %cst_56 : f32 to vector<2x128xf32>
    %178 = arith.addf %177, %176 : vector<2x128xf32>
    %179 = arith.divf %177, %178 : vector<2x128xf32>
    %180 = vector.extract_strided_slice %179 {offsets = [0, 0], sizes = [2, 32], strides = [1, 1]} : vector<2x128xf32> to vector<2x32xf32>
    %181 = vector.extract_strided_slice %179 {offsets = [0, 32], sizes = [2, 32], strides = [1, 1]} : vector<2x128xf32> to vector<2x32xf32>
    %182 = vector.extract_strided_slice %179 {offsets = [0, 96], sizes = [2, 32], strides = [1, 1]} : vector<2x128xf32> to vector<2x32xf32>
    %183 = vector.extract_strided_slice %174 {offsets = [0, 64], sizes = [2, 32], strides = [1, 1]} : vector<2x128xf32> to vector<2x32xf32>
    %184 = math.tanh %183 : vector<2x32xf32>
    %185 = arith.mulf %181, %129 : vector<2x32xf32>
    %186 = arith.mulf %180, %184 : vector<2x32xf32>
    %187 = arith.addf %185, %186 : vector<2x32xf32>
    %188 = math.tanh %187 : vector<2x32xf32>
    %189 = arith.mulf %182, %188 : vector<2x32xf32>
    %cst_57 = arith.constant dense<0.000000e+00> : vector<2x16xf32>
    %190 = tpu.matmul %189, %17, %cst_57 {dimension_numbers = #tpu.dot_dimension_numbers<[1], [0], [0], [1], [0, 0, 1, 1], [], []>} : vector<2x32xf32>, vector<32x16xf32>, vector<2x16xf32> -> vector<2x16xf32>
    %191 = arith.addf %190, %23 : vector<2x16xf32>
    %c0_58 = arith.constant 0 : index
    %c2 = arith.constant 2 : index
    %c0_59 = arith.constant 0 : index
    %192 = vector.load %arg10[%c0_58, %c2, %c0_59] : memref<2x7x16xf32, #tpu.memory_space<vmem>>, vector<2x1x16xf32>
    %193 = vector.shape_cast %192 : vector<2x1x16xf32> to vector<2x16xf32>
    %194 = vector.shape_cast %191 : vector<2x16xf32> to vector<2x1x16xf32>
    tpu.vector_store %arg10[%c0_58, %c2, %c0_59], %194 {strides = array<i32>} : memref<2x7x16xf32, #tpu.memory_space<vmem>>, vector<2x1x16xf32>,
    %cst_60 = arith.constant dense<0xFF800000> : vector<2xf32>
    %195 = vector.multi_reduction <maximumf>, %191, %cst_60 [1] : vector<2x16xf32> to vector<2xf32>
    %196 = vector.shape_cast %195 : vector<2xf32> to vector<2x1xf32>
    %197 = vector.broadcast %196 : vector<2x1xf32> to vector<2x16xf32>
    %198 = arith.cmpf oeq, %191, %197 : vector<2x16xf32>
    %c16_i32_61 = arith.constant 16 : i32
    %199 = vector.broadcast %c16_i32_61 : i32 to vector<2x16xi32>
    %200 = arith.select %198, %24, %199 : vector<2x16xi1>, vector<2x16xi32>
    %cst_62 = arith.constant dense<2147483647> : vector<2xi32>
    %201 = vector.multi_reduction <minsi>, %200, %cst_62 [1] : vector<2x16xi32> to vector<2xi32>
    %202 = vector.shape_cast %201 : vector<2xi32> to vector<2x1xi32>
    %cst_63 = arith.constant dense<0.000000e+00> : vector<2x256xf32>
    %203 = tpu.matmul %189, %16, %cst_63 {dimension_numbers = #tpu.dot_dimension_numbers<[1], [0], [0], [1], [0, 0, 1, 1], [], []>} : vector<2x32xf32>, vector<32x256xf32>, vector<2x256xf32> -> vector<2x256xf32>
    %204 = arith.addf %203, %20 : vector<2x256xf32>
    %205 = vector.extract_strided_slice %204 {offsets = [0, 128], sizes = [2, 16], strides = [1, 1]} : vector<2x256xf32> to vector<2x16xf32>
    %206 = vector.shape_cast %205 : vector<2x16xf32> to vector<2x1x16xf32>
    %207 = vector.broadcast %206 : vector<2x1x16xf32> to vector<2x8x16xf32>
    %208 = arith.mulf %207, %7 : vector<2x8x16xf32>
    %cst_64 = arith.constant dense<0.000000e+00> : vector<2x8xf32>
    %209 = vector.multi_reduction <add>, %208, %cst_64 [2] : vector<2x8x16xf32> to vector<2x8xf32>
    %210 = arith.addf %209, %14 : vector<2x8xf32>
    %cst_65 = arith.constant dense<0xFF800000> : vector<2xf32>
    %211 = vector.multi_reduction <maximumf>, %210, %cst_65 [1] : vector<2x8xf32> to vector<2xf32>
    %212 = vector.shape_cast %211 : vector<2xf32> to vector<2x1xf32>
    %213 = vector.broadcast %212 : vector<2x1xf32> to vector<2x8xf32>
    %214 = arith.subf %210, %213 : vector<2x8xf32>
    %215 = math.exp %214 : vector<2x8xf32>
    %cst_66 = arith.constant dense<0.000000e+00> : vector<2xf32>
    %216 = vector.multi_reduction <add>, %215, %cst_66 [1] : vector<2x8xf32> to vector<2xf32>
    %217 = vector.shape_cast %216 : vector<2xf32> to vector<2x1xf32>
    %218 = tpu.reciprocal %217 {approx = true} : vector<2x1xf32> -> vector<2x1xf32>
    %219 = vector.broadcast %218 : vector<2x1xf32> to vector<2x8xf32>
    %220 = arith.mulf %215, %219 : vector<2x8xf32>
    %221 = vector.shape_cast %220 : vector<2x8xf32> to vector<2x8x1xf32>
    %222 = vector.broadcast %221 : vector<2x8x1xf32> to vector<2x8x32xf32>
    %223 = arith.mulf %222, %0 : vector<2x8x32xf32>
    %cst_67 = arith.constant dense<0.000000e+00> : vector<2x32xf32>
    %224 = vector.multi_reduction <add>, %223, %cst_67 [1] : vector<2x8x32xf32> to vector<2x32xf32>
    %225 = vector.broadcast %202 : vector<2x1xi32> to vector<2x32xi32>
    %226 = arith.cmpi eq, %25, %225 : vector<2x32xi32>
    %227 = arith.extui %226 : vector<2x32xi1> to vector<2x32xi32>
    %228 = arith.sitofp %227 : vector<2x32xi32> to vector<2x32xf32>
    %229 = arith.addf %228, %224 : vector<2x32xf32>
    %cst_68 = arith.constant dense<0.000000e+00> : vector<2x128xf32>
    %230 = tpu.matmul %229, %15, %cst_68 {dimension_numbers = #tpu.dot_dimension_numbers<[1], [0], [0], [1], [0, 0, 1, 1], [], []>} : vector<2x32xf32>, vector<32x128xf32>, vector<2x128xf32> -> vector<2x128xf32>
    %231 = vector.extract_strided_slice %204 {offsets = [0, 0], sizes = [2, 128], strides = [1, 1]} : vector<2x256xf32> to vector<2x128xf32>
    %232 = arith.addf %230, %231 : vector<2x128xf32>
    %233 = arith.negf %232 : vector<2x128xf32>
    %234 = math.exp %233 : vector<2x128xf32>
    %cst_69 = arith.constant 1.000000e+00 : f32
    %235 = vector.broadcast %cst_69 : f32 to vector<2x128xf32>
    %236 = arith.addf %235, %234 : vector<2x128xf32>
    %237 = arith.divf %235, %236 : vector<2x128xf32>
    %238 = vector.extract_strided_slice %237 {offsets = [0, 0], sizes = [2, 32], strides = [1, 1]} : vector<2x128xf32> to vector<2x32xf32>
    %239 = vector.extract_strided_slice %237 {offsets = [0, 32], sizes = [2, 32], strides = [1, 1]} : vector<2x128xf32> to vector<2x32xf32>
    %240 = vector.extract_strided_slice %237 {offsets = [0, 96], sizes = [2, 32], strides = [1, 1]} : vector<2x128xf32> to vector<2x32xf32>
    %241 = vector.extract_strided_slice %232 {offsets = [0, 64], sizes = [2, 32], strides = [1, 1]} : vector<2x128xf32> to vector<2x32xf32>
    %242 = math.tanh %241 : vector<2x32xf32>
    %243 = arith.mulf %239, %187 : vector<2x32xf32>
    %244 = arith.mulf %238, %242 : vector<2x32xf32>
    %245 = arith.addf %243, %244 : vector<2x32xf32>
    %246 = math.tanh %245 : vector<2x32xf32>
    %247 = arith.mulf %240, %246 : vector<2x32xf32>
    %cst_70 = arith.constant dense<0.000000e+00> : vector<2x16xf32>
    %248 = tpu.matmul %247, %17, %cst_70 {dimension_numbers = #tpu.dot_dimension_numbers<[1], [0], [0], [1], [0, 0, 1, 1], [], []>} : vector<2x32xf32>, vector<32x16xf32>, vector<2x16xf32> -> vector<2x16xf32>
    %249 = arith.addf %248, %23 : vector<2x16xf32>
    %c0_71 = arith.constant 0 : index
    %c3 = arith.constant 3 : index
    %c0_72 = arith.constant 0 : index
    %250 = vector.load %arg10[%c0_71, %c3, %c0_72] : memref<2x7x16xf32, #tpu.memory_space<vmem>>, vector<2x1x16xf32>
    %251 = vector.shape_cast %250 : vector<2x1x16xf32> to vector<2x16xf32>
    %252 = vector.shape_cast %249 : vector<2x16xf32> to vector<2x1x16xf32>
    tpu.vector_store %arg10[%c0_71, %c3, %c0_72], %252 {strides = array<i32>} : memref<2x7x16xf32, #tpu.memory_space<vmem>>, vector<2x1x16xf32>,
    %cst_73 = arith.constant dense<0xFF800000> : vector<2xf32>
    %253 = vector.multi_reduction <maximumf>, %249, %cst_73 [1] : vector<2x16xf32> to vector<2xf32>
    %254 = vector.shape_cast %253 : vector<2xf32> to vector<2x1xf32>
    %255 = vector.broadcast %254 : vector<2x1xf32> to vector<2x16xf32>
    %256 = arith.cmpf oeq, %249, %255 : vector<2x16xf32>
    %c16_i32_74 = arith.constant 16 : i32
    %257 = vector.broadcast %c16_i32_74 : i32 to vector<2x16xi32>
    %258 = arith.select %256, %24, %257 : vector<2x16xi1>, vector<2x16xi32>
    %cst_75 = arith.constant dense<2147483647> : vector<2xi32>
    %259 = vector.multi_reduction <minsi>, %258, %cst_75 [1] : vector<2x16xi32> to vector<2xi32>
    %260 = vector.shape_cast %259 : vector<2xi32> to vector<2x1xi32>
    %cst_76 = arith.constant dense<0.000000e+00> : vector<2x256xf32>
    %261 = tpu.matmul %247, %16, %cst_76 {dimension_numbers = #tpu.dot_dimension_numbers<[1], [0], [0], [1], [0, 0, 1, 1], [], []>} : vector<2x32xf32>, vector<32x256xf32>, vector<2x256xf32> -> vector<2x256xf32>
    %262 = arith.addf %261, %20 : vector<2x256xf32>
    %263 = vector.extract_strided_slice %262 {offsets = [0, 128], sizes = [2, 16], strides = [1, 1]} : vector<2x256xf32> to vector<2x16xf32>
    %264 = vector.shape_cast %263 : vector<2x16xf32> to vector<2x1x16xf32>
    %265 = vector.broadcast %264 : vector<2x1x16xf32> to vector<2x8x16xf32>
    %266 = arith.mulf %265, %7 : vector<2x8x16xf32>
    %cst_77 = arith.constant dense<0.000000e+00> : vector<2x8xf32>
    %267 = vector.multi_reduction <add>, %266, %cst_77 [2] : vector<2x8x16xf32> to vector<2x8xf32>
    %268 = arith.addf %267, %14 : vector<2x8xf32>
    %cst_78 = arith.constant dense<0xFF800000> : vector<2xf32>
    %269 = vector.multi_reduction <maximumf>, %268, %cst_78 [1] : vector<2x8xf32> to vector<2xf32>
    %270 = vector.shape_cast %269 : vector<2xf32> to vector<2x1xf32>
    %271 = vector.broadcast %270 : vector<2x1xf32> to vector<2x8xf32>
    %272 = arith.subf %268, %271 : vector<2x8xf32>
    %273 = math.exp %272 : vector<2x8xf32>
    %cst_79 = arith.constant dense<0.000000e+00> : vector<2xf32>
    %274 = vector.multi_reduction <add>, %273, %cst_79 [1] : vector<2x8xf32> to vector<2xf32>
    %275 = vector.shape_cast %274 : vector<2xf32> to vector<2x1xf32>
    %276 = tpu.reciprocal %275 {approx = true} : vector<2x1xf32> -> vector<2x1xf32>
    %277 = vector.broadcast %276 : vector<2x1xf32> to vector<2x8xf32>
    %278 = arith.mulf %273, %277 : vector<2x8xf32>
    %279 = vector.shape_cast %278 : vector<2x8xf32> to vector<2x8x1xf32>
    %280 = vector.broadcast %279 : vector<2x8x1xf32> to vector<2x8x32xf32>
    %281 = arith.mulf %280, %0 : vector<2x8x32xf32>
    %cst_80 = arith.constant dense<0.000000e+00> : vector<2x32xf32>
    %282 = vector.multi_reduction <add>, %281, %cst_80 [1] : vector<2x8x32xf32> to vector<2x32xf32>
    %283 = vector.broadcast %260 : vector<2x1xi32> to vector<2x32xi32>
    %284 = arith.cmpi eq, %25, %283 : vector<2x32xi32>
    %285 = arith.extui %284 : vector<2x32xi1> to vector<2x32xi32>
    %286 = arith.sitofp %285 : vector<2x32xi32> to vector<2x32xf32>
    %287 = arith.addf %286, %282 : vector<2x32xf32>
    %cst_81 = arith.constant dense<0.000000e+00> : vector<2x128xf32>
    %288 = tpu.matmul %287, %15, %cst_81 {dimension_numbers = #tpu.dot_dimension_numbers<[1], [0], [0], [1], [0, 0, 1, 1], [], []>} : vector<2x32xf32>, vector<32x128xf32>, vector<2x128xf32> -> vector<2x128xf32>
    %289 = vector.extract_strided_slice %262 {offsets = [0, 0], sizes = [2, 128], strides = [1, 1]} : vector<2x256xf32> to vector<2x128xf32>
    %290 = arith.addf %288, %289 : vector<2x128xf32>
    %291 = arith.negf %290 : vector<2x128xf32>
    %292 = math.exp %291 : vector<2x128xf32>
    %cst_82 = arith.constant 1.000000e+00 : f32
    %293 = vector.broadcast %cst_82 : f32 to vector<2x128xf32>
    %294 = arith.addf %293, %292 : vector<2x128xf32>
    %295 = arith.divf %293, %294 : vector<2x128xf32>
    %296 = vector.extract_strided_slice %295 {offsets = [0, 0], sizes = [2, 32], strides = [1, 1]} : vector<2x128xf32> to vector<2x32xf32>
    %297 = vector.extract_strided_slice %295 {offsets = [0, 32], sizes = [2, 32], strides = [1, 1]} : vector<2x128xf32> to vector<2x32xf32>
    %298 = vector.extract_strided_slice %295 {offsets = [0, 96], sizes = [2, 32], strides = [1, 1]} : vector<2x128xf32> to vector<2x32xf32>
    %299 = vector.extract_strided_slice %290 {offsets = [0, 64], sizes = [2, 32], strides = [1, 1]} : vector<2x128xf32> to vector<2x32xf32>
    %300 = math.tanh %299 : vector<2x32xf32>
    %301 = arith.mulf %297, %245 : vector<2x32xf32>
    %302 = arith.mulf %296, %300 : vector<2x32xf32>
    %303 = arith.addf %301, %302 : vector<2x32xf32>
    %304 = math.tanh %303 : vector<2x32xf32>
    %305 = arith.mulf %298, %304 : vector<2x32xf32>
    %cst_83 = arith.constant dense<0.000000e+00> : vector<2x16xf32>
    %306 = tpu.matmul %305, %17, %cst_83 {dimension_numbers = #tpu.dot_dimension_numbers<[1], [0], [0], [1], [0, 0, 1, 1], [], []>} : vector<2x32xf32>, vector<32x16xf32>, vector<2x16xf32> -> vector<2x16xf32>
    %307 = arith.addf %306, %23 : vector<2x16xf32>
    %c0_84 = arith.constant 0 : index
    %c4 = arith.constant 4 : index
    %c0_85 = arith.constant 0 : index
    %308 = vector.load %arg10[%c0_84, %c4, %c0_85] : memref<2x7x16xf32, #tpu.memory_space<vmem>>, vector<2x1x16xf32>
    %309 = vector.shape_cast %308 : vector<2x1x16xf32> to vector<2x16xf32>
    %310 = vector.shape_cast %307 : vector<2x16xf32> to vector<2x1x16xf32>
    tpu.vector_store %arg10[%c0_84, %c4, %c0_85], %310 {strides = array<i32>} : memref<2x7x16xf32, #tpu.memory_space<vmem>>, vector<2x1x16xf32>,
    %cst_86 = arith.constant dense<0xFF800000> : vector<2xf32>
    %311 = vector.multi_reduction <maximumf>, %307, %cst_86 [1] : vector<2x16xf32> to vector<2xf32>
    %312 = vector.shape_cast %311 : vector<2xf32> to vector<2x1xf32>
    %313 = vector.broadcast %312 : vector<2x1xf32> to vector<2x16xf32>
    %314 = arith.cmpf oeq, %307, %313 : vector<2x16xf32>
    %c16_i32_87 = arith.constant 16 : i32
    %315 = vector.broadcast %c16_i32_87 : i32 to vector<2x16xi32>
    %316 = arith.select %314, %24, %315 : vector<2x16xi1>, vector<2x16xi32>
    %cst_88 = arith.constant dense<2147483647> : vector<2xi32>
    %317 = vector.multi_reduction <minsi>, %316, %cst_88 [1] : vector<2x16xi32> to vector<2xi32>
    %318 = vector.shape_cast %317 : vector<2xi32> to vector<2x1xi32>
    %cst_89 = arith.constant dense<0.000000e+00> : vector<2x256xf32>
    %319 = tpu.matmul %305, %16, %cst_89 {dimension_numbers = #tpu.dot_dimension_numbers<[1], [0], [0], [1], [0, 0, 1, 1], [], []>} : vector<2x32xf32>, vector<32x256xf32>, vector<2x256xf32> -> vector<2x256xf32>
    %320 = arith.addf %319, %20 : vector<2x256xf32>
    %321 = vector.extract_strided_slice %320 {offsets = [0, 128], sizes = [2, 16], strides = [1, 1]} : vector<2x256xf32> to vector<2x16xf32>
    %322 = vector.shape_cast %321 : vector<2x16xf32> to vector<2x1x16xf32>
    %323 = vector.broadcast %322 : vector<2x1x16xf32> to vector<2x8x16xf32>
    %324 = arith.mulf %323, %7 : vector<2x8x16xf32>
    %cst_90 = arith.constant dense<0.000000e+00> : vector<2x8xf32>
    %325 = vector.multi_reduction <add>, %324, %cst_90 [2] : vector<2x8x16xf32> to vector<2x8xf32>
    %326 = arith.addf %325, %14 : vector<2x8xf32>
    %cst_91 = arith.constant dense<0xFF800000> : vector<2xf32>
    %327 = vector.multi_reduction <maximumf>, %326, %cst_91 [1] : vector<2x8xf32> to vector<2xf32>
    %328 = vector.shape_cast %327 : vector<2xf32> to vector<2x1xf32>
    %329 = vector.broadcast %328 : vector<2x1xf32> to vector<2x8xf32>
    %330 = arith.subf %326, %329 : vector<2x8xf32>
    %331 = math.exp %330 : vector<2x8xf32>
    %cst_92 = arith.constant dense<0.000000e+00> : vector<2xf32>
    %332 = vector.multi_reduction <add>, %331, %cst_92 [1] : vector<2x8xf32> to vector<2xf32>
    %333 = vector.shape_cast %332 : vector<2xf32> to vector<2x1xf32>
    %334 = tpu.reciprocal %333 {approx = true} : vector<2x1xf32> -> vector<2x1xf32>
    %335 = vector.broadcast %334 : vector<2x1xf32> to vector<2x8xf32>
    %336 = arith.mulf %331, %335 : vector<2x8xf32>
    %337 = vector.shape_cast %336 : vector<2x8xf32> to vector<2x8x1xf32>
    %338 = vector.broadcast %337 : vector<2x8x1xf32> to vector<2x8x32xf32>
    %339 = arith.mulf %338, %0 : vector<2x8x32xf32>
    %cst_93 = arith.constant dense<0.000000e+00> : vector<2x32xf32>
    %340 = vector.multi_reduction <add>, %339, %cst_93 [1] : vector<2x8x32xf32> to vector<2x32xf32>
    %341 = vector.broadcast %318 : vector<2x1xi32> to vector<2x32xi32>
    %342 = arith.cmpi eq, %25, %341 : vector<2x32xi32>
    %343 = arith.extui %342 : vector<2x32xi1> to vector<2x32xi32>
    %344 = arith.sitofp %343 : vector<2x32xi32> to vector<2x32xf32>
    %345 = arith.addf %344, %340 : vector<2x32xf32>
    %cst_94 = arith.constant dense<0.000000e+00> : vector<2x128xf32>
    %346 = tpu.matmul %345, %15, %cst_94 {dimension_numbers = #tpu.dot_dimension_numbers<[1], [0], [0], [1], [0, 0, 1, 1], [], []>} : vector<2x32xf32>, vector<32x128xf32>, vector<2x128xf32> -> vector<2x128xf32>
    %347 = vector.extract_strided_slice %320 {offsets = [0, 0], sizes = [2, 128], strides = [1, 1]} : vector<2x256xf32> to vector<2x128xf32>
    %348 = arith.addf %346, %347 : vector<2x128xf32>
    %349 = arith.negf %348 : vector<2x128xf32>
    %350 = math.exp %349 : vector<2x128xf32>
    %cst_95 = arith.constant 1.000000e+00 : f32
    %351 = vector.broadcast %cst_95 : f32 to vector<2x128xf32>
    %352 = arith.addf %351, %350 : vector<2x128xf32>
    %353 = arith.divf %351, %352 : vector<2x128xf32>
    %354 = vector.extract_strided_slice %353 {offsets = [0, 0], sizes = [2, 32], strides = [1, 1]} : vector<2x128xf32> to vector<2x32xf32>
    %355 = vector.extract_strided_slice %353 {offsets = [0, 32], sizes = [2, 32], strides = [1, 1]} : vector<2x128xf32> to vector<2x32xf32>
    %356 = vector.extract_strided_slice %353 {offsets = [0, 96], sizes = [2, 32], strides = [1, 1]} : vector<2x128xf32> to vector<2x32xf32>
    %357 = vector.extract_strided_slice %348 {offsets = [0, 64], sizes = [2, 32], strides = [1, 1]} : vector<2x128xf32> to vector<2x32xf32>
    %358 = math.tanh %357 : vector<2x32xf32>
    %359 = arith.mulf %355, %303 : vector<2x32xf32>
    %360 = arith.mulf %354, %358 : vector<2x32xf32>
    %361 = arith.addf %359, %360 : vector<2x32xf32>
    %362 = math.tanh %361 : vector<2x32xf32>
    %363 = arith.mulf %356, %362 : vector<2x32xf32>
    %cst_96 = arith.constant dense<0.000000e+00> : vector<2x16xf32>
    %364 = tpu.matmul %363, %17, %cst_96 {dimension_numbers = #tpu.dot_dimension_numbers<[1], [0], [0], [1], [0, 0, 1, 1], [], []>} : vector<2x32xf32>, vector<32x16xf32>, vector<2x16xf32> -> vector<2x16xf32>
    %365 = arith.addf %364, %23 : vector<2x16xf32>
    %c0_97 = arith.constant 0 : index
    %c5 = arith.constant 5 : index
    %c0_98 = arith.constant 0 : index
    %366 = vector.load %arg10[%c0_97, %c5, %c0_98] : memref<2x7x16xf32, #tpu.memory_space<vmem>>, vector<2x1x16xf32>
    %367 = vector.shape_cast %366 : vector<2x1x16xf32> to vector<2x16xf32>
    %368 = vector.shape_cast %365 : vector<2x16xf32> to vector<2x1x16xf32>
    tpu.vector_store %arg10[%c0_97, %c5, %c0_98], %368 {strides = array<i32>} : memref<2x7x16xf32, #tpu.memory_space<vmem>>, vector<2x1x16xf32>,
    %cst_99 = arith.constant dense<0xFF800000> : vector<2xf32>
    %369 = vector.multi_reduction <maximumf>, %365, %cst_99 [1] : vector<2x16xf32> to vector<2xf32>
    %370 = vector.shape_cast %369 : vector<2xf32> to vector<2x1xf32>
    %371 = vector.broadcast %370 : vector<2x1xf32> to vector<2x16xf32>
    %372 = arith.cmpf oeq, %365, %371 : vector<2x16xf32>
    %c16_i32_100 = arith.constant 16 : i32
    %373 = vector.broadcast %c16_i32_100 : i32 to vector<2x16xi32>
    %374 = arith.select %372, %24, %373 : vector<2x16xi1>, vector<2x16xi32>
    %cst_101 = arith.constant dense<2147483647> : vector<2xi32>
    %375 = vector.multi_reduction <minsi>, %374, %cst_101 [1] : vector<2x16xi32> to vector<2xi32>
    %376 = vector.shape_cast %375 : vector<2xi32> to vector<2x1xi32>
    %cst_102 = arith.constant dense<0.000000e+00> : vector<2x256xf32>
    %377 = tpu.matmul %363, %16, %cst_102 {dimension_numbers = #tpu.dot_dimension_numbers<[1], [0], [0], [1], [0, 0, 1, 1], [], []>} : vector<2x32xf32>, vector<32x256xf32>, vector<2x256xf32> -> vector<2x256xf32>
    %378 = arith.addf %377, %20 : vector<2x256xf32>
    %379 = vector.extract_strided_slice %378 {offsets = [0, 128], sizes = [2, 16], strides = [1, 1]} : vector<2x256xf32> to vector<2x16xf32>
    %380 = vector.shape_cast %379 : vector<2x16xf32> to vector<2x1x16xf32>
    %381 = vector.broadcast %380 : vector<2x1x16xf32> to vector<2x8x16xf32>
    %382 = arith.mulf %381, %7 : vector<2x8x16xf32>
    %cst_103 = arith.constant dense<0.000000e+00> : vector<2x8xf32>
    %383 = vector.multi_reduction <add>, %382, %cst_103 [2] : vector<2x8x16xf32> to vector<2x8xf32>
    %384 = arith.addf %383, %14 : vector<2x8xf32>
    %cst_104 = arith.constant dense<0xFF800000> : vector<2xf32>
    %385 = vector.multi_reduction <maximumf>, %384, %cst_104 [1] : vector<2x8xf32> to vector<2xf32>
    %386 = vector.shape_cast %385 : vector<2xf32> to vector<2x1xf32>
    %387 = vector.broadcast %386 : vector<2x1xf32> to vector<2x8xf32>
    %388 = arith.subf %384, %387 : vector<2x8xf32>
    %389 = math.exp %388 : vector<2x8xf32>
    %cst_105 = arith.constant dense<0.000000e+00> : vector<2xf32>
    %390 = vector.multi_reduction <add>, %389, %cst_105 [1] : vector<2x8xf32> to vector<2xf32>
    %391 = vector.shape_cast %390 : vector<2xf32> to vector<2x1xf32>
    %392 = tpu.reciprocal %391 {approx = true} : vector<2x1xf32> -> vector<2x1xf32>
    %393 = vector.broadcast %392 : vector<2x1xf32> to vector<2x8xf32>
    %394 = arith.mulf %389, %393 : vector<2x8xf32>
    %395 = vector.shape_cast %394 : vector<2x8xf32> to vector<2x8x1xf32>
    %396 = vector.broadcast %395 : vector<2x8x1xf32> to vector<2x8x32xf32>
    %397 = arith.mulf %396, %0 : vector<2x8x32xf32>
    %cst_106 = arith.constant dense<0.000000e+00> : vector<2x32xf32>
    %398 = vector.multi_reduction <add>, %397, %cst_106 [1] : vector<2x8x32xf32> to vector<2x32xf32>
    %399 = vector.broadcast %376 : vector<2x1xi32> to vector<2x32xi32>
    %400 = arith.cmpi eq, %25, %399 : vector<2x32xi32>
    %401 = arith.extui %400 : vector<2x32xi1> to vector<2x32xi32>
    %402 = arith.sitofp %401 : vector<2x32xi32> to vector<2x32xf32>
    %403 = arith.addf %402, %398 : vector<2x32xf32>
    %cst_107 = arith.constant dense<0.000000e+00> : vector<2x128xf32>
    %404 = tpu.matmul %403, %15, %cst_107 {dimension_numbers = #tpu.dot_dimension_numbers<[1], [0], [0], [1], [0, 0, 1, 1], [], []>} : vector<2x32xf32>, vector<32x128xf32>, vector<2x128xf32> -> vector<2x128xf32>
    %405 = vector.extract_strided_slice %378 {offsets = [0, 0], sizes = [2, 128], strides = [1, 1]} : vector<2x256xf32> to vector<2x128xf32>
    %406 = arith.addf %404, %405 : vector<2x128xf32>
    %407 = arith.negf %406 : vector<2x128xf32>
    %408 = math.exp %407 : vector<2x128xf32>
    %cst_108 = arith.constant 1.000000e+00 : f32
    %409 = vector.broadcast %cst_108 : f32 to vector<2x128xf32>
    %410 = arith.addf %409, %408 : vector<2x128xf32>
    %411 = arith.divf %409, %410 : vector<2x128xf32>
    %412 = vector.extract_strided_slice %411 {offsets = [0, 0], sizes = [2, 32], strides = [1, 1]} : vector<2x128xf32> to vector<2x32xf32>
    %413 = vector.extract_strided_slice %411 {offsets = [0, 32], sizes = [2, 32], strides = [1, 1]} : vector<2x128xf32> to vector<2x32xf32>
    %414 = vector.extract_strided_slice %411 {offsets = [0, 96], sizes = [2, 32], strides = [1, 1]} : vector<2x128xf32> to vector<2x32xf32>
    %415 = vector.extract_strided_slice %406 {offsets = [0, 64], sizes = [2, 32], strides = [1, 1]} : vector<2x128xf32> to vector<2x32xf32>
    %416 = math.tanh %415 : vector<2x32xf32>
    %417 = arith.mulf %413, %361 : vector<2x32xf32>
    %418 = arith.mulf %412, %416 : vector<2x32xf32>
    %419 = arith.addf %417, %418 : vector<2x32xf32>
    %420 = math.tanh %419 : vector<2x32xf32>
    %421 = arith.mulf %414, %420 : vector<2x32xf32>
    %cst_109 = arith.constant dense<0.000000e+00> : vector<2x16xf32>
    %422 = tpu.matmul %421, %17, %cst_109 {dimension_numbers = #tpu.dot_dimension_numbers<[1], [0], [0], [1], [0, 0, 1, 1], [], []>} : vector<2x32xf32>, vector<32x16xf32>, vector<2x16xf32> -> vector<2x16xf32>
    %423 = arith.addf %422, %23 : vector<2x16xf32>
    %c0_110 = arith.constant 0 : index
    %c6 = arith.constant 6 : index
    %c0_111 = arith.constant 0 : index
    %424 = vector.load %arg10[%c0_110, %c6, %c0_111] : memref<2x7x16xf32, #tpu.memory_space<vmem>>, vector<2x1x16xf32>
    %425 = vector.shape_cast %424 : vector<2x1x16xf32> to vector<2x16xf32>
    %426 = vector.shape_cast %423 : vector<2x16xf32> to vector<2x1x16xf32>
    tpu.vector_store %arg10[%c0_110, %c6, %c0_111], %426 {strides = array<i32>} : memref<2x7x16xf32, #tpu.memory_space<vmem>>, vector<2x1x16xf32>,
    return
  }
  func.func @transform_0(%arg0: i32) -> (i32, i32, i32) {
    %c0_i32 = arith.constant 0 : i32
    %c0_i32_0 = arith.constant 0 : i32
    %c0_i32_1 = arith.constant 0 : i32
    %c0_i32_2 = arith.constant 0 : i32
    return %c0_i32, %c0_i32_0, %c0_i32_1 : i32, i32, i32
  }
  func.func @transform_1(%arg0: i32) -> (i32, i32, i32) {
    %c0_i32 = arith.constant 0 : i32
    %c0_i32_0 = arith.constant 0 : i32
    %c0_i32_1 = arith.constant 0 : i32
    %c0_i32_2 = arith.constant 0 : i32
    return %c0_i32, %c0_i32_0, %c0_i32_1 : i32, i32, i32
  }
  func.func @transform_2(%arg0: i32) -> (i32, i32) {
    %c0_i32 = arith.constant 0 : i32
    %c0_i32_0 = arith.constant 0 : i32
    %c0_i32_1 = arith.constant 0 : i32
    return %c0_i32, %c0_i32_0 : i32, i32
  }
  func.func @transform_3(%arg0: i32) -> (i32, i32) {
    %c0_i32 = arith.constant 0 : i32
    %c0_i32_0 = arith.constant 0 : i32
    %c0_i32_1 = arith.constant 0 : i32
    return %c0_i32, %c0_i32_0 : i32, i32
  }
  func.func @transform_4(%arg0: i32) -> (i32, i32) {
    %c0_i32 = arith.constant 0 : i32
    %c0_i32_0 = arith.constant 0 : i32
    %c0_i32_1 = arith.constant 0 : i32
    return %c0_i32, %c0_i32_0 : i32, i32
  }
  func.func @transform_5(%arg0: i32) -> (i32, i32) {
    %c0_i32 = arith.constant 0 : i32
    %c0_i32_0 = arith.constant 0 : i32
    %c0_i32_1 = arith.constant 0 : i32
    return %c0_i32, %c0_i32_0 : i32, i32
  }
  func.func @transform_6(%arg0: i32) -> (i32, i32) {
    %c0_i32 = arith.constant 0 : i32
    %c0_i32_0 = arith.constant 0 : i32
    %c0_i32_1 = arith.constant 0 : i32
    return %c0_i32, %c0_i32_0 : i32, i32
  }
  func.func @transform_7(%arg0: i32) -> (i32, i32) {
    %c0_i32 = arith.constant 0 : i32
    %c0_i32_0 = arith.constant 0 : i32
    %c0_i32_1 = arith.constant 0 : i32
    return %c0_i32, %c0_i32_0 : i32, i32
  }
  func.func @transform_8(%arg0: i32) -> (i32, i32) {
    %c0_i32 = arith.constant 0 : i32
    %c0_i32_0 = arith.constant 0 : i32
    %c0_i32_1 = arith.constant 0 : i32
    return %c0_i32, %c0_i32_0 : i32, i32
  }
  func.func @transform_9(%arg0: i32) -> (i32, i32, i32) {
    %c0_i32 = arith.constant 0 : i32
    %c0_i32_0 = arith.constant 0 : i32
    %c0_i32_1 = arith.constant 0 : i32
    %c0_i32_2 = arith.constant 0 : i32
    return %c0_i32, %c0_i32_0, %c0_i32_1 : i32, i32, i32
  }
}

</mosaic_0001>

<llo_original>
// kernel: tpu_custom_call.1
$region0: #{tpu_custom_call.1}
  #allocation0 [shape = 'u32[]', space=smem, size = 0x4, offset = 0x4, fixed_abs, tag = 'smem constant byte address 0x4 - core index']
  #allocation1 [shape = 'u32[144,128]{1,0:T(1,128)}', space=vmem, size = 0x12000, scoped, tag = 'internal scratch']
  %s0 = inlined_call_operand.hbm [shape: f32[2,8,32], index: 0, kind: input, shape index: {}]
  %s1 = inlined_call_operand.vmem [shape: f32[2,1,8], index: 1, kind: input, shape index: {}]
  %s2 = inlined_call_operand.vmem [shape: f32[32,128], index: 2, kind: input, shape index: {}]
  %s3 = inlined_call_operand.vmem [shape: f32[32,256], index: 3, kind: input, shape index: {}]
  %s4 = inlined_call_operand.hbm [shape: f32[1,256], index: 4, kind: input, shape index: {}]
  %s5 = inlined_call_operand.vmem [shape: f32[32,16], index: 5, kind: input, shape index: {}]
  %s6 = inlined_call_operand.vmem [shape: f32[1,16], index: 6, kind: input, shape index: {}]
  %s7 = inlined_call_operand.vmem [shape: f32[32,16], index: 7, kind: input, shape index: {}]
  %s8 = inlined_call_operand.vmem [shape: f32[1,16], index: 8, kind: input, shape index: {}]
  %s9 = inlined_call_operand.vmem [shape: f32[2,7,16], index: 9, kind: output, shape index: {}]
  %s10 = sld [smem:[#allocation0]]
  $region54: #{tpu_custom_call.1} parent=0
    _
  %s12 = ssub.s32 1, %s10
  %s13 = scalar_select 0, %s12, %s10
  $region1: #{tpu_custom_call.1} parent=0
    #allocation2 [shape = 'u8[8192]{0}', space=vmem, size = 0x2000, scoped, tag = 'input window, operand 0, single buffered']
    #allocation3 [shape = 's32[1]{0}', space=sflag, size = 0x4, scoped, tag = 'scoped memory for tpu_custom_call.1']
    #allocation4 [shape = 'u8[1024]{0}', space=vmem, size = 0x400, scoped, tag = 'input window, operand 4, single buffered']
    #allocation5 [shape = 's32[1]{0}', space=sflag, size = 0x4, scoped, tag = 'scoped memory for tpu_custom_call.1']
    %14 = vsyncpa [#allocation3], 0
    %15 = vsyncpa [#allocation5], 0
    // Predicated region
    $region2: #{tpu_custom_call.1} parent=1 // pred_check
      _
    $region3: #{tpu_custom_call.1} parent=1 // pred_check_branch
      %17 = sbr.rel (0) target = $region5
    $region4: #{tpu_custom_call.1} parent=1 // pred_region
      %s19 = ssub.s32 256, 256
      %20 = vsyncadd [#allocation3], %s19
      %s21 = sshll.u32 [#allocation2], 4
      %s22 = int_to_ptr.vmem [resolvable:$true] %s21
      %27 = dma.hbm_to_vmem [thread:$0]  %s0, 256, %s22, [#allocation3], 128, 128, 8
    $region5: #{tpu_custom_call.1} parent=1 // pred_fallthru
      _
    // Predicated region
    $region6: #{tpu_custom_call.1} parent=1 // pred_check
      _
    $region7: #{tpu_custom_call.1} parent=1 // pred_check_branch
      %29 = sbr.rel (0) target = $region9
    $region8: #{tpu_custom_call.1} parent=1 // pred_region
      _
    $region9: #{tpu_custom_call.1} parent=1 // pred_fallthru
      _
    // Predicated region
    $region10: #{tpu_custom_call.1} parent=1 // pred_check
      _
    $region11: #{tpu_custom_call.1} parent=1 // pred_check_branch
      %31 = sbr.rel (0) target = $region13
    $region12: #{tpu_custom_call.1} parent=1 // pred_region
      _
    $region13: #{tpu_custom_call.1} parent=1 // pred_fallthru
      _
    // Predicated region
    $region14: #{tpu_custom_call.1} parent=1 // pred_check
      _
    $region15: #{tpu_custom_call.1} parent=1 // pred_check_branch
      %33 = sbr.rel (0) target = $region17
    $region16: #{tpu_custom_call.1} parent=1 // pred_region
      _
    $region17: #{tpu_custom_call.1} parent=1 // pred_fallthru
      _
    // Predicated region
    $region18: #{tpu_custom_call.1} parent=1 // pred_check
      _
    $region19: #{tpu_custom_call.1} parent=1 // pred_check_branch
      %35 = sbr.rel (0) target = $region21
    $region20: #{tpu_custom_call.1} parent=1 // pred_region
      %s37 = ssub.s32 32, 32
      %38 = vsyncadd [#allocation5], %s37
      %s40 = sshll.u32 [#allocation4], 4
      %s41 = int_to_ptr.vmem [resolvable:$true] %s40
      %43 = dma.hbm_to_vmem [thread:$0]  %s4, 32, %s41, [#allocation5]
    $region21: #{tpu_custom_call.1} parent=1 // pred_fallthru
      _
    // Predicated region
    $region22: #{tpu_custom_call.1} parent=1 // pred_check
      _
    $region23: #{tpu_custom_call.1} parent=1 // pred_check_branch
      %45 = sbr.rel (0) target = $region25
    $region24: #{tpu_custom_call.1} parent=1 // pred_region
      _
    $region25: #{tpu_custom_call.1} parent=1 // pred_fallthru
      _
    // Predicated region
    $region26: #{tpu_custom_call.1} parent=1 // pred_check
      _
    $region27: #{tpu_custom_call.1} parent=1 // pred_check_branch
      %47 = sbr.rel (0) target = $region29
    $region28: #{tpu_custom_call.1} parent=1 // pred_region
      _
    $region29: #{tpu_custom_call.1} parent=1 // pred_fallthru
      _
    // Predicated region
    $region30: #{tpu_custom_call.1} parent=1 // pred_check
      _
    $region31: #{tpu_custom_call.1} parent=1 // pred_check_branch
      %49 = sbr.rel (0) target = $region33
    $region32: #{tpu_custom_call.1} parent=1 // pred_region
      _
    $region33: #{tpu_custom_call.1} parent=1 // pred_fallthru
      _
    // Predicated region
    $region34: #{tpu_custom_call.1} parent=1 // pred_check
      _
    $region35: #{tpu_custom_call.1} parent=1 // pred_check_branch
      %51 = sbr.rel (0) target = $region37
    $region36: #{tpu_custom_call.1} parent=1 // pred_region
      _
    $region37: #{tpu_custom_call.1} parent=1 // pred_fallthru
      _
    // Predicated region
    $region38: #{tpu_custom_call.1} parent=1 // pred_check
      _
    $region39: #{tpu_custom_call.1} parent=1 // pred_check_branch
      %53 = sbr.rel (0) target = $region41
    $region40: #{tpu_custom_call.1} parent=1 // pred_region
      %54 = dma.done [#allocation3], 256
    $region41: #{tpu_custom_call.1} parent=1 // pred_fallthru
      _
    // Predicated region
    $region42: #{tpu_custom_call.1} parent=1 // pred_check
      _
    $region43: #{tpu_custom_call.1} parent=1 // pred_check_branch
      %56 = sbr.rel (0) target = $region45
    $region44: #{tpu_custom_call.1} parent=1 // pred_region
      %57 = dma.done [#allocation5], 32
    $region45: #{tpu_custom_call.1} parent=1 // pred_fallthru
      _
    %v58 = vld [vmem:[#allocation2] sm:$0xff]
    %v59 = vld [vmem:[#allocation2 + $0x8] sm:$0xff]
    %v60 = vld [vmem:[%s5] sm:$0xff]
    %v61 = vld [vmem:[%s5 + $0x8] sm:$0xff]
    %v62 = vld [vmem:[%s5 + $0x10] sm:$0xff]
    %v63 = vld [vmem:[%s5 + $0x18] sm:$0xff]
    %v64 = vld [vmem:[%s6] sm:$0x1]
    %v66 = vlaneseq
    %v67 = vshrl.u32 %v66, 7
    %v68 = vsub.s32 0, %v67
    %v69 = vrot.slane %v64, %v68
    %vm71 = vcmask 261120
    %v73 = vsel %vm71, %v58, 0
    %v76 = vsel %vm71, %v59, 0
    %78 = vmatprep.subr.mxu0 0.0
    %79 = vmatpush1.msra.mxu0 %v60
    %80 = vmatprep.subr.mxu0 0.0
    %81 = vmatpush1.msra.mxu0 %v61
    %82 = vmatprep.subr.mxu0 0.0
    %83 = vmatpush1.msra.mxu0 %v62
    %84 = vmatprep.subr.mxu0 0.0
    %85 = vmatpush1.msra.mxu0 %v63
    %86 = vmatprep.subr.mxu0 0.0
    %87 = vmatpush1.msra.mxu0 0.0
    %88 = vmatprep.subr.mxu0 0.0
    %89 = vmatpush1.msra.mxu0 0.0
    %90 = vmatprep.subr.mxu0 0.0
    %91 = vmatpush1.msra.mxu0 0.0
    %92 = vmatprep.subr.mxu0 0.0
    %93 = vmatpush1.msra.mxu0 0.0
    %94 = vmatprep.subr.mxu0 0.0
    %95 = vmatpush1.msra.mxu0 0.0
    %96 = vmatprep.subr.mxu0 0.0
    %97 = vmatpush1.msra.mxu0 0.0
    %98 = vmatprep.subr.mxu0 0.0
    %99 = vmatpush1.msra.mxu0 0.0
    %100 = vmatprep.subr.mxu0 0.0
    %101 = vmatpush1.msra.mxu0 0.0
    %102 = vmatprep.subr.mxu0 0.0
    %103 = vmatpush1.msra.mxu0 0.0
    %104 = vmatprep.subr.mxu0 0.0
    %105 = vmatpush1.msra.mxu0 0.0
    %106 = vmatprep.subr.mxu0 0.0
    %107 = vmatpush1.msra.mxu0 0.0
    %108 = vmatprep.subr.mxu0 0.0
    %109 = vmatpush1.msra.mxu0 0.0
    %110 = vmatprep.subr.mxu0 0.0
    %111 = vmatpush1.msra.mxu0 0.0
    %112 = vmatprep.subr.mxu0 0.0
    %113 = vmatpush1.msra.mxu0 0.0
    %114 = vmatprep.subr.mxu0 0.0
    %115 = vmatpush1.msra.mxu0 0.0
    %116 = vmatprep.subr.mxu0 0.0
    %117 = vmatpush1.msra.mxu0 0.0
    %118 = vmatprep.subr.mxu0 0.0
    %119 = vmatpush1.msra.mxu0 0.0
    %120 = vmatprep.subr.mxu0 0.0
    %121 = vmatpush1.msra.mxu0 0.0
    %122 = vmatprep.subr.mxu0 0.0
    %123 = vmatpush1.msra.mxu0 0.0
    %124 = vmatprep.subr.mxu0 0.0
    %125 = vmatpush1.msra.mxu0 0.0
    %126 = vmatprep.subr.mxu0 0.0
    %127 = vmatpush1.msra.mxu0 0.0
    %128 = vmatprep.subr.mxu0 0.0
    %129 = vmatpush1.msra.mxu0 0.0
    %130 = vmatprep.subr.mxu0 0.0
    %131 = vmatpush1.msra.mxu0 0.0
    %132 = vmatprep.subr.mxu0 0.0
    %133 = vmatpush1.msra.mxu0 0.0
    %134 = vmatprep.subr.mxu0 0.0
    %135 = vmatpush1.msra.mxu0 0.0
    %136 = vmatprep.subr.mxu0 0.0
    %137 = vmatpush1.msra.mxu0 0.0
    %138 = vmatprep.subr.mxu0 0.0
    %139 = vmatpush1.msra.mxu0 0.0
    %140 = vmatprep.subr.mxu0 0.0
    %141 = vmatpush1.msra.mxu0 0.0
    %142 = vmatprep.mubr.f32.mxu0 0.0
    %143 = vmatmul.mubr.f32.gmra.mrb[0].mxu0 %v73
    %v144 = vpop.f32.mrb[0].mxu0
    %v145 = vadd.f32 %v69, %v144
    %v146 = vpop.f32.mrb[0].mxu0
    %147 = vmatprep.mubr.f32.mxu0 0.0
    %148 = vmatmul.mubr.f32.gmra.mrb[0].mxu0 %v76
    %v149 = vpop.f32.mrb[0].mxu0
    %v150 = vadd.f32 %v69, %v149
    %v151 = vpop.f32.mrb[0].mxu0
    %152 = vdwg.mxu0
    %v153 = vld [vmem:[%s1] sm:$0x1]
    %v154 = vld [vmem:[%s1 + $0x1] sm:$0x1]
    %vm155 = vcmp.gt.f32.partialorder %v153, 0.5
    %vm156 = vcmp.gt.f32.partialorder %v154, 0.5
    %v157 = vsel %vm155, -1e+10, 0.0
    %v158 = vsel %vm156, -1e+10, 0.0
    %v159 = vld [vmem:[%s2] sm:$0xff]
    %v160 = vld [vmem:[%s2 + $0x8] sm:$0xff]
    %v161 = vld [vmem:[%s2 + $0x10] sm:$0xff]
    %v162 = vld [vmem:[%s2 + $0x18] sm:$0xff]
    %v163 = vld [vmem:[%s3] sm:$0xff]
    %v164 = vld [vmem:[%s3 + $0x8] sm:$0xff]
    %v165 = vld [vmem:[%s3 + $0x10] sm:$0xff]
    %v166 = vld [vmem:[%s3 + $0x18] sm:$0xff]
    %v167 = vld [vmem:[%s3 + $0x20] sm:$0xff]
    %v168 = vld [vmem:[%s3 + $0x28] sm:$0xff]
    %v169 = vld [vmem:[%s3 + $0x30] sm:$0xff]
    %v170 = vld [vmem:[%s3 + $0x38] sm:$0xff]
    %v171 = vld [vmem:[%s7] sm:$0xff]
    %v172 = vld [vmem:[%s7 + $0x8] sm:$0xff]
    %v173 = vld [vmem:[%s7 + $0x10] sm:$0xff]
    %v174 = vld [vmem:[%s7 + $0x18] sm:$0xff]
    %v175 = vld [vmem:[#allocation4] sm:$0x3]
    %v177 = vlaneseq
    %v178 = vshrl.u32 %v177, 7
    %v179 = vsub.s32 0, %v178
    %v180 = vrot.slane %v175, %v179
    %v181 = vlaneseq
    %v182 = vshrl.u32 %v181, 7
    %v183 = vsub.s32 1, %v182
    %v184 = vrot.slane %v175, %v183
    %v187 = vld [vmem:[%s8] sm:$0x1]
    %v189 = vlaneseq
    %v190 = vshrl.u32 %v189, 7
    %v191 = vsub.s32 0, %v190
    %v192 = vrot.slane %v187, %v191
    %v194 = vlaneseq
    %v195 = vand.u32 %v194, 127
    %v197 = vsel %vm71, 0.0, 0
    %199 = vmatprep.subr.mxu0 %v164
    %200 = vmatpush1.msra.mxu0 %v163
    %201 = vmatprep.subr.mxu0 %v166
    %202 = vmatpush1.msra.mxu0 %v165
    %203 = vmatprep.subr.mxu0 %v168
    %204 = vmatpush1.msra.mxu0 %v167
    %205 = vmatprep.subr.mxu0 %v170
    %206 = vmatpush1.msra.mxu0 %v169
    %207 = vmatprep.subr.mxu0 0.0
    %208 = vmatpush1.msra.mxu0 0.0
    %209 = vmatprep.subr.mxu0 0.0
    %210 = vmatpush1.msra.mxu0 0.0
    %211 = vmatprep.subr.mxu0 0.0
    %212 = vmatpush1.msra.mxu0 0.0
    %213 = vmatprep.subr.mxu0 0.0
    %214 = vmatpush1.msra.mxu0 0.0
    %215 = vmatprep.subr.mxu0 0.0
    %216 = vmatpush1.msra.mxu0 0.0
    %217 = vmatprep.subr.mxu0 0.0
    %218 = vmatpush1.msra.mxu0 0.0
    %219 = vmatprep.subr.mxu0 0.0
    %220 = vmatpush1.msra.mxu0 0.0
    %221 = vmatprep.subr.mxu0 0.0
    %222 = vmatpush1.msra.mxu0 0.0
    %223 = vmatprep.subr.mxu0 0.0
    %224 = vmatpush1.msra.mxu0 0.0
    %225 = vmatprep.subr.mxu0 0.0
    %226 = vmatpush1.msra.mxu0 0.0
    %227 = vmatprep.subr.mxu0 0.0
    %228 = vmatpush1.msra.mxu0 0.0
    %229 = vmatprep.subr.mxu0 0.0
    %230 = vmatpush1.msra.mxu0 0.0
    %231 = vmatprep.subr.mxu0 0.0
    %232 = vmatpush1.msra.mxu0 0.0
    %233 = vmatprep.subr.mxu0 0.0
    %234 = vmatpush1.msra.mxu0 0.0
    %235 = vmatprep.subr.mxu0 0.0
    %236 = vmatpush1.msra.mxu0 0.0
    %237 = vmatprep.subr.mxu0 0.0
    %238 = vmatpush1.msra.mxu0 0.0
    %239 = vmatprep.subr.mxu0 0.0
    %240 = vmatpush1.msra.mxu0 0.0
    %241 = vmatprep.subr.mxu0 0.0
    %242 = vmatpush1.msra.mxu0 0.0
    %243 = vmatprep.subr.mxu0 0.0
    %244 = vmatpush1.msra.mxu0 0.0
    %245 = vmatprep.subr.mxu0 0.0
    %246 = vmatpush1.msra.mxu0 0.0
    %247 = vmatprep.subr.mxu0 0.0
    %248 = vmatpush1.msra.mxu0 0.0
    %249 = vmatprep.subr.mxu0 0.0
    %250 = vmatpush1.msra.mxu0 0.0
    %251 = vmatprep.subr.mxu0 0.0
    %252 = vmatpush1.msra.mxu0 0.0
    %253 = vmatprep.subr.mxu0 0.0
    %254 = vmatpush1.msra.mxu0 0.0
    %255 = vmatprep.subr.mxu0 0.0
    %256 = vmatpush1.msra.mxu0 0.0
    %257 = vmatprep.subr.mxu0 0.0
    %258 = vmatpush1.msra.mxu0 0.0
    %259 = vmatprep.subr.mxu0 0.0
    %260 = vmatpush1.msra.mxu0 0.0
    %261 = vmatprep.subr.mxu0 0.0
    %262 = vmatpush1.msra.mxu0 0.0
    %263 = vmatprep.mubr.f32.mxu0 0.0
    %264 = vmatmul.mubr.f32.gmra.mrb[0].mxu0 %v197
    %v265 = vpop.f32.mrb[0].mxu0
    %v266 = vadd.f32 %v180, %v265
    %v267 = vpop.f32.mrb[0].mxu0
    %v268 = vadd.f32 %v184, %v267
    %269 = vdwg.mxu0
    %v272 = vunpack.c.l.s4 1966171168
    %v273 = vunpack.c.0.s8 %v272
    %v274 = vlaneseq
    %v275 = vshrl.u32 %v274, 7
    %v276 = vsub.s32 %v273, %v275
    %v277 = vrot.slane %v268, %v276
    %v278 = vcombine.high %v277, %v277
    %v280 = vunpack.c.l.s4 1966171168
    %v281 = vunpack.c.0.s8 %v280
    %v282 = vlaneseq
    %v283 = vshrl.u32 %v282, 7
    %v284 = vsub.s32 %v281, %v283
    %v285 = vrot.slane %v277, %v284
    %v287 = vunpack.c.l.s4 1966171168
    %v288 = vunpack.c.0.s8 %v287
    %v289 = vlaneseq
    %v290 = vshrl.u32 %v289, 7
    %v291 = vsub.s32 %v288, %v290
    %v292 = vrot.slane %v278, %v291
    %v293 = vlaneseq
    %v294 = vshrl.u32 %v293, 7
    %v295 = vsub.s32 0, %v294
    %v296 = vrot.slane %v285, %v295
    %v297 = vlaneseq
    %v298 = vshrl.u32 %v297, 7
    %v299 = vsub.s32 0, %v298
    %v300 = vrot.slane %v292, %v299
    %v303 = vmul.f32 %v296, %v145
    %v304 = vmul.f32 %v300, %v150
    %vm305 = vcmask 130048
    %v306 = vsel %vm305, %v303, 0.0
    %307 = vadd.xlane.f32.xlu0 %v306
    %v308 = vpop.xlane.xlu0 %307
    %v309 = vsel %vm305, %v304, 0.0
    %310 = vadd.xlane.f32.xlu0 %v309
    %v311 = vpop.xlane.xlu0 %310
    %v314 = vlaneseq
    %v315 = vshrl.u32 %v314, 7
    %v316 = vsub.s32 0, %v315
    %v317 = vrot.slane %v157, %v316
    %v318 = vlaneseq
    %v319 = vshrl.u32 %v318, 7
    %v320 = vsub.s32 0, %v319
    %v321 = vrot.slane %v158, %v320
    %323 = vbcast.lane.b32.xlu0 %v317, 256
    %v324 = vpop.permute.xlu0 %323
    %326 = vbcast.lane.b32.xlu0 %v321, 256
    %v327 = vpop.permute.xlu0 %326
    %v330 = vadd.f32 %v308, %v324
    %v331 = vadd.f32 %v311, %v327
    %334 = vset.pattern.permute.xlu0 0
    %335 = vperm.xlu0 %334, %v330
    %v336 = vpop.permute.xlu0 %335
    %337 = vset.pattern.permute.xlu0 0
    %338 = vperm.xlu0 %337, %v331
    %v339 = vpop.permute.xlu0 %338
    %v340 = vlaneseq
    %v341 = vshrl.u32 %v340, 7
    %v342 = vsub.s32 %v195, %v341
    %v343 = vrot.slane %v336, %v342
    %v344 = vlaneseq
    %v345 = vshrl.u32 %v344, 7
    %v346 = vsub.s32 %v195, %v345
    %v347 = vrot.slane %v339, %v346
    %vm348 = vcmask 1041409
    %v349 = vsel %vm348, %v347, %v343
    %vm351 = vcmask 58368
    %v352 = vsel %vm351, %v349, -inf
    %353 = vmax.xlane.f32.xlu0 %v352
    %v354 = vpop.xlane.xlu0 %353
    %v356 = vlaneseq
    %v357 = vshrl.u32 %v356, 7
    %v358 = vsub.s32 0, %v357
    %v359 = vrot.slane %v354, %v358
    %v360 = vlaneseq
    %v361 = vshrl.u32 %v360, 7
    %v362 = vsub.s32 1, %v361
    %v363 = vrot.slane %v354, %v362
    %v366 = vsub.f32 %v330, %v359
    %v367 = vsub.f32 %v331, %v363
    %v368 = vmul.f32 %v366, 1.442695
    %v369 = vpow.pop %v368
    %v370 = vmul.f32 %v367, 1.442695
    %v371 = vpow.pop %v370
    %374 = vset.pattern.permute.xlu0 0
    %375 = vperm.xlu0 %374, %v369
    %v376 = vpop.permute.xlu0 %375
    %377 = vset.pattern.permute.xlu0 0
    %378 = vperm.xlu0 %377, %v371
    %v379 = vpop.permute.xlu0 %378
    %v380 = vlaneseq
    %v381 = vshrl.u32 %v380, 7
    %v382 = vsub.s32 %v195, %v381
    %v383 = vrot.slane %v376, %v382
    %v384 = vlaneseq
    %v385 = vshrl.u32 %v384, 7
    %v386 = vsub.s32 %v195, %v385
    %v387 = vrot.slane %v379, %v386
    %v388 = vsel %vm348, %v387, %v383
    %v390 = vsel %vm351, %v388, 0.0
    %391 = vadd.xlane.f32.xlu0 %v390
    %v392 = vpop.xlane.xlu0 %391
    %v393 = vrcp.pop %v392
    %v395 = vlaneseq
    %v396 = vshrl.u32 %v395, 7
    %v397 = vsub.s32 0, %v396
    %v398 = vrot.slane %v393, %v397
    %v399 = vlaneseq
    %v400 = vshrl.u32 %v399, 7
    %v401 = vsub.s32 1, %v400
    %v402 = vrot.slane %v393, %v401
    %v405 = vmul.f32 %v369, %v398
    %v406 = vmul.f32 %v371, %v402
    %408 = vset.pattern.permute.xlu0 0
    %409 = vperm.xlu0 %408, %v405
    %v410 = vpop.permute.xlu0 %409
    %413 = vset.pattern.permute.xlu0 0
    %414 = vperm.xlu0 %413, %v406
    %v415 = vpop.permute.xlu0 %414
    %v417 = vmul.f32 %v410, %v58
    %v418 = vmul.f32 %v415, %v59
    %v419 = vsel %vm71, %v417, 0.0
    %v420 = vrot.slane %v419, 4
    %v421 = vadd.f32 %v419, %v420
    %v422 = vrot.slane %v421, 2
    %v423 = vadd.f32 %v421, %v422
    %v424 = vrot.slane %v423, 1
    %v425 = vadd.f32 %v423, %v424
    %v426 = vsel %vm71, %v418, 0.0
    %v427 = vrot.slane %v426, 4
    %v428 = vadd.f32 %v426, %v427
    %v429 = vrot.slane %v428, 2
    %v430 = vadd.f32 %v428, %v429
    %v431 = vrot.slane %v430, 1
    %v432 = vadd.f32 %v430, %v431
    %vm433 = vcmp.eq.s32.totalorder %v195, 1
    %v434 = vsel %vm433, 1, 0
    %v435 = vcvt.s32.f32 %v434
    %v438 = vsel %vm348, %v432, %v425
    %v440 = vadd.f32 %v435, %v438
    %v442 = vsel %vm71, %v440, 0
    %444 = vmatprep.subr.mxu0 0.0
    %445 = vmatpush1.msra.mxu0 %v159
    %446 = vmatprep.subr.mxu0 0.0
    %447 = vmatpush1.msra.mxu0 %v160
    %448 = vmatprep.subr.mxu0 0.0
    %449 = vmatpush1.msra.mxu0 %v161
    %450 = vmatprep.subr.mxu0 0.0
    %451 = vmatpush1.msra.mxu0 %v162
    %452 = vmatprep.subr.mxu0 0.0
    %453 = vmatpush1.msra.mxu0 0.0
    %454 = vmatprep.subr.mxu0 0.0
    %455 = vmatpush1.msra.mxu0 0.0
    %456 = vmatprep.subr.mxu0 0.0
    %457 = vmatpush1.msra.mxu0 0.0
    %458 = vmatprep.subr.mxu0 0.0
    %459 = vmatpush1.msra.mxu0 0.0
    %460 = vmatprep.subr.mxu0 0.0
    %461 = vmatpush1.msra.mxu0 0.0
    %462 = vmatprep.subr.mxu0 0.0
    %463 = vmatpush1.msra.mxu0 0.0
    %464 = vmatprep.subr.mxu0 0.0
    %465 = vmatpush1.msra.mxu0 0.0
    %466 = vmatprep.subr.mxu0 0.0
    %467 = vmatpush1.msra.mxu0 0.0
    %468 = vmatprep.subr.mxu0 0.0
    %469 = vmatpush1.msra.mxu0 0.0
    %470 = vmatprep.subr.mxu0 0.0
    %471 = vmatpush1.msra.mxu0 0.0
    %472 = vmatprep.subr.mxu0 0.0
    %473 = vmatpush1.msra.mxu0 0.0
    %474 = vmatprep.subr.mxu0 0.0
    %475 = vmatpush1.msra.mxu0 0.0
    %476 = vmatprep.subr.mxu0 0.0
    %477 = vmatpush1.msra.mxu0 0.0
    %478 = vmatprep.subr.mxu0 0.0
    %479 = vmatpush1.msra.mxu0 0.0
    %480 = vmatprep.subr.mxu0 0.0
    %481 = vmatpush1.msra.mxu0 0.0
    %482 = vmatprep.subr.mxu0 0.0
    %483 = vmatpush1.msra.mxu0 0.0
    %484 = vmatprep.subr.mxu0 0.0
    %485 = vmatpush1.msra.mxu0 0.0
    %486 = vmatprep.subr.mxu0 0.0
    %487 = vmatpush1.msra.mxu0 0.0
    %488 = vmatprep.subr.mxu0 0.0
    %489 = vmatpush1.msra.mxu0 0.0
    %490 = vmatprep.subr.mxu0 0.0
    %491 = vmatpush1.msra.mxu0 0.0
    %492 = vmatprep.subr.mxu0 0.0
    %493 = vmatpush1.msra.mxu0 0.0
    %494 = vmatprep.subr.mxu0 0.0
    %495 = vmatpush1.msra.mxu0 0.0
    %496 = vmatprep.subr.mxu0 0.0
    %497 = vmatpush1.msra.mxu0 0.0
    %498 = vmatprep.subr.mxu0 0.0
    %499 = vmatpush1.msra.mxu0 0.0
    %500 = vmatprep.subr.mxu0 0.0
    %501 = vmatpush1.msra.mxu0 0.0
    %502 = vmatprep.subr.mxu0 0.0
    %503 = vmatpush1.msra.mxu0 0.0
    %504 = vmatprep.subr.mxu0 0.0
    %505 = vmatpush1.msra.mxu0 0.0
    %506 = vmatprep.subr.mxu0 0.0
    %507 = vmatpush1.msra.mxu0 0.0
    %508 = vmatprep.mubr.f32.mxu0 0.0
    %509 = vmatmul.mubr.f32.gmra.mrb[0].mxu0 %v442
    %v510 = vpop.f32.mrb[0].mxu0
    %v511 = vadd.f32 %v266, %v510
    %v512 = vpop.f32.mrb[0].mxu0
    %513 = vdwg.mxu0
    %v514 = vxor.u32 %v511, 2147483648
    %v515 = vmul.f32 %v514, 1.442695
    %v516 = vpow.pop %v515
    %v517 = vadd.f32 %v516, 1.0
    %v518 = vrcp.pop %v517
    %v519 = vmul.f32 1.0, %v518
    %v520 = vtanh.pop %v511
    %v521 = vmul.f32 %v519, 0.0
    %523 = vrot.lane.b32.xlu0 %v520, 64
    %v524 = vpop.permute.xlu0 %523
    %v526 = vmul.f32 %v519, %v524
    %528 = vrot.lane.b32.xlu0 %v526, 32
    %v529 = vpop.permute.xlu0 %528
    %v531 = vadd.f32 %v521, %v529
    %v532 = vtanh.pop %v531
    %534 = vrot.lane.b32.xlu0 %v532, 64
    %v535 = vpop.permute.xlu0 %534
    %v537 = vmul.f32 %v519, %v535
    %539 = vrot.lane.b32.xlu0 %v537, 32
    %v540 = vpop.permute.xlu0 %539
    %v541 = vsel %vm71, %v540, 0
    %543 = vmatprep.subr.mxu0 0.0
    %544 = vmatpush1.msra.mxu0 %v171
    %545 = vmatprep.subr.mxu0 0.0
    %546 = vmatpush1.msra.mxu0 %v172
    %547 = vmatprep.subr.mxu0 0.0
    %548 = vmatpush1.msra.mxu0 %v173
    %549 = vmatprep.subr.mxu0 0.0
    %550 = vmatpush1.msra.mxu0 %v174
    %551 = vmatprep.subr.mxu0 0.0
    %552 = vmatpush1.msra.mxu0 0.0
    %553 = vmatprep.subr.mxu0 0.0
    %554 = vmatpush1.msra.mxu0 0.0
    %555 = vmatprep.subr.mxu0 0.0
    %556 = vmatpush1.msra.mxu0 0.0
    %557 = vmatprep.subr.mxu0 0.0
    %558 = vmatpush1.msra.mxu0 0.0
    %559 = vmatprep.subr.mxu0 0.0
    %560 = vmatpush1.msra.mxu0 0.0
    %561 = vmatprep.subr.mxu0 0.0
    %562 = vmatpush1.msra.mxu0 0.0
    %563 = vmatprep.subr.mxu0 0.0
    %564 = vmatpush1.msra.mxu0 0.0
    %565 = vmatprep.subr.mxu0 0.0
    %566 = vmatpush1.msra.mxu0 0.0
    %567 = vmatprep.subr.mxu0 0.0
    %568 = vmatpush1.msra.mxu0 0.0
    %569 = vmatprep.subr.mxu0 0.0
    %570 = vmatpush1.msra.mxu0 0.0
    %571 = vmatprep.subr.mxu0 0.0
    %572 = vmatpush1.msra.mxu0 0.0
    %573 = vmatprep.subr.mxu0 0.0
    %574 = vmatpush1.msra.mxu0 0.0
    %575 = vmatprep.subr.mxu0 0.0
    %576 = vmatpush1.msra.mxu0 0.0
    %577 = vmatprep.subr.mxu0 0.0
    %578 = vmatpush1.msra.mxu0 0.0
    %579 = vmatprep.subr.mxu0 0.0
    %580 = vmatpush1.msra.mxu0 0.0
    %581 = vmatprep.subr.mxu0 0.0
    %582 = vmatpush1.msra.mxu0 0.0
    %583 = vmatprep.subr.mxu0 0.0
    %584 = vmatpush1.msra.mxu0 0.0
    %585 = vmatprep.subr.mxu0 0.0
    %586 = vmatpush1.msra.mxu0 0.0
    %587 = vmatprep.subr.mxu0 0.0
    %588 = vmatpush1.msra.mxu0 0.0
    %589 = vmatprep.subr.mxu0 0.0
    %590 = vmatpush1.msra.mxu0 0.0
    %591 = vmatprep.subr.mxu0 0.0
    %592 = vmatpush1.msra.mxu0 0.0
    %593 = vmatprep.subr.mxu0 0.0
    %594 = vmatpush1.msra.mxu0 0.0
    %595 = vmatprep.subr.mxu0 0.0
    %596 = vmatpush1.msra.mxu0 0.0
    %597 = vmatprep.subr.mxu0 0.0
    %598 = vmatpush1.msra.mxu0 0.0
    %599 = vmatprep.subr.mxu0 0.0
    %600 = vmatpush1.msra.mxu0 0.0
    %601 = vmatprep.subr.mxu0 0.0
    %602 = vmatpush1.msra.mxu0 0.0
    %603 = vmatprep.subr.mxu0 0.0
    %604 = vmatpush1.msra.mxu0 0.0
    %605 = vmatprep.subr.mxu0 0.0
    %606 = vmatpush1.msra.mxu0 0.0
    %607 = vmatprep.mubr.f32.mxu0 0.0
    %608 = vmatmul.mubr.f32.gmra.mrb[0].mxu0 %v541
    %v609 = vpop.f32.mrb[0].mxu0
    %v610 = vadd.f32 %v192, %v609
    %v611 = vpop.f32.mrb[0].mxu0
    %612 = vdwg.mxu0
    %v615 = vunpack.c.l.s4 1966171168
    %v616 = vunpack.c.0.s8 %v615
    %v617 = vlaneseq
    %v618 = vshrl.u32 %v617, 7
    %v619 = vsub.s32 %v616, %v618
    %v620 = vrot.slane %v610, %v619
    %v621 = vcombine.high %v620, %v620
    %v623 = vunpack.c.l.s4 1966171168
    %v624 = vunpack.c.0.s8 %v623
    %v625 = vlaneseq
    %v626 = vshrl.u32 %v625, 7
    %v627 = vsub.s32 %v624, %v626
    %v628 = vrot.slane %v620, %v627
    %v630 = vunpack.c.l.s4 1966171168
    %v631 = vunpack.c.0.s8 %v630
    %v632 = vlaneseq
    %v633 = vshrl.u32 %v632, 7
    %v634 = vsub.s32 %v631, %v633
    %v635 = vrot.slane %v621, %v634
    %vm638 = vcmask 122880
    %639 = vst.msk [vmem:[%s9] sm:$0x1] %vm638, %v628
    %640 = vst.msk [vmem:[%s9 + $0x8] sm:$0x1] %vm638, %v635
    %vm641 = vcmask 123904
    %v642 = vsel %vm641, %v610, -inf
    %643 = vmax.xlane.f32.xlu0 %v642
    %v644 = vpop.xlane.xlu0 %643
    %vm645 = vcmp.eq.f32.partialorder %v610, %v644
    %v646 = vsel %vm645, %v195, 16
    %v647 = vsel %vm641, %v646, 2147483647
    %v648 = vand.u32 %v647, 65535
    %v649 = vshra.s32 %v647, 16
    %v650 = vcvt.s32.f32 %v648
    %v651 = vcvt.s32.f32 %v649
    %652 = vmin.xlane.f32.xlu0 %v651
    %v653 = vpop.xlane.xlu0 %652
    %vm654 = vcmp.eq.f32.partialorder %v651, %v653
    %v655 = vsel %vm654, %v650, inf
    %656 = vmin.xlane.f32.xlu0 %v655
    %v657 = vpop.xlane.xlu0 %656
    %v658 = vcvt.f32.s32 %v657
    %v659 = vcvt.f32.s32 %v653
    %v660 = vshll.u32 %v659, 16
    %v661 = vadd.s32 %v660, %v658
    %662 = vmatprep.subr.mxu0 %v164
    %663 = vmatpush1.msra.mxu0 %v163
    %664 = vmatprep.subr.mxu0 %v166
    %665 = vmatpush1.msra.mxu0 %v165
    %666 = vmatprep.subr.mxu0 %v168
    %667 = vmatpush1.msra.mxu0 %v167
    %668 = vmatprep.subr.mxu0 %v170
    %669 = vmatpush1.msra.mxu0 %v169
    %670 = vmatprep.subr.mxu0 0.0
    %671 = vmatpush1.msra.mxu0 0.0
    %672 = vmatprep.subr.mxu0 0.0
    %673 = vmatpush1.msra.mxu0 0.0
    %674 = vmatprep.subr.mxu0 0.0
    %675 = vmatpush1.msra.mxu0 0.0
    %676 = vmatprep.subr.mxu0 0.0
    %677 = vmatpush1.msra.mxu0 0.0
    %678 = vmatprep.subr.mxu0 0.0
    %679 = vmatpush1.msra.mxu0 0.0
    %680 = vmatprep.subr.mxu0 0.0
    %681 = vmatpush1.msra.mxu0 0.0
    %682 = vmatprep.subr.mxu0 0.0
    %683 = vmatpush1.msra.mxu0 0.0
    %684 = vmatprep.subr.mxu0 0.0
    %685 = vmatpush1.msra.mxu0 0.0
    %686 = vmatprep.subr.mxu0 0.0
    %687 = vmatpush1.msra.mxu0 0.0
    %688 = vmatprep.subr.mxu0 0.0
    %689 = vmatpush1.msra.mxu0 0.0
    %690 = vmatprep.subr.mxu0 0.0
    %691 = vmatpush1.msra.mxu0 0.0
    %692 = vmatprep.subr.mxu0 0.0
    %693 = vmatpush1.msra.mxu0 0.0
    %694 = vmatprep.subr.mxu0 0.0
    %695 = vmatpush1.msra.mxu0 0.0
    %696 = vmatprep.subr.mxu0 0.0
    %697 = vmatpush1.msra.mxu0 0.0
    %698 = vmatprep.subr.mxu0 0.0
    %699 = vmatpush1.msra.mxu0 0.0
    %700 = vmatprep.subr.mxu0 0.0
    %701 = vmatpush1.msra.mxu0 0.0
    %702 = vmatprep.subr.mxu0 0.0
    %703 = vmatpush1.msra.mxu0 0.0
    %704 = vmatprep.subr.mxu0 0.0
    %705 = vmatpush1.msra.mxu0 0.0
    %706 = vmatprep.subr.mxu0 0.0
    %707 = vmatpush1.msra.mxu0 0.0
    %708 = vmatprep.subr.mxu0 0.0
    %709 = vmatpush1.msra.mxu0 0.0
    %710 = vmatprep.subr.mxu0 0.0
    %711 = vmatpush1.msra.mxu0 0.0
    %712 = vmatprep.subr.mxu0 0.0
    %713 = vmatpush1.msra.mxu0 0.0
    %714 = vmatprep.subr.mxu0 0.0
    %715 = vmatpush1.msra.mxu0 0.0
    %716 = vmatprep.subr.mxu0 0.0
    %717 = vmatpush1.msra.mxu0 0.0
    %718 = vmatprep.subr.mxu0 0.0
    %719 = vmatpush1.msra.mxu0 0.0
    %720 = vmatprep.subr.mxu0 0.0
    %721 = vmatpush1.msra.mxu0 0.0
    %722 = vmatprep.subr.mxu0 0.0
    %723 = vmatpush1.msra.mxu0 0.0
    %724 = vmatprep.subr.mxu0 0.0
    %725 = vmatpush1.msra.mxu0 0.0
    %726 = vmatprep.mubr.f32.mxu0 0.0
    %727 = vmatmul.mubr.f32.gmra.mrb[0].mxu0 %v541
    %v728 = vpop.f32.mrb[0].mxu0
    %v729 = vadd.f32 %v180, %v728
    %v730 = vpop.f32.mrb[0].mxu0
    %v731 = vadd.f32 %v184, %v730
    %732 = vdwg.mxu0
    %v735 = vunpack.c.l.s4 1966171168
    %v736 = vunpack.c.0.s8 %v735
    %v737 = vlaneseq
    %v738 = vshrl.u32 %v737, 7
    %v739 = vsub.s32 %v736, %v738
    %v740 = vrot.slane %v731, %v739
    %v741 = vcombine.high %v740, %v740
    %v743 = vunpack.c.l.s4 1966171168
    %v744 = vunpack.c.0.s8 %v743
    %v745 = vlaneseq
    %v746 = vshrl.u32 %v745, 7
    %v747 = vsub.s32 %v744, %v746
    %v748 = vrot.slane %v740, %v747
    %v750 = vunpack.c.l.s4 1966171168
    %v751 = vunpack.c.0.s8 %v750
    %v752 = vlaneseq
    %v753 = vshrl.u32 %v752, 7
    %v754 = vsub.s32 %v751, %v753
    %v755 = vrot.slane %v741, %v754
    %v756 = vlaneseq
    %v757 = vshrl.u32 %v756, 7
    %v758 = vsub.s32 0, %v757
    %v759 = vrot.slane %v748, %v758
    %v760 = vlaneseq
    %v761 = vshrl.u32 %v760, 7
    %v762 = vsub.s32 0, %v761
    %v763 = vrot.slane %v755, %v762
    %v766 = vmul.f32 %v759, %v145
    %v767 = vmul.f32 %v763, %v150
    %v768 = vsel %vm305, %v766, 0.0
    %769 = vadd.xlane.f32.xlu0 %v768
    %v770 = vpop.xlane.xlu0 %769
    %v771 = vsel %vm305, %v767, 0.0
    %772 = vadd.xlane.f32.xlu0 %v771
    %v773 = vpop.xlane.xlu0 %772
    %v774 = vadd.f32 %v770, %v324
    %v775 = vadd.f32 %v773, %v327
    %778 = vset.pattern.permute.xlu0 0
    %779 = vperm.xlu0 %778, %v774
    %v780 = vpop.permute.xlu0 %779
    %781 = vset.pattern.permute.xlu0 0
    %782 = vperm.xlu0 %781, %v775
    %v783 = vpop.permute.xlu0 %782
    %v784 = vlaneseq
    %v785 = vshrl.u32 %v784, 7
    %v786 = vsub.s32 %v195, %v785
    %v787 = vrot.slane %v780, %v786
    %v788 = vlaneseq
    %v789 = vshrl.u32 %v788, 7
    %v790 = vsub.s32 %v195, %v789
    %v791 = vrot.slane %v783, %v790
    %v792 = vsel %vm348, %v791, %v787
    %v794 = vsel %vm351, %v792, -inf
    %795 = vmax.xlane.f32.xlu0 %v794
    %v796 = vpop.xlane.xlu0 %795
    %v798 = vlaneseq
    %v799 = vshrl.u32 %v798, 7
    %v800 = vsub.s32 0, %v799
    %v801 = vrot.slane %v796, %v800
    %v802 = vlaneseq
    %v803 = vshrl.u32 %v802, 7
    %v804 = vsub.s32 1, %v803
    %v805 = vrot.slane %v796, %v804
    %v808 = vsub.f32 %v774, %v801
    %v809 = vsub.f32 %v775, %v805
    %v810 = vmul.f32 %v808, 1.442695
    %v811 = vpow.pop %v810
    %v812 = vmul.f32 %v809, 1.442695
    %v813 = vpow.pop %v812
    %816 = vset.pattern.permute.xlu0 0
    %817 = vperm.xlu0 %816, %v811
    %v818 = vpop.permute.xlu0 %817
    %819 = vset.pattern.permute.xlu0 0
    %820 = vperm.xlu0 %819, %v813
    %v821 = vpop.permute.xlu0 %820
    %v822 = vlaneseq
    %v823 = vshrl.u32 %v822, 7
    %v824 = vsub.s32 %v195, %v823
    %v825 = vrot.slane %v818, %v824
    %v826 = vlaneseq
    %v827 = vshrl.u32 %v826, 7
    %v828 = vsub.s32 %v195, %v827
    %v829 = vrot.slane %v821, %v828
    %v830 = vsel %vm348, %v829, %v825
    %v832 = vsel %vm351, %v830, 0.0
    %833 = vadd.xlane.f32.xlu0 %v832
    %v834 = vpop.xlane.xlu0 %833
    %v835 = vrcp.pop %v834
    %v837 = vlaneseq
    %v838 = vshrl.u32 %v837, 7
    %v839 = vsub.s32 0, %v838
    %v840 = vrot.slane %v835, %v839
    %v841 = vlaneseq
    %v842 = vshrl.u32 %v841, 7
    %v843 = vsub.s32 1, %v842
    %v844 = vrot.slane %v835, %v843
    %v847 = vmul.f32 %v811, %v840
    %v848 = vmul.f32 %v813, %v844
    %850 = vset.pattern.permute.xlu0 0
    %851 = vperm.xlu0 %850, %v847
    %v852 = vpop.permute.xlu0 %851
    %855 = vset.pattern.permute.xlu0 0
    %856 = vperm.xlu0 %855, %v848
    %v857 = vpop.permute.xlu0 %856
    %v859 = vmul.f32 %v852, %v58
    %v860 = vmul.f32 %v857, %v59
    %v861 = vsel %vm71, %v859, 0.0
    %v862 = vrot.slane %v861, 4
    %v863 = vadd.f32 %v861, %v862
    %v864 = vrot.slane %v863, 2
    %v865 = vadd.f32 %v863, %v864
    %v866 = vrot.slane %v865, 1
    %v867 = vadd.f32 %v865, %v866
    %v868 = vsel %vm71, %v860, 0.0
    %v869 = vrot.slane %v868, 4
    %v870 = vadd.f32 %v868, %v869
    %v871 = vrot.slane %v870, 2
    %v872 = vadd.f32 %v870, %v871
    %v873 = vrot.slane %v872, 1
    %v874 = vadd.f32 %v872, %v873
    %vm875 = vcmp.eq.s32.totalorder %v195, %v661
    %v876 = vsel %vm875, 1, 0
    %v877 = vcvt.s32.f32 %v876
    %v880 = vsel %vm348, %v874, %v867
    %v882 = vadd.f32 %v877, %v880
    %v884 = vsel %vm71, %v882, 0
    %886 = vmatprep.subr.mxu0 0.0
    %887 = vmatpush1.msra.mxu0 %v159
    %888 = vmatprep.subr.mxu0 0.0
    %889 = vmatpush1.msra.mxu0 %v160
    %890 = vmatprep.subr.mxu0 0.0
    %891 = vmatpush1.msra.mxu0 %v161
    %892 = vmatprep.subr.mxu0 0.0
    %893 = vmatpush1.msra.mxu0 %v162
    %894 = vmatprep.subr.mxu0 0.0
    %895 = vmatpush1.msra.mxu0 0.0
    %896 = vmatprep.subr.mxu0 0.0
    %897 = vmatpush1.msra.mxu0 0.0
    %898 = vmatprep.subr.mxu0 0.0
    %899 = vmatpush1.msra.mxu0 0.0
    %900 = vmatprep.subr.mxu0 0.0
    %901 = vmatpush1.msra.mxu0 0.0
    %902 = vmatprep.subr.mxu0 0.0
    %903 = vmatpush1.msra.mxu0 0.0
    %904 = vmatprep.subr.mxu0 0.0
    %905 = vmatpush1.msra.mxu0 0.0
    %906 = vmatprep.subr.mxu0 0.0
    %907 = vmatpush1.msra.mxu0 0.0
    %908 = vmatprep.subr.mxu0 0.0
    %909 = vmatpush1.msra.mxu0 0.0
    %910 = vmatprep.subr.mxu0 0.0
    %911 = vmatpush1.msra.mxu0 0.0
    %912 = vmatprep.subr.mxu0 0.0
    %913 = vmatpush1.msra.mxu0 0.0
    %914 = vmatprep.subr.mxu0 0.0
    %915 = vmatpush1.msra.mxu0 0.0
    %916 = vmatprep.subr.mxu0 0.0
    %917 = vmatpush1.msra.mxu0 0.0
    %918 = vmatprep.subr.mxu0 0.0
    %919 = vmatpush1.msra.mxu0 0.0
    %920 = vmatprep.subr.mxu0 0.0
    %921 = vmatpush1.msra.mxu0 0.0
    %922 = vmatprep.subr.mxu0 0.0
    %923 = vmatpush1.msra.mxu0 0.0
    %924 = vmatprep.subr.mxu0 0.0
    %925 = vmatpush1.msra.mxu0 0.0
    %926 = vmatprep.subr.mxu0 0.0
    %927 = vmatpush1.msra.mxu0 0.0
    %928 = vmatprep.subr.mxu0 0.0
    %929 = vmatpush1.msra.mxu0 0.0
    %930 = vmatprep.subr.mxu0 0.0
    %931 = vmatpush1.msra.mxu0 0.0
    %932 = vmatprep.subr.mxu0 0.0
    %933 = vmatpush1.msra.mxu0 0.0
    %934 = vmatprep.subr.mxu0 0.0
    %935 = vmatpush1.msra.mxu0 0.0
    %936 = vmatprep.subr.mxu0 0.0
    %937 = vmatpush1.msra.mxu0 0.0
    %938 = vmatprep.subr.mxu0 0.0
    %939 = vmatpush1.msra.mxu0 0.0
    %940 = vmatprep.subr.mxu0 0.0
    %941 = vmatpush1.msra.mxu0 0.0
    %942 = vmatprep.subr.mxu0 0.0
    %943 = vmatpush1.msra.mxu0 0.0
    %944 = vmatprep.subr.mxu0 0.0
    %945 = vmatpush1.msra.mxu0 0.0
    %946 = vmatprep.subr.mxu0 0.0
    %947 = vmatpush1.msra.mxu0 0.0
    %948 = vmatprep.subr.mxu0 0.0
    %949 = vmatpush1.msra.mxu0 0.0
    %950 = vmatprep.mubr.f32.mxu0 0.0
    %951 = vmatmul.mubr.f32.gmra.mrb[0].mxu0 %v884
    %v952 = vpop.f32.mrb[0].mxu0
    %v953 = vadd.f32 %v729, %v952
    %v954 = vpop.f32.mrb[0].mxu0
    %955 = vdwg.mxu0
    %v956 = vxor.u32 %v953, 2147483648
    %v957 = vmul.f32 %v956, 1.442695
    %v958 = vpow.pop %v957
    %v959 = vadd.f32 %v958, 1.0
    %v960 = vrcp.pop %v959
    %v961 = vmul.f32 1.0, %v960
    %v962 = vtanh.pop %v953
    %v963 = vmul.f32 %v961, %v531
    %965 = vrot.lane.b32.xlu0 %v962, 64
    %v966 = vpop.permute.xlu0 %965
    %v968 = vmul.f32 %v961, %v966
    %970 = vrot.lane.b32.xlu0 %v968, 32
    %v971 = vpop.permute.xlu0 %970
    %v973 = vadd.f32 %v963, %v971
    %v974 = vtanh.pop %v973
    %976 = vrot.lane.b32.xlu0 %v974, 64
    %v977 = vpop.permute.xlu0 %976
    %v979 = vmul.f32 %v961, %v977
    %981 = vrot.lane.b32.xlu0 %v979, 32
    %v982 = vpop.permute.xlu0 %981
    %v983 = vsel %vm71, %v982, 0
    %985 = vmatprep.subr.mxu0 0.0
    %986 = vmatpush1.msra.mxu0 %v171
    %987 = vmatprep.subr.mxu0 0.0
    %988 = vmatpush1.msra.mxu0 %v172
    %989 = vmatprep.subr.mxu0 0.0
    %990 = vmatpush1.msra.mxu0 %v173
    %991 = vmatprep.subr.mxu0 0.0
    %992 = vmatpush1.msra.mxu0 %v174
    %993 = vmatprep.subr.mxu0 0.0
    %994 = vmatpush1.msra.mxu0 0.0
    %995 = vmatprep.subr.mxu0 0.0
    %996 = vmatpush1.msra.mxu0 0.0
    %997 = vmatprep.subr.mxu0 0.0
    %998 = vmatpush1.msra.mxu0 0.0
    %999 = vmatprep.subr.mxu0 0.0
    %1000 = vmatpush1.msra.mxu0 0.0
    %1001 = vmatprep.subr.mxu0 0.0
    %1002 = vmatpush1.msra.mxu0 0.0
    %1003 = vmatprep.subr.mxu0 0.0
    %1004 = vmatpush1.msra.mxu0 0.0
    %1005 = vmatprep.subr.mxu0 0.0
    %1006 = vmatpush1.msra.mxu0 0.0
    %1007 = vmatprep.subr.mxu0 0.0
    %1008 = vmatpush1.msra.mxu0 0.0
    %1009 = vmatprep.subr.mxu0 0.0
    %1010 = vmatpush1.msra.mxu0 0.0
    %1011 = vmatprep.subr.mxu0 0.0
    %1012 = vmatpush1.msra.mxu0 0.0
    %1013 = vmatprep.subr.mxu0 0.0
    %1014 = vmatpush1.msra.mxu0 0.0
    %1015 = vmatprep.subr.mxu0 0.0
    %1016 = vmatpush1.msra.mxu0 0.0
    %1017 = vmatprep.subr.mxu0 0.0
    %1018 = vmatpush1.msra.mxu0 0.0
    %1019 = vmatprep.subr.mxu0 0.0
    %1020 = vmatpush1.msra.mxu0 0.0
    %1021 = vmatprep.subr.mxu0 0.0
    %1022 = vmatpush1.msra.mxu0 0.0
    %1023 = vmatprep.subr.mxu0 0.0
    %1024 = vmatpush1.msra.mxu0 0.0
    %1025 = vmatprep.subr.mxu0 0.0
    %1026 = vmatpush1.msra.mxu0 0.0
    %1027 = vmatprep.subr.mxu0 0.0
    %1028 = vmatpush1.msra.mxu0 0.0
    %1029 = vmatprep.subr.mxu0 0.0
    %1030 = vmatpush1.msra.mxu0 0.0
    %1031 = vmatprep.subr.mxu0 0.0
    %1032 = vmatpush1.msra.mxu0 0.0
    %1033 = vmatprep.subr.mxu0 0.0
    %1034 = vmatpush1.msra.mxu0 0.0
    %1035 = vmatprep.subr.mxu0 0.0
    %1036 = vmatpush1.msra.mxu0 0.0
    %1037 = vmatprep.subr.mxu0 0.0
    %1038 = vmatpush1.msra.mxu0 0.0
    %1039 = vmatprep.subr.mxu0 0.0
    %1040 = vmatpush1.msra.mxu0 0.0
    %1041 = vmatprep.subr.mxu0 0.0
    %1042 = vmatpush1.msra.mxu0 0.0
    %1043 = vmatprep.subr.mxu0 0.0
    %1044 = vmatpush1.msra.mxu0 0.0
    %1045 = vmatprep.subr.mxu0 0.0
    %1046 = vmatpush1.msra.mxu0 0.0
    %1047 = vmatprep.subr.mxu0 0.0
    %1048 = vmatpush1.msra.mxu0 0.0
    %1049 = vmatprep.mubr.f32.mxu0 0.0
    %1050 = vmatmul.mubr.f32.gmra.mrb[0].mxu0 %v983
    %v1051 = vpop.f32.mrb[0].mxu0
    %v1052 = vadd.f32 %v192, %v1051
    %v1053 = vpop.f32.mrb[0].mxu0
    %1054 = vdwg.mxu0
    %v1057 = vunpack.c.l.s4 1966171168
    %v1058 = vunpack.c.0.s8 %v1057
    %v1059 = vlaneseq
    %v1060 = vshrl.u32 %v1059, 7
    %v1061 = vsub.s32 %v1058, %v1060
    %v1062 = vrot.slane %v1052, %v1061
    %v1063 = vcombine.high %v1062, %v1062
    %v1065 = vunpack.c.l.s4 1966171168
    %v1066 = vunpack.c.0.s8 %v1065
    %v1067 = vlaneseq
    %v1068 = vshrl.u32 %v1067, 7
    %v1069 = vsub.s32 %v1066, %v1068
    %v1070 = vrot.slane %v1062, %v1069
    %v1072 = vunpack.c.l.s4 1966171168
    %v1073 = vunpack.c.0.s8 %v1072
    %v1074 = vlaneseq
    %v1075 = vshrl.u32 %v1074, 7
    %v1076 = vsub.s32 %v1073, %v1075
    %v1077 = vrot.slane %v1063, %v1076
    %1080 = vst.msk [vmem:[%s9 + $0x1] sm:$0x1] %vm638, %v1070
    %1081 = vst.msk [vmem:[%s9 + $0x9] sm:$0x1] %vm638, %v1077
    %v1082 = vsel %vm641, %v1052, -inf
    %1083 = vmax.xlane.f32.xlu0 %v1082
    %v1084 = vpop.xlane.xlu0 %1083
    %vm1085 = vcmp.eq.f32.partialorder %v1052, %v1084
    %v1086 = vsel %vm1085, %v195, 16
    %v1087 = vsel %vm641, %v1086, 2147483647
    %v1088 = vand.u32 %v1087, 65535
    %v1089 = vshra.s32 %v1087, 16
    %v1090 = vcvt.s32.f32 %v1088
    %v1091 = vcvt.s32.f32 %v1089
    %1092 = vmin.xlane.f32.xlu0 %v1091
    %v1093 = vpop.xlane.xlu0 %1092
    %vm1094 = vcmp.eq.f32.partialorder %v1091, %v1093
    %v1095 = vsel %vm1094, %v1090, inf
    %1096 = vmin.xlane.f32.xlu0 %v1095
    %v1097 = vpop.xlane.xlu0 %1096
    %v1098 = vcvt.f32.s32 %v1097
    %v1099 = vcvt.f32.s32 %v1093
    %v1100 = vshll.u32 %v1099, 16
    %v1101 = vadd.s32 %v1100, %v1098
    %1102 = vmatprep.subr.mxu0 %v164
    %1103 = vmatpush1.msra.mxu0 %v163
    %1104 = vmatprep.subr.mxu0 %v166
    %1105 = vmatpush1.msra.mxu0 %v165
    %1106 = vmatprep.subr.mxu0 %v168
    %1107 = vmatpush1.msra.mxu0 %v167
    %1108 = vmatprep.subr.mxu0 %v170
    %1109 = vmatpush1.msra.mxu0 %v169
    %1110 = vmatprep.subr.mxu0 0.0
    %1111 = vmatpush1.msra.mxu0 0.0
    %1112 = vmatprep.subr.mxu0 0.0
    %1113 = vmatpush1.msra.mxu0 0.0
    %1114 = vmatprep.subr.mxu0 0.0
    %1115 = vmatpush1.msra.mxu0 0.0
    %1116 = vmatprep.subr.mxu0 0.0
    %1117 = vmatpush1.msra.mxu0 0.0
    %1118 = vmatprep.subr.mxu0 0.0
    %1119 = vmatpush1.msra.mxu0 0.0
    %1120 = vmatprep.subr.mxu0 0.0
    %1121 = vmatpush1.msra.mxu0 0.0
    %1122 = vmatprep.subr.mxu0 0.0
    %1123 = vmatpush1.msra.mxu0 0.0
    %1124 = vmatprep.subr.mxu0 0.0
    %1125 = vmatpush1.msra.mxu0 0.0
    %1126 = vmatprep.subr.mxu0 0.0
    %1127 = vmatpush1.msra.mxu0 0.0
    %1128 = vmatprep.subr.mxu0 0.0
    %1129 = vmatpush1.msra.mxu0 0.0
    %1130 = vmatprep.subr.mxu0 0.0
    %1131 = vmatpush1.msra.mxu0 0.0
    %1132 = vmatprep.subr.mxu0 0.0
    %1133 = vmatpush1.msra.mxu0 0.0
    %1134 = vmatprep.subr.mxu0 0.0
    %1135 = vmatpush1.msra.mxu0 0.0
    %1136 = vmatprep.subr.mxu0 0.0
    %1137 = vmatpush1.msra.mxu0 0.0
    %1138 = vmatprep.subr.mxu0 0.0
    %1139 = vmatpush1.msra.mxu0 0.0
    %1140 = vmatprep.subr.mxu0 0.0
    %1141 = vmatpush1.msra.mxu0 0.0
    %1142 = vmatprep.subr.mxu0 0.0
    %1143 = vmatpush1.msra.mxu0 0.0
    %1144 = vmatprep.subr.mxu0 0.0
    %1145 = vmatpush1.msra.mxu0 0.0
    %1146 = vmatprep.subr.mxu0 0.0
    %1147 = vmatpush1.msra.mxu0 0.0
    %1148 = vmatprep.subr.mxu0 0.0
    %1149 = vmatpush1.msra.mxu0 0.0
    %1150 = vmatprep.subr.mxu0 0.0
    %1151 = vmatpush1.msra.mxu0 0.0
    %1152 = vmatprep.subr.mxu0 0.0
    %1153 = vmatpush1.msra.mxu0 0.0
    %1154 = vmatprep.subr.mxu0 0.0
    %1155 = vmatpush1.msra.mxu0 0.0
    %1156 = vmatprep.subr.mxu0 0.0
    %1157 = vmatpush1.msra.mxu0 0.0
    %1158 = vmatprep.subr.mxu0 0.0
    %1159 = vmatpush1.msra.mxu0 0.0
    %1160 = vmatprep.subr.mxu0 0.0
    %1161 = vmatpush1.msra.mxu0 0.0
    %1162 = vmatprep.subr.mxu0 0.0
    %1163 = vmatpush1.msra.mxu0 0.0
    %1164 = vmatprep.subr.mxu0 0.0
    %1165 = vmatpush1.msra.mxu0 0.0
    %1166 = vmatprep.mubr.f32.mxu0 0.0
    %1167 = vmatmul.mubr.f32.gmra.mrb[0].mxu0 %v983
    %v1168 = vpop.f32.mrb[0].mxu0
    %v1169 = vadd.f32 %v180, %v1168
    %v1170 = vpop.f32.mrb[0].mxu0
    %v1171 = vadd.f32 %v184, %v1170
    %1172 = vdwg.mxu0
    %v1175 = vunpack.c.l.s4 1966171168
    %v1176 = vunpack.c.0.s8 %v1175
    %v1177 = vlaneseq
    %v1178 = vshrl.u32 %v1177, 7
    %v1179 = vsub.s32 %v1176, %v1178
    %v1180 = vrot.slane %v1171, %v1179
    %v1181 = vcombine.high %v1180, %v1180
    %v1183 = vunpack.c.l.s4 1966171168
    %v1184 = vunpack.c.0.s8 %v1183
    %v1185 = vlaneseq
    %v1186 = vshrl.u32 %v1185, 7
    %v1187 = vsub.s32 %v1184, %v1186
    %v1188 = vrot.slane %v1180, %v1187
    %v1190 = vunpack.c.l.s4 1966171168
    %v1191 = vunpack.c.0.s8 %v1190
    %v1192 = vlaneseq
    %v1193 = vshrl.u32 %v1192, 7
    %v1194 = vsub.s32 %v1191, %v1193
    %v1195 = vrot.slane %v1181, %v1194
    %v1196 = vlaneseq
    %v1197 = vshrl.u32 %v1196, 7
    %v1198 = vsub.s32 0, %v1197
    %v1199 = vrot.slane %v1188, %v1198
    %v1200 = vlaneseq
    %v1201 = vshrl.u32 %v1200, 7
    %v1202 = vsub.s32 0, %v1201
    %v1203 = vrot.slane %v1195, %v1202
    %v1206 = vmul.f32 %v1199, %v145
    %v1207 = vmul.f32 %v1203, %v150
    %v1208 = vsel %vm305, %v1206, 0.0
    %1209 = vadd.xlane.f32.xlu0 %v1208
    %v1210 = vpop.xlane.xlu0 %1209
    %v1211 = vsel %vm305, %v1207, 0.0
    %1212 = vadd.xlane.f32.xlu0 %v1211
    %v1213 = vpop.xlane.xlu0 %1212
    %v1214 = vadd.f32 %v1210, %v324
    %v1215 = vadd.f32 %v1213, %v327
    %1218 = vset.pattern.permute.xlu0 0
    %1219 = vperm.xlu0 %1218, %v1214
    %v1220 = vpop.permute.xlu0 %1219
    %1221 = vset.pattern.permute.xlu0 0
    %1222 = vperm.xlu0 %1221, %v1215
    %v1223 = vpop.permute.xlu0 %1222
    %v1224 = vlaneseq
    %v1225 = vshrl.u32 %v1224, 7
    %v1226 = vsub.s32 %v195, %v1225
    %v1227 = vrot.slane %v1220, %v1226
    %v1228 = vlaneseq
    %v1229 = vshrl.u32 %v1228, 7
    %v1230 = vsub.s32 %v195, %v1229
    %v1231 = vrot.slane %v1223, %v1230
    %v1232 = vsel %vm348, %v1231, %v1227
    %v1234 = vsel %vm351, %v1232, -inf
    %1235 = vmax.xlane.f32.xlu0 %v1234
    %v1236 = vpop.xlane.xlu0 %1235
    %v1238 = vlaneseq
    %v1239 = vshrl.u32 %v1238, 7
    %v1240 = vsub.s32 0, %v1239
    %v1241 = vrot.slane %v1236, %v1240
    %v1242 = vlaneseq
    %v1243 = vshrl.u32 %v1242, 7
    %v1244 = vsub.s32 1, %v1243
    %v1245 = vrot.slane %v1236, %v1244
    %v1248 = vsub.f32 %v1214, %v1241
    %v1249 = vsub.f32 %v1215, %v1245
    %v1250 = vmul.f32 %v1248, 1.442695
    %v1251 = vpow.pop %v1250
    %v1252 = vmul.f32 %v1249, 1.442695
    %v1253 = vpow.pop %v1252
    %1256 = vset.pattern.permute.xlu0 0
    %1257 = vperm.xlu0 %1256, %v1251
    %v1258 = vpop.permute.xlu0 %1257
    %1259 = vset.pattern.permute.xlu0 0
    %1260 = vperm.xlu0 %1259, %v1253
    %v1261 = vpop.permute.xlu0 %1260
    %v1262 = vlaneseq
    %v1263 = vshrl.u32 %v1262, 7
    %v1264 = vsub.s32 %v195, %v1263
    %v1265 = vrot.slane %v1258, %v1264
    %v1266 = vlaneseq
    %v1267 = vshrl.u32 %v1266, 7
    %v1268 = vsub.s32 %v195, %v1267
    %v1269 = vrot.slane %v1261, %v1268
    %v1270 = vsel %vm348, %v1269, %v1265
    %v1272 = vsel %vm351, %v1270, 0.0
    %1273 = vadd.xlane.f32.xlu0 %v1272
    %v1274 = vpop.xlane.xlu0 %1273
    %v1275 = vrcp.pop %v1274
    %v1277 = vlaneseq
    %v1278 = vshrl.u32 %v1277, 7
    %v1279 = vsub.s32 0, %v1278
    %v1280 = vrot.slane %v1275, %v1279
    %v1281 = vlaneseq
    %v1282 = vshrl.u32 %v1281, 7
    %v1283 = vsub.s32 1, %v1282
    %v1284 = vrot.slane %v1275, %v1283
    %v1287 = vmul.f32 %v1251, %v1280
    %v1288 = vmul.f32 %v1253, %v1284
    %1290 = vset.pattern.permute.xlu0 0
    %1291 = vperm.xlu0 %1290, %v1287
    %v1292 = vpop.permute.xlu0 %1291
    %1295 = vset.pattern.permute.xlu0 0
    %1296 = vperm.xlu0 %1295, %v1288
    %v1297 = vpop.permute.xlu0 %1296
    %v1299 = vmul.f32 %v1292, %v58
    %v1300 = vmul.f32 %v1297, %v59
    %v1301 = vsel %vm71, %v1299, 0.0
    %v1302 = vrot.slane %v1301, 4
    %v1303 = vadd.f32 %v1301, %v1302
    %v1304 = vrot.slane %v1303, 2
    %v1305 = vadd.f32 %v1303, %v1304
    %v1306 = vrot.slane %v1305, 1
    %v1307 = vadd.f32 %v1305, %v1306
    %v1308 = vsel %vm71, %v1300, 0.0
    %v1309 = vrot.slane %v1308, 4
    %v1310 = vadd.f32 %v1308, %v1309
    %v1311 = vrot.slane %v1310, 2
    %v1312 = vadd.f32 %v1310, %v1311
    %v1313 = vrot.slane %v1312, 1
    %v1314 = vadd.f32 %v1312, %v1313
    %vm1315 = vcmp.eq.s32.totalorder %v195, %v1101
    %v1316 = vsel %vm1315, 1, 0
    %v1317 = vcvt.s32.f32 %v1316
    %v1320 = vsel %vm348, %v1314, %v1307
    %v1322 = vadd.f32 %v1317, %v1320
    %v1324 = vsel %vm71, %v1322, 0
    %1326 = vmatprep.subr.mxu0 0.0
    %1327 = vmatpush1.msra.mxu0 %v159
    %1328 = vmatprep.subr.mxu0 0.0
    %1329 = vmatpush1.msra.mxu0 %v160
    %1330 = vmatprep.subr.mxu0 0.0
    %1331 = vmatpush1.msra.mxu0 %v161
    %1332 = vmatprep.subr.mxu0 0.0
    %1333 = vmatpush1.msra.mxu0 %v162
    %1334 = vmatprep.subr.mxu0 0.0
    %1335 = vmatpush1.msra.mxu0 0.0
    %1336 = vmatprep.subr.mxu0 0.0
    %1337 = vmatpush1.msra.mxu0 0.0
    %1338 = vmatprep.subr.mxu0 0.0
    %1339 = vmatpush1.msra.mxu0 0.0
    %1340 = vmatprep.subr.mxu0 0.0
    %1341 = vmatpush1.msra.mxu0 0.0
    %1342 = vmatprep.subr.mxu0 0.0
    %1343 = vmatpush1.msra.mxu0 0.0
    %1344 = vmatprep.subr.mxu0 0.0
    %1345 = vmatpush1.msra.mxu0 0.0
    %1346 = vmatprep.subr.mxu0 0.0
    %1347 = vmatpush1.msra.mxu0 0.0
    %1348 = vmatprep.subr.mxu0 0.0
    %1349 = vmatpush1.msra.mxu0 0.0
    %1350 = vmatprep.subr.mxu0 0.0
    %1351 = vmatpush1.msra.mxu0 0.0
    %1352 = vmatprep.subr.mxu0 0.0
    %1353 = vmatpush1.msra.mxu0 0.0
    %1354 = vmatprep.subr.mxu0 0.0
    %1355 = vmatpush1.msra.mxu0 0.0
    %1356 = vmatprep.subr.mxu0 0.0
    %1357 = vmatpush1.msra.mxu0 0.0
    %1358 = vmatprep.subr.mxu0 0.0
    %1359 = vmatpush1.msra.mxu0 0.0
    %1360 = vmatprep.subr.mxu0 0.0
    %1361 = vmatpush1.msra.mxu0 0.0
    %1362 = vmatprep.subr.mxu0 0.0
    %1363 = vmatpush1.msra.mxu0 0.0
    %1364 = vmatprep.subr.mxu0 0.0
    %1365 = vmatpush1.msra.mxu0 0.0
    %1366 = vmatprep.subr.mxu0 0.0
    %1367 = vmatpush1.msra.mxu0 0.0
    %1368 = vmatprep.subr.mxu0 0.0
    %1369 = vmatpush1.msra.mxu0 0.0
    %1370 = vmatprep.subr.mxu0 0.0
    %1371 = vmatpush1.msra.mxu0 0.0
    %1372 = vmatprep.subr.mxu0 0.0
    %1373 = vmatpush1.msra.mxu0 0.0
    %1374 = vmatprep.subr.mxu0 0.0
    %1375 = vmatpush1.msra.mxu0 0.0
    %1376 = vmatprep.subr.mxu0 0.0
    %1377 = vmatpush1.msra.mxu0 0.0
    %1378 = vmatprep.subr.mxu0 0.0
    %1379 = vmatpush1.msra.mxu0 0.0
    %1380 = vmatprep.subr.mxu0 0.0
    %1381 = vmatpush1.msra.mxu0 0.0
    %1382 = vmatprep.subr.mxu0 0.0
    %1383 = vmatpush1.msra.mxu0 0.0
    %1384 = vmatprep.subr.mxu0 0.0
    %1385 = vmatpush1.msra.mxu0 0.0
    %1386 = vmatprep.subr.mxu0 0.0
    %1387 = vmatpush1.msra.mxu0 0.0
    %1388 = vmatprep.subr.mxu0 0.0
    %1389 = vmatpush1.msra.mxu0 0.0
    %1390 = vmatprep.mubr.f32.mxu0 0.0
    %1391 = vmatmul.mubr.f32.gmra.mrb[0].mxu0 %v1324
    %v1392 = vpop.f32.mrb[0].mxu0
    %v1393 = vadd.f32 %v1169, %v1392
    %v1394 = vpop.f32.mrb[0].mxu0
    %1395 = vdwg.mxu0
    %v1396 = vxor.u32 %v1393, 2147483648
    %v1397 = vmul.f32 %v1396, 1.442695
    %v1398 = vpow.pop %v1397
    %v1399 = vadd.f32 %v1398, 1.0
    %v1400 = vrcp.pop %v1399
    %v1401 = vmul.f32 1.0, %v1400
    %v1402 = vtanh.pop %v1393
    %v1403 = vmul.f32 %v1401, %v973
    %1405 = vrot.lane.b32.xlu0 %v1402, 64
    %v1406 = vpop.permute.xlu0 %1405
    %v1408 = vmul.f32 %v1401, %v1406
    %1410 = vrot.lane.b32.xlu0 %v1408, 32
    %v1411 = vpop.permute.xlu0 %1410
    %v1413 = vadd.f32 %v1403, %v1411
    %v1414 = vtanh.pop %v1413
    %1416 = vrot.lane.b32.xlu0 %v1414, 64
    %v1417 = vpop.permute.xlu0 %1416
    %v1419 = vmul.f32 %v1401, %v1417
    %1421 = vrot.lane.b32.xlu0 %v1419, 32
    %v1422 = vpop.permute.xlu0 %1421
    %v1423 = vsel %vm71, %v1422, 0
    %1425 = vmatprep.subr.mxu0 0.0
    %1426 = vmatpush1.msra.mxu0 %v171
    %1427 = vmatprep.subr.mxu0 0.0
    %1428 = vmatpush1.msra.mxu0 %v172
    %1429 = vmatprep.subr.mxu0 0.0
    %1430 = vmatpush1.msra.mxu0 %v173
    %1431 = vmatprep.subr.mxu0 0.0
    %1432 = vmatpush1.msra.mxu0 %v174
    %1433 = vmatprep.subr.mxu0 0.0
    %1434 = vmatpush1.msra.mxu0 0.0
    %1435 = vmatprep.subr.mxu0 0.0
    %1436 = vmatpush1.msra.mxu0 0.0
    %1437 = vmatprep.subr.mxu0 0.0
    %1438 = vmatpush1.msra.mxu0 0.0
    %1439 = vmatprep.subr.mxu0 0.0
    %1440 = vmatpush1.msra.mxu0 0.0
    %1441 = vmatprep.subr.mxu0 0.0
    %1442 = vmatpush1.msra.mxu0 0.0
    %1443 = vmatprep.subr.mxu0 0.0
    %1444 = vmatpush1.msra.mxu0 0.0
    %1445 = vmatprep.subr.mxu0 0.0
    %1446 = vmatpush1.msra.mxu0 0.0
    %1447 = vmatprep.subr.mxu0 0.0
    %1448 = vmatpush1.msra.mxu0 0.0
    %1449 = vmatprep.subr.mxu0 0.0
    %1450 = vmatpush1.msra.mxu0 0.0
    %1451 = vmatprep.subr.mxu0 0.0
    %1452 = vmatpush1.msra.mxu0 0.0
    %1453 = vmatprep.subr.mxu0 0.0
    %1454 = vmatpush1.msra.mxu0 0.0
    %1455 = vmatprep.subr.mxu0 0.0
    %1456 = vmatpush1.msra.mxu0 0.0
    %1457 = vmatprep.subr.mxu0 0.0
    %1458 = vmatpush1.msra.mxu0 0.0
    %1459 = vmatprep.subr.mxu0 0.0
    %1460 = vmatpush1.msra.mxu0 0.0
    %1461 = vmatprep.subr.mxu0 0.0
    %1462 = vmatpush1.msra.mxu0 0.0
    %1463 = vmatprep.subr.mxu0 0.0
    %1464 = vmatpush1.msra.mxu0 0.0
    %1465 = vmatprep.subr.mxu0 0.0
    %1466 = vmatpush1.msra.mxu0 0.0
    %1467 = vmatprep.subr.mxu0 0.0
    %1468 = vmatpush1.msra.mxu0 0.0
    %1469 = vmatprep.subr.mxu0 0.0
    %1470 = vmatpush1.msra.mxu0 0.0
    %1471 = vmatprep.subr.mxu0 0.0
    %1472 = vmatpush1.msra.mxu0 0.0
    %1473 = vmatprep.subr.mxu0 0.0
    %1474 = vmatpush1.msra.mxu0 0.0
    %1475 = vmatprep.subr.mxu0 0.0
    %1476 = vmatpush1.msra.mxu0 0.0
    %1477 = vmatprep.subr.mxu0 0.0
    %1478 = vmatpush1.msra.mxu0 0.0
    %1479 = vmatprep.subr.mxu0 0.0
    %1480 = vmatpush1.msra.mxu0 0.0
    %1481 = vmatprep.subr.mxu0 0.0
    %1482 = vmatpush1.msra.mxu0 0.0
    %1483 = vmatprep.subr.mxu0 0.0
    %1484 = vmatpush1.msra.mxu0 0.0
    %1485 = vmatprep.subr.mxu0 0.0
    %1486 = vmatpush1.msra.mxu0 0.0
    %1487 = vmatprep.subr.mxu0 0.0
    %1488 = vmatpush1.msra.mxu0 0.0
    %1489 = vmatprep.mubr.f32.mxu0 0.0
    %1490 = vmatmul.mubr.f32.gmra.mrb[0].mxu0 %v1423
    %v1491 = vpop.f32.mrb[0].mxu0
    %v1492 = vadd.f32 %v192, %v1491
    %v1493 = vpop.f32.mrb[0].mxu0
    %1494 = vdwg.mxu0
    %v1497 = vunpack.c.l.s4 1966171168
    %v1498 = vunpack.c.0.s8 %v1497
    %v1499 = vlaneseq
    %v1500 = vshrl.u32 %v1499, 7
    %v1501 = vsub.s32 %v1498, %v1500
    %v1502 = vrot.slane %v1492, %v1501
    %v1503 = vcombine.high %v1502, %v1502
    %v1505 = vunpack.c.l.s4 1966171168
    %v1506 = vunpack.c.0.s8 %v1505
    %v1507 = vlaneseq
    %v1508 = vshrl.u32 %v1507, 7
    %v1509 = vsub.s32 %v1506, %v1508
    %v1510 = vrot.slane %v1502, %v1509
    %v1512 = vunpack.c.l.s4 1966171168
    %v1513 = vunpack.c.0.s8 %v1512
    %v1514 = vlaneseq
    %v1515 = vshrl.u32 %v1514, 7
    %v1516 = vsub.s32 %v1513, %v1515
    %v1517 = vrot.slane %v1503, %v1516
    %1520 = vst.msk [vmem:[%s9 + $0x2] sm:$0x1] %vm638, %v1510
    %1521 = vst.msk [vmem:[%s9 + $0xa] sm:$0x1] %vm638, %v1517
    %v1522 = vsel %vm641, %v1492, -inf
    %1523 = vmax.xlane.f32.xlu0 %v1522
    %v1524 = vpop.xlane.xlu0 %1523
    %vm1525 = vcmp.eq.f32.partialorder %v1492, %v1524
    %v1526 = vsel %vm1525, %v195, 16
    %v1527 = vsel %vm641, %v1526, 2147483647
    %v1528 = vand.u32 %v1527, 65535
    %v1529 = vshra.s32 %v1527, 16
    %v1530 = vcvt.s32.f32 %v1528
    %v1531 = vcvt.s32.f32 %v1529
    %1532 = vmin.xlane.f32.xlu0 %v1531
    %v1533 = vpop.xlane.xlu0 %1532
    %vm1534 = vcmp.eq.f32.partialorder %v1531, %v1533
    %v1535 = vsel %vm1534, %v1530, inf
    %1536 = vmin.xlane.f32.xlu0 %v1535
    %v1537 = vpop.xlane.xlu0 %1536
    %v1538 = vcvt.f32.s32 %v1537
    %v1539 = vcvt.f32.s32 %v1533
    %v1540 = vshll.u32 %v1539, 16
    %v1541 = vadd.s32 %v1540, %v1538
    %1542 = vmatprep.subr.mxu0 %v164
    %1543 = vmatpush1.msra.mxu0 %v163
    %1544 = vmatprep.subr.mxu0 %v166
    %1545 = vmatpush1.msra.mxu0 %v165
    %1546 = vmatprep.subr.mxu0 %v168
    %1547 = vmatpush1.msra.mxu0 %v167
    %1548 = vmatprep.subr.mxu0 %v170
    %1549 = vmatpush1.msra.mxu0 %v169
    %1550 = vmatprep.subr.mxu0 0.0
    %1551 = vmatpush1.msra.mxu0 0.0
    %1552 = vmatprep.subr.mxu0 0.0
    %1553 = vmatpush1.msra.mxu0 0.0
    %1554 = vmatprep.subr.mxu0 0.0
    %1555 = vmatpush1.msra.mxu0 0.0
    %1556 = vmatprep.subr.mxu0 0.0
    %1557 = vmatpush1.msra.mxu0 0.0
    %1558 = vmatprep.subr.mxu0 0.0
    %1559 = vmatpush1.msra.mxu0 0.0
    %1560 = vmatprep.subr.mxu0 0.0
    %1561 = vmatpush1.msra.mxu0 0.0
    %1562 = vmatprep.subr.mxu0 0.0
    %1563 = vmatpush1.msra.mxu0 0.0
    %1564 = vmatprep.subr.mxu0 0.0
    %1565 = vmatpush1.msra.mxu0 0.0
    %1566 = vmatprep.subr.mxu0 0.0
    %1567 = vmatpush1.msra.mxu0 0.0
    %1568 = vmatprep.subr.mxu0 0.0
    %1569 = vmatpush1.msra.mxu0 0.0
    %1570 = vmatprep.subr.mxu0 0.0
    %1571 = vmatpush1.msra.mxu0 0.0
    %1572 = vmatprep.subr.mxu0 0.0
    %1573 = vmatpush1.msra.mxu0 0.0
    %1574 = vmatprep.subr.mxu0 0.0
    %1575 = vmatpush1.msra.mxu0 0.0
    %1576 = vmatprep.subr.mxu0 0.0
    %1577 = vmatpush1.msra.mxu0 0.0
    %1578 = vmatprep.subr.mxu0 0.0
    %1579 = vmatpush1.msra.mxu0 0.0
    %1580 = vmatprep.subr.mxu0 0.0
    %1581 = vmatpush1.msra.mxu0 0.0
    %1582 = vmatprep.subr.mxu0 0.0
    %1583 = vmatpush1.msra.mxu0 0.0
    %1584 = vmatprep.subr.mxu0 0.0
    %1585 = vmatpush1.msra.mxu0 0.0
    %1586 = vmatprep.subr.mxu0 0.0
    %1587 = vmatpush1.msra.mxu0 0.0
    %1588 = vmatprep.subr.mxu0 0.0
    %1589 = vmatpush1.msra.mxu0 0.0
    %1590 = vmatprep.subr.mxu0 0.0
    %1591 = vmatpush1.msra.mxu0 0.0
    %1592 = vmatprep.subr.mxu0 0.0
    %1593 = vmatpush1.msra.mxu0 0.0
    %1594 = vmatprep.subr.mxu0 0.0
    %1595 = vmatpush1.msra.mxu0 0.0
    %1596 = vmatprep.subr.mxu0 0.0
    %1597 = vmatpush1.msra.mxu0 0.0
    %1598 = vmatprep.subr.mxu0 0.0
    %1599 = vmatpush1.msra.mxu0 0.0
    %1600 = vmatprep.subr.mxu0 0.0
    %1601 = vmatpush1.msra.mxu0 0.0
    %1602 = vmatprep.subr.mxu0 0.0
    %1603 = vmatpush1.msra.mxu0 0.0
    %1604 = vmatprep.subr.mxu0 0.0
    %1605 = vmatpush1.msra.mxu0 0.0
    %1606 = vmatprep.mubr.f32.mxu0 0.0
    %1607 = vmatmul.mubr.f32.gmra.mrb[0].mxu0 %v1423
    %v1608 = vpop.f32.mrb[0].mxu0
    %v1609 = vadd.f32 %v180, %v1608
    %v1610 = vpop.f32.mrb[0].mxu0
    %v1611 = vadd.f32 %v184, %v1610
    %1612 = vdwg.mxu0
    %v1615 = vunpack.c.l.s4 1966171168
    %v1616 = vunpack.c.0.s8 %v1615
    %v1617 = vlaneseq
    %v1618 = vshrl.u32 %v1617, 7
    %v1619 = vsub.s32 %v1616, %v1618
    %v1620 = vrot.slane %v1611, %v1619
    %v1621 = vcombine.high %v1620, %v1620
    %v1623 = vunpack.c.l.s4 1966171168
    %v1624 = vunpack.c.0.s8 %v1623
    %v1625 = vlaneseq
    %v1626 = vshrl.u32 %v1625, 7
    %v1627 = vsub.s32 %v1624, %v1626
    %v1628 = vrot.slane %v1620, %v1627
    %v1630 = vunpack.c.l.s4 1966171168
    %v1631 = vunpack.c.0.s8 %v1630
    %v1632 = vlaneseq
    %v1633 = vshrl.u32 %v1632, 7
    %v1634 = vsub.s32 %v1631, %v1633
    %v1635 = vrot.slane %v1621, %v1634
    %v1636 = vlaneseq
    %v1637 = vshrl.u32 %v1636, 7
    %v1638 = vsub.s32 0, %v1637
    %v1639 = vrot.slane %v1628, %v1638
    %v1640 = vlaneseq
    %v1641 = vshrl.u32 %v1640, 7
    %v1642 = vsub.s32 0, %v1641
    %v1643 = vrot.slane %v1635, %v1642
    %v1646 = vmul.f32 %v1639, %v145
    %v1647 = vmul.f32 %v1643, %v150
    %v1648 = vsel %vm305, %v1646, 0.0
    %1649 = vadd.xlane.f32.xlu0 %v1648
    %v1650 = vpop.xlane.xlu0 %1649
    %v1651 = vsel %vm305, %v1647, 0.0
    %1652 = vadd.xlane.f32.xlu0 %v1651
    %v1653 = vpop.xlane.xlu0 %1652
    %v1654 = vadd.f32 %v1650, %v324
    %v1655 = vadd.f32 %v1653, %v327
    %1658 = vset.pattern.permute.xlu0 0
    %1659 = vperm.xlu0 %1658, %v1654
    %v1660 = vpop.permute.xlu0 %1659
    %1661 = vset.pattern.permute.xlu0 0
    %1662 = vperm.xlu0 %1661, %v1655
    %v1663 = vpop.permute.xlu0 %1662
    %v1664 = vlaneseq
    %v1665 = vshrl.u32 %v1664, 7
    %v1666 = vsub.s32 %v195, %v1665
    %v1667 = vrot.slane %v1660, %v1666
    %v1668 = vlaneseq
    %v1669 = vshrl.u32 %v1668, 7
    %v1670 = vsub.s32 %v195, %v1669
    %v1671 = vrot.slane %v1663, %v1670
    %v1672 = vsel %vm348, %v1671, %v1667
    %v1674 = vsel %vm351, %v1672, -inf
    %1675 = vmax.xlane.f32.xlu0 %v1674
    %v1676 = vpop.xlane.xlu0 %1675
    %v1678 = vlaneseq
    %v1679 = vshrl.u32 %v1678, 7
    %v1680 = vsub.s32 0, %v1679
    %v1681 = vrot.slane %v1676, %v1680
    %v1682 = vlaneseq
    %v1683 = vshrl.u32 %v1682, 7
    %v1684 = vsub.s32 1, %v1683
    %v1685 = vrot.slane %v1676, %v1684
    %v1688 = vsub.f32 %v1654, %v1681
    %v1689 = vsub.f32 %v1655, %v1685
    %v1690 = vmul.f32 %v1688, 1.442695
    %v1691 = vpow.pop %v1690
    %v1692 = vmul.f32 %v1689, 1.442695
    %v1693 = vpow.pop %v1692
    %1696 = vset.pattern.permute.xlu0 0
    %1697 = vperm.xlu0 %1696, %v1691
    %v1698 = vpop.permute.xlu0 %1697
    %1699 = vset.pattern.permute.xlu0 0
    %1700 = vperm.xlu0 %1699, %v1693
    %v1701 = vpop.permute.xlu0 %1700
    %v1702 = vlaneseq
    %v1703 = vshrl.u32 %v1702, 7
    %v1704 = vsub.s32 %v195, %v1703
    %v1705 = vrot.slane %v1698, %v1704
    %v1706 = vlaneseq
    %v1707 = vshrl.u32 %v1706, 7
    %v1708 = vsub.s32 %v195, %v1707
    %v1709 = vrot.slane %v1701, %v1708
    %v1710 = vsel %vm348, %v1709, %v1705
    %v1712 = vsel %vm351, %v1710, 0.0
    %1713 = vadd.xlane.f32.xlu0 %v1712
    %v1714 = vpop.xlane.xlu0 %1713
    %v1715 = vrcp.pop %v1714
    %v1717 = vlaneseq
    %v1718 = vshrl.u32 %v1717, 7
    %v1719 = vsub.s32 0, %v1718
    %v1720 = vrot.slane %v1715, %v1719
    %v1721 = vlaneseq
    %v1722 = vshrl.u32 %v1721, 7
    %v1723 = vsub.s32 1, %v1722
    %v1724 = vrot.slane %v1715, %v1723
    %v1727 = vmul.f32 %v1691, %v1720
    %v1728 = vmul.f32 %v1693, %v1724
    %1730 = vset.pattern.permute.xlu0 0
    %1731 = vperm.xlu0 %1730, %v1727
    %v1732 = vpop.permute.xlu0 %1731
    %1735 = vset.pattern.permute.xlu0 0
    %1736 = vperm.xlu0 %1735, %v1728
    %v1737 = vpop.permute.xlu0 %1736
    %v1739 = vmul.f32 %v1732, %v58
    %v1740 = vmul.f32 %v1737, %v59
    %v1741 = vsel %vm71, %v1739, 0.0
    %v1742 = vrot.slane %v1741, 4
    %v1743 = vadd.f32 %v1741, %v1742
    %v1744 = vrot.slane %v1743, 2
    %v1745 = vadd.f32 %v1743, %v1744
    %v1746 = vrot.slane %v1745, 1
    %v1747 = vadd.f32 %v1745, %v1746
    %v1748 = vsel %vm71, %v1740, 0.0
    %v1749 = vrot.slane %v1748, 4
    %v1750 = vadd.f32 %v1748, %v1749
    %v1751 = vrot.slane %v1750, 2
    %v1752 = vadd.f32 %v1750, %v1751
    %v1753 = vrot.slane %v1752, 1
    %v1754 = vadd.f32 %v1752, %v1753
    %vm1755 = vcmp.eq.s32.totalorder %v195, %v1541
    %v1756 = vsel %vm1755, 1, 0
    %v1757 = vcvt.s32.f32 %v1756
    %v1760 = vsel %vm348, %v1754, %v1747
    %v1762 = vadd.f32 %v1757, %v1760
    %v1764 = vsel %vm71, %v1762, 0
    %1766 = vmatprep.subr.mxu0 0.0
    %1767 = vmatpush1.msra.mxu0 %v159
    %1768 = vmatprep.subr.mxu0 0.0
    %1769 = vmatpush1.msra.mxu0 %v160
    %1770 = vmatprep.subr.mxu0 0.0
    %1771 = vmatpush1.msra.mxu0 %v161
    %1772 = vmatprep.subr.mxu0 0.0
    %1773 = vmatpush1.msra.mxu0 %v162
    %1774 = vmatprep.subr.mxu0 0.0
    %1775 = vmatpush1.msra.mxu0 0.0
    %1776 = vmatprep.subr.mxu0 0.0
    %1777 = vmatpush1.msra.mxu0 0.0
    %1778 = vmatprep.subr.mxu0 0.0
    %1779 = vmatpush1.msra.mxu0 0.0
    %1780 = vmatprep.subr.mxu0 0.0
    %1781 = vmatpush1.msra.mxu0 0.0
    %1782 = vmatprep.subr.mxu0 0.0
    %1783 = vmatpush1.msra.mxu0 0.0
    %1784 = vmatprep.subr.mxu0 0.0
    %1785 = vmatpush1.msra.mxu0 0.0
    %1786 = vmatprep.subr.mxu0 0.0
    %1787 = vmatpush1.msra.mxu0 0.0
    %1788 = vmatprep.subr.mxu0 0.0
    %1789 = vmatpush1.msra.mxu0 0.0
    %1790 = vmatprep.subr.mxu0 0.0
    %1791 = vmatpush1.msra.mxu0 0.0
    %1792 = vmatprep.subr.mxu0 0.0
    %1793 = vmatpush1.msra.mxu0 0.0
    %1794 = vmatprep.subr.mxu0 0.0
    %1795 = vmatpush1.msra.mxu0 0.0
    %1796 = vmatprep.subr.mxu0 0.0
    %1797 = vmatpush1.msra.mxu0 0.0
    %1798 = vmatprep.subr.mxu0 0.0
    %1799 = vmatpush1.msra.mxu0 0.0
    %1800 = vmatprep.subr.mxu0 0.0
    %1801 = vmatpush1.msra.mxu0 0.0
    %1802 = vmatprep.subr.mxu0 0.0
    %1803 = vmatpush1.msra.mxu0 0.0
    %1804 = vmatprep.subr.mxu0 0.0
    %1805 = vmatpush1.msra.mxu0 0.0
    %1806 = vmatprep.subr.mxu0 0.0
    %1807 = vmatpush1.msra.mxu0 0.0
    %1808 = vmatprep.subr.mxu0 0.0
    %1809 = vmatpush1.msra.mxu0 0.0
    %1810 = vmatprep.subr.mxu0 0.0
    %1811 = vmatpush1.msra.mxu0 0.0
    %1812 = vmatprep.subr.mxu0 0.0
    %1813 = vmatpush1.msra.mxu0 0.0
    %1814 = vmatprep.subr.mxu0 0.0
    %1815 = vmatpush1.msra.mxu0 0.0
    %1816 = vmatprep.subr.mxu0 0.0
    %1817 = vmatpush1.msra.mxu0 0.0
    %1818 = vmatprep.subr.mxu0 0.0
    %1819 = vmatpush1.msra.mxu0 0.0
    %1820 = vmatprep.subr.mxu0 0.0
    %1821 = vmatpush1.msra.mxu0 0.0
    %1822 = vmatprep.subr.mxu0 0.0
    %1823 = vmatpush1.msra.mxu0 0.0
    %1824 = vmatprep.subr.mxu0 0.0
    %1825 = vmatpush1.msra.mxu0 0.0
    %1826 = vmatprep.subr.mxu0 0.0
    %1827 = vmatpush1.msra.mxu0 0.0
    %1828 = vmatprep.subr.mxu0 0.0
    %1829 = vmatpush1.msra.mxu0 0.0
    %1830 = vmatprep.mubr.f32.mxu0 0.0
    %1831 = vmatmul.mubr.f32.gmra.mrb[0].mxu0 %v1764
    %v1832 = vpop.f32.mrb[0].mxu0
    %v1833 = vadd.f32 %v1609, %v1832
    %v1834 = vpop.f32.mrb[0].mxu0
    %1835 = vdwg.mxu0
    %v1836 = vxor.u32 %v1833, 2147483648
    %v1837 = vmul.f32 %v1836, 1.442695
    %v1838 = vpow.pop %v1837
    %v1839 = vadd.f32 %v1838, 1.0
    %v1840 = vrcp.pop %v1839
    %v1841 = vmul.f32 1.0, %v1840
    %v1842 = vtanh.pop %v1833
    %v1843 = vmul.f32 %v1841, %v1413
    %1845 = vrot.lane.b32.xlu0 %v1842, 64
    %v1846 = vpop.permute.xlu0 %1845
    %v1848 = vmul.f32 %v1841, %v1846
    %1850 = vrot.lane.b32.xlu0 %v1848, 32
    %v1851 = vpop.permute.xlu0 %1850
    %v1853 = vadd.f32 %v1843, %v1851
    %v1854 = vtanh.pop %v1853
    %1856 = vrot.lane.b32.xlu0 %v1854, 64
    %v1857 = vpop.permute.xlu0 %1856
    %v1859 = vmul.f32 %v1841, %v1857
    %1861 = vrot.lane.b32.xlu0 %v1859, 32
    %v1862 = vpop.permute.xlu0 %1861
    %v1863 = vsel %vm71, %v1862, 0
    %1865 = vmatprep.subr.mxu0 0.0
    %1866 = vmatpush1.msra.mxu0 %v171
    %1867 = vmatprep.subr.mxu0 0.0
    %1868 = vmatpush1.msra.mxu0 %v172
    %1869 = vmatprep.subr.mxu0 0.0
    %1870 = vmatpush1.msra.mxu0 %v173
    %1871 = vmatprep.subr.mxu0 0.0
    %1872 = vmatpush1.msra.mxu0 %v174
    %1873 = vmatprep.subr.mxu0 0.0
    %1874 = vmatpush1.msra.mxu0 0.0
    %1875 = vmatprep.subr.mxu0 0.0
    %1876 = vmatpush1.msra.mxu0 0.0
    %1877 = vmatprep.subr.mxu0 0.0
    %1878 = vmatpush1.msra.mxu0 0.0
    %1879 = vmatprep.subr.mxu0 0.0
    %1880 = vmatpush1.msra.mxu0 0.0
    %1881 = vmatprep.subr.mxu0 0.0
    %1882 = vmatpush1.msra.mxu0 0.0
    %1883 = vmatprep.subr.mxu0 0.0
    %1884 = vmatpush1.msra.mxu0 0.0
    %1885 = vmatprep.subr.mxu0 0.0
    %1886 = vmatpush1.msra.mxu0 0.0
    %1887 = vmatprep.subr.mxu0 0.0
    %1888 = vmatpush1.msra.mxu0 0.0
    %1889 = vmatprep.subr.mxu0 0.0
    %1890 = vmatpush1.msra.mxu0 0.0
    %1891 = vmatprep.subr.mxu0 0.0
    %1892 = vmatpush1.msra.mxu0 0.0
    %1893 = vmatprep.subr.mxu0 0.0
    %1894 = vmatpush1.msra.mxu0 0.0
    %1895 = vmatprep.subr.mxu0 0.0
    %1896 = vmatpush1.msra.mxu0 0.0
    %1897 = vmatprep.subr.mxu0 0.0
    %1898 = vmatpush1.msra.mxu0 0.0
    %1899 = vmatprep.subr.mxu0 0.0
    %1900 = vmatpush1.msra.mxu0 0.0
    %1901 = vmatprep.subr.mxu0 0.0
    %1902 = vmatpush1.msra.mxu0 0.0
    %1903 = vmatprep.subr.mxu0 0.0
    %1904 = vmatpush1.msra.mxu0 0.0
    %1905 = vmatprep.subr.mxu0 0.0
    %1906 = vmatpush1.msra.mxu0 0.0
    %1907 = vmatprep.subr.mxu0 0.0
    %1908 = vmatpush1.msra.mxu0 0.0
    %1909 = vmatprep.subr.mxu0 0.0
    %1910 = vmatpush1.msra.mxu0 0.0
    %1911 = vmatprep.subr.mxu0 0.0
    %1912 = vmatpush1.msra.mxu0 0.0
    %1913 = vmatprep.subr.mxu0 0.0
    %1914 = vmatpush1.msra.mxu0 0.0
    %1915 = vmatprep.subr.mxu0 0.0
    %1916 = vmatpush1.msra.mxu0 0.0
    %1917 = vmatprep.subr.mxu0 0.0
    %1918 = vmatpush1.msra.mxu0 0.0
    %1919 = vmatprep.subr.mxu0 0.0
    %1920 = vmatpush1.msra.mxu0 0.0
    %1921 = vmatprep.subr.mxu0 0.0
    %1922 = vmatpush1.msra.mxu0 0.0
    %1923 = vmatprep.subr.mxu0 0.0
    %1924 = vmatpush1.msra.mxu0 0.0
    %1925 = vmatprep.subr.mxu0 0.0
    %1926 = vmatpush1.msra.mxu0 0.0
    %1927 = vmatprep.subr.mxu0 0.0
    %1928 = vmatpush1.msra.mxu0 0.0
    %1929 = vmatprep.mubr.f32.mxu0 0.0
    %1930 = vmatmul.mubr.f32.gmra.mrb[0].mxu0 %v1863
    %v1931 = vpop.f32.mrb[0].mxu0
    %v1932 = vadd.f32 %v192, %v1931
    %v1933 = vpop.f32.mrb[0].mxu0
    %1934 = vdwg.mxu0
    %v1937 = vunpack.c.l.s4 1966171168
    %v1938 = vunpack.c.0.s8 %v1937
    %v1939 = vlaneseq
    %v1940 = vshrl.u32 %v1939, 7
    %v1941 = vsub.s32 %v1938, %v1940
    %v1942 = vrot.slane %v1932, %v1941
    %v1943 = vcombine.high %v1942, %v1942
    %v1945 = vunpack.c.l.s4 1966171168
    %v1946 = vunpack.c.0.s8 %v1945
    %v1947 = vlaneseq
    %v1948 = vshrl.u32 %v1947, 7
    %v1949 = vsub.s32 %v1946, %v1948
    %v1950 = vrot.slane %v1942, %v1949
    %v1952 = vunpack.c.l.s4 1966171168
    %v1953 = vunpack.c.0.s8 %v1952
    %v1954 = vlaneseq
    %v1955 = vshrl.u32 %v1954, 7
    %v1956 = vsub.s32 %v1953, %v1955
    %v1957 = vrot.slane %v1943, %v1956
    %1960 = vst.msk [vmem:[%s9 + $0x3] sm:$0x1] %vm638, %v1950
    %1961 = vst.msk [vmem:[%s9 + $0xb] sm:$0x1] %vm638, %v1957
    %v1962 = vsel %vm641, %v1932, -inf
    %1963 = vmax.xlane.f32.xlu0 %v1962
    %v1964 = vpop.xlane.xlu0 %1963
    %vm1965 = vcmp.eq.f32.partialorder %v1932, %v1964
    %v1966 = vsel %vm1965, %v195, 16
    %v1967 = vsel %vm641, %v1966, 2147483647
    %v1968 = vand.u32 %v1967, 65535
    %v1969 = vshra.s32 %v1967, 16
    %v1970 = vcvt.s32.f32 %v1968
    %v1971 = vcvt.s32.f32 %v1969
    %1972 = vmin.xlane.f32.xlu0 %v1971
    %v1973 = vpop.xlane.xlu0 %1972
    %vm1974 = vcmp.eq.f32.partialorder %v1971, %v1973
    %v1975 = vsel %vm1974, %v1970, inf
    %1976 = vmin.xlane.f32.xlu0 %v1975
    %v1977 = vpop.xlane.xlu0 %1976
    %v1978 = vcvt.f32.s32 %v1977
    %v1979 = vcvt.f32.s32 %v1973
    %v1980 = vshll.u32 %v1979, 16
    %v1981 = vadd.s32 %v1980, %v1978
    %1982 = vmatprep.subr.mxu0 %v164
    %1983 = vmatpush1.msra.mxu0 %v163
    %1984 = vmatprep.subr.mxu0 %v166
    %1985 = vmatpush1.msra.mxu0 %v165
    %1986 = vmatprep.subr.mxu0 %v168
    %1987 = vmatpush1.msra.mxu0 %v167
    %1988 = vmatprep.subr.mxu0 %v170
    %1989 = vmatpush1.msra.mxu0 %v169
    %1990 = vmatprep.subr.mxu0 0.0
    %1991 = vmatpush1.msra.mxu0 0.0
    %1992 = vmatprep.subr.mxu0 0.0
    %1993 = vmatpush1.msra.mxu0 0.0
    %1994 = vmatprep.subr.mxu0 0.0
    %1995 = vmatpush1.msra.mxu0 0.0
    %1996 = vmatprep.subr.mxu0 0.0
    %1997 = vmatpush1.msra.mxu0 0.0
    %1998 = vmatprep.subr.mxu0 0.0
    %1999 = vmatpush1.msra.mxu0 0.0
    %2000 = vmatprep.subr.mxu0 0.0
    %2001 = vmatpush1.msra.mxu0 0.0
    %2002 = vmatprep.subr.mxu0 0.0
    %2003 = vmatpush1.msra.mxu0 0.0
    %2004 = vmatprep.subr.mxu0 0.0
    %2005 = vmatpush1.msra.mxu0 0.0
    %2006 = vmatprep.subr.mxu0 0.0
    %2007 = vmatpush1.msra.mxu0 0.0
    %2008 = vmatprep.subr.mxu0 0.0
    %2009 = vmatpush1.msra.mxu0 0.0
    %2010 = vmatprep.subr.mxu0 0.0
    %2011 = vmatpush1.msra.mxu0 0.0
    %2012 = vmatprep.subr.mxu0 0.0
    %2013 = vmatpush1.msra.mxu0 0.0
    %2014 = vmatprep.subr.mxu0 0.0
    %2015 = vmatpush1.msra.mxu0 0.0
    %2016 = vmatprep.subr.mxu0 0.0
    %2017 = vmatpush1.msra.mxu0 0.0
    %2018 = vmatprep.subr.mxu0 0.0
    %2019 = vmatpush1.msra.mxu0 0.0
    %2020 = vmatprep.subr.mxu0 0.0
    %2021 = vmatpush1.msra.mxu0 0.0
    %2022 = vmatprep.subr.mxu0 0.0
    %2023 = vmatpush1.msra.mxu0 0.0
    %2024 = vmatprep.subr.mxu0 0.0
    %2025 = vmatpush1.msra.mxu0 0.0
    %2026 = vmatprep.subr.mxu0 0.0
    %2027 = vmatpush1.msra.mxu0 0.0
    %2028 = vmatprep.subr.mxu0 0.0
    %2029 = vmatpush1.msra.mxu0 0.0
    %2030 = vmatprep.subr.mxu0 0.0
    %2031 = vmatpush1.msra.mxu0 0.0
    %2032 = vmatprep.subr.mxu0 0.0
    %2033 = vmatpush1.msra.mxu0 0.0
    %2034 = vmatprep.subr.mxu0 0.0
    %2035 = vmatpush1.msra.mxu0 0.0
    %2036 = vmatprep.subr.mxu0 0.0
    %2037 = vmatpush1.msra.mxu0 0.0
    %2038 = vmatprep.subr.mxu0 0.0
    %2039 = vmatpush1.msra.mxu0 0.0
    %2040 = vmatprep.subr.mxu0 0.0
    %2041 = vmatpush1.msra.mxu0 0.0
    %2042 = vmatprep.subr.mxu0 0.0
    %2043 = vmatpush1.msra.mxu0 0.0
    %2044 = vmatprep.subr.mxu0 0.0
    %2045 = vmatpush1.msra.mxu0 0.0
    %2046 = vmatprep.mubr.f32.mxu0 0.0
    %2047 = vmatmul.mubr.f32.gmra.mrb[0].mxu0 %v1863
    %v2048 = vpop.f32.mrb[0].mxu0
    %v2049 = vadd.f32 %v180, %v2048
    %v2050 = vpop.f32.mrb[0].mxu0
    %v2051 = vadd.f32 %v184, %v2050
    %2052 = vdwg.mxu0
    %v2055 = vunpack.c.l.s4 1966171168
    %v2056 = vunpack.c.0.s8 %v2055
    %v2057 = vlaneseq
    %v2058 = vshrl.u32 %v2057, 7
    %v2059 = vsub.s32 %v2056, %v2058
    %v2060 = vrot.slane %v2051, %v2059
    %v2061 = vcombine.high %v2060, %v2060
    %v2063 = vunpack.c.l.s4 1966171168
    %v2064 = vunpack.c.0.s8 %v2063
    %v2065 = vlaneseq
    %v2066 = vshrl.u32 %v2065, 7
    %v2067 = vsub.s32 %v2064, %v2066
    %v2068 = vrot.slane %v2060, %v2067
    %v2070 = vunpack.c.l.s4 1966171168
    %v2071 = vunpack.c.0.s8 %v2070
    %v2072 = vlaneseq
    %v2073 = vshrl.u32 %v2072, 7
    %v2074 = vsub.s32 %v2071, %v2073
    %v2075 = vrot.slane %v2061, %v2074
    %v2076 = vlaneseq
    %v2077 = vshrl.u32 %v2076, 7
    %v2078 = vsub.s32 0, %v2077
    %v2079 = vrot.slane %v2068, %v2078
    %v2080 = vlaneseq
    %v2081 = vshrl.u32 %v2080, 7
    %v2082 = vsub.s32 0, %v2081
    %v2083 = vrot.slane %v2075, %v2082
    %v2086 = vmul.f32 %v2079, %v145
    %v2087 = vmul.f32 %v2083, %v150
    %v2088 = vsel %vm305, %v2086, 0.0
    %2089 = vadd.xlane.f32.xlu0 %v2088
    %v2090 = vpop.xlane.xlu0 %2089
    %v2091 = vsel %vm305, %v2087, 0.0
    %2092 = vadd.xlane.f32.xlu0 %v2091
    %v2093 = vpop.xlane.xlu0 %2092
    %v2094 = vadd.f32 %v2090, %v324
    %v2095 = vadd.f32 %v2093, %v327
    %2098 = vset.pattern.permute.xlu0 0
    %2099 = vperm.xlu0 %2098, %v2094
    %v2100 = vpop.permute.xlu0 %2099
    %2101 = vset.pattern.permute.xlu0 0
    %2102 = vperm.xlu0 %2101, %v2095
    %v2103 = vpop.permute.xlu0 %2102
    %v2104 = vlaneseq
    %v2105 = vshrl.u32 %v2104, 7
    %v2106 = vsub.s32 %v195, %v2105
    %v2107 = vrot.slane %v2100, %v2106
    %v2108 = vlaneseq
    %v2109 = vshrl.u32 %v2108, 7
    %v2110 = vsub.s32 %v195, %v2109
    %v2111 = vrot.slane %v2103, %v2110
    %v2112 = vsel %vm348, %v2111, %v2107
    %v2114 = vsel %vm351, %v2112, -inf
    %2115 = vmax.xlane.f32.xlu0 %v2114
    %v2116 = vpop.xlane.xlu0 %2115
    %v2118 = vlaneseq
    %v2119 = vshrl.u32 %v2118, 7
    %v2120 = vsub.s32 0, %v2119
    %v2121 = vrot.slane %v2116, %v2120
    %v2122 = vlaneseq
    %v2123 = vshrl.u32 %v2122, 7
    %v2124 = vsub.s32 1, %v2123
    %v2125 = vrot.slane %v2116, %v2124
    %v2128 = vsub.f32 %v2094, %v2121
    %v2129 = vsub.f32 %v2095, %v2125
    %v2130 = vmul.f32 %v2128, 1.442695
    %v2131 = vpow.pop %v2130
    %v2132 = vmul.f32 %v2129, 1.442695
    %v2133 = vpow.pop %v2132
    %2136 = vset.pattern.permute.xlu0 0
    %2137 = vperm.xlu0 %2136, %v2131
    %v2138 = vpop.permute.xlu0 %2137
    %2139 = vset.pattern.permute.xlu0 0
    %2140 = vperm.xlu0 %2139, %v2133
    %v2141 = vpop.permute.xlu0 %2140
    %v2142 = vlaneseq
    %v2143 = vshrl.u32 %v2142, 7
    %v2144 = vsub.s32 %v195, %v2143
    %v2145 = vrot.slane %v2138, %v2144
    %v2146 = vlaneseq
    %v2147 = vshrl.u32 %v2146, 7
    %v2148 = vsub.s32 %v195, %v2147
    %v2149 = vrot.slane %v2141, %v2148
    %v2150 = vsel %vm348, %v2149, %v2145
    %v2152 = vsel %vm351, %v2150, 0.0
    %2153 = vadd.xlane.f32.xlu0 %v2152
    %v2154 = vpop.xlane.xlu0 %2153
    %v2155 = vrcp.pop %v2154
    %v2157 = vlaneseq
    %v2158 = vshrl.u32 %v2157, 7
    %v2159 = vsub.s32 0, %v2158
    %v2160 = vrot.slane %v2155, %v2159
    %v2161 = vlaneseq
    %v2162 = vshrl.u32 %v2161, 7
    %v2163 = vsub.s32 1, %v2162
    %v2164 = vrot.slane %v2155, %v2163
    %v2167 = vmul.f32 %v2131, %v2160
    %v2168 = vmul.f32 %v2133, %v2164
    %2170 = vset.pattern.permute.xlu0 0
    %2171 = vperm.xlu0 %2170, %v2167
    %v2172 = vpop.permute.xlu0 %2171
    %2175 = vset.pattern.permute.xlu0 0
    %2176 = vperm.xlu0 %2175, %v2168
    %v2177 = vpop.permute.xlu0 %2176
    %v2179 = vmul.f32 %v2172, %v58
    %v2180 = vmul.f32 %v2177, %v59
    %v2181 = vsel %vm71, %v2179, 0.0
    %v2182 = vrot.slane %v2181, 4
    %v2183 = vadd.f32 %v2181, %v2182
    %v2184 = vrot.slane %v2183, 2
    %v2185 = vadd.f32 %v2183, %v2184
    %v2186 = vrot.slane %v2185, 1
    %v2187 = vadd.f32 %v2185, %v2186
    %v2188 = vsel %vm71, %v2180, 0.0
    %v2189 = vrot.slane %v2188, 4
    %v2190 = vadd.f32 %v2188, %v2189
    %v2191 = vrot.slane %v2190, 2
    %v2192 = vadd.f32 %v2190, %v2191
    %v2193 = vrot.slane %v2192, 1
    %v2194 = vadd.f32 %v2192, %v2193
    %vm2195 = vcmp.eq.s32.totalorder %v195, %v1981
    %v2196 = vsel %vm2195, 1, 0
    %v2197 = vcvt.s32.f32 %v2196
    %v2200 = vsel %vm348, %v2194, %v2187
    %v2202 = vadd.f32 %v2197, %v2200
    %v2204 = vsel %vm71, %v2202, 0
    %2206 = vmatprep.subr.mxu0 0.0
    %2207 = vmatpush1.msra.mxu0 %v159
    %2208 = vmatprep.subr.mxu0 0.0
    %2209 = vmatpush1.msra.mxu0 %v160
    %2210 = vmatprep.subr.mxu0 0.0
    %2211 = vmatpush1.msra.mxu0 %v161
    %2212 = vmatprep.subr.mxu0 0.0
    %2213 = vmatpush1.msra.mxu0 %v162
    %2214 = vmatprep.subr.mxu0 0.0
    %2215 = vmatpush1.msra.mxu0 0.0
    %2216 = vmatprep.subr.mxu0 0.0
    %2217 = vmatpush1.msra.mxu0 0.0
    %2218 = vmatprep.subr.mxu0 0.0
    %2219 = vmatpush1.msra.mxu0 0.0
    %2220 = vmatprep.subr.mxu0 0.0
    %2221 = vmatpush1.msra.mxu0 0.0
    %2222 = vmatprep.subr.mxu0 0.0
    %2223 = vmatpush1.msra.mxu0 0.0
    %2224 = vmatprep.subr.mxu0 0.0
    %2225 = vmatpush1.msra.mxu0 0.0
    %2226 = vmatprep.subr.mxu0 0.0
    %2227 = vmatpush1.msra.mxu0 0.0
    %2228 = vmatprep.subr.mxu0 0.0
    %2229 = vmatpush1.msra.mxu0 0.0
    %2230 = vmatprep.subr.mxu0 0.0
    %2231 = vmatpush1.msra.mxu0 0.0
    %2232 = vmatprep.subr.mxu0 0.0
    %2233 = vmatpush1.msra.mxu0 0.0
    %2234 = vmatprep.subr.mxu0 0.0
    %2235 = vmatpush1.msra.mxu0 0.0
    %2236 = vmatprep.subr.mxu0 0.0
    %2237 = vmatpush1.msra.mxu0 0.0
    %2238 = vmatprep.subr.mxu0 0.0
    %2239 = vmatpush1.msra.mxu0 0.0
    %2240 = vmatprep.subr.mxu0 0.0
    %2241 = vmatpush1.msra.mxu0 0.0
    %2242 = vmatprep.subr.mxu0 0.0
    %2243 = vmatpush1.msra.mxu0 0.0
    %2244 = vmatprep.subr.mxu0 0.0
    %2245 = vmatpush1.msra.mxu0 0.0
    %2246 = vmatprep.subr.mxu0 0.0
    %2247 = vmatpush1.msra.mxu0 0.0
    %2248 = vmatprep.subr.mxu0 0.0
    %2249 = vmatpush1.msra.mxu0 0.0
    %2250 = vmatprep.subr.mxu0 0.0
    %2251 = vmatpush1.msra.mxu0 0.0
    %2252 = vmatprep.subr.mxu0 0.0
    %2253 = vmatpush1.msra.mxu0 0.0
    %2254 = vmatprep.subr.mxu0 0.0
    %2255 = vmatpush1.msra.mxu0 0.0
    %2256 = vmatprep.subr.mxu0 0.0
    %2257 = vmatpush1.msra.mxu0 0.0
    %2258 = vmatprep.subr.mxu0 0.0
    %2259 = vmatpush1.msra.mxu0 0.0
    %2260 = vmatprep.subr.mxu0 0.0
    %2261 = vmatpush1.msra.mxu0 0.0
    %2262 = vmatprep.subr.mxu0 0.0
    %2263 = vmatpush1.msra.mxu0 0.0
    %2264 = vmatprep.subr.mxu0 0.0
    %2265 = vmatpush1.msra.mxu0 0.0
    %2266 = vmatprep.subr.mxu0 0.0
    %2267 = vmatpush1.msra.mxu0 0.0
    %2268 = vmatprep.subr.mxu0 0.0
    %2269 = vmatpush1.msra.mxu0 0.0
    %2270 = vmatprep.mubr.f32.mxu0 0.0
    %2271 = vmatmul.mubr.f32.gmra.mrb[0].mxu0 %v2204
    %v2272 = vpop.f32.mrb[0].mxu0
    %v2273 = vadd.f32 %v2049, %v2272
    %v2274 = vpop.f32.mrb[0].mxu0
    %2275 = vdwg.mxu0
    %v2276 = vxor.u32 %v2273, 2147483648
    %v2277 = vmul.f32 %v2276, 1.442695
    %v2278 = vpow.pop %v2277
    %v2279 = vadd.f32 %v2278, 1.0
    %v2280 = vrcp.pop %v2279
    %v2281 = vmul.f32 1.0, %v2280
    %v2282 = vtanh.pop %v2273
    %v2283 = vmul.f32 %v2281, %v1853
    %2285 = vrot.lane.b32.xlu0 %v2282, 64
    %v2286 = vpop.permute.xlu0 %2285
    %v2288 = vmul.f32 %v2281, %v2286
    %2290 = vrot.lane.b32.xlu0 %v2288, 32
    %v2291 = vpop.permute.xlu0 %2290
    %v2293 = vadd.f32 %v2283, %v2291
    %v2294 = vtanh.pop %v2293
    %2296 = vrot.lane.b32.xlu0 %v2294, 64
    %v2297 = vpop.permute.xlu0 %2296
    %v2299 = vmul.f32 %v2281, %v2297
    %2301 = vrot.lane.b32.xlu0 %v2299, 32
    %v2302 = vpop.permute.xlu0 %2301
    %v2303 = vsel %vm71, %v2302, 0
    %2305 = vmatprep.subr.mxu0 0.0
    %2306 = vmatpush1.msra.mxu0 %v171
    %2307 = vmatprep.subr.mxu0 0.0
    %2308 = vmatpush1.msra.mxu0 %v172
    %2309 = vmatprep.subr.mxu0 0.0
    %2310 = vmatpush1.msra.mxu0 %v173
    %2311 = vmatprep.subr.mxu0 0.0
    %2312 = vmatpush1.msra.mxu0 %v174
    %2313 = vmatprep.subr.mxu0 0.0
    %2314 = vmatpush1.msra.mxu0 0.0
    %2315 = vmatprep.subr.mxu0 0.0
    %2316 = vmatpush1.msra.mxu0 0.0
    %2317 = vmatprep.subr.mxu0 0.0
    %2318 = vmatpush1.msra.mxu0 0.0
    %2319 = vmatprep.subr.mxu0 0.0
    %2320 = vmatpush1.msra.mxu0 0.0
    %2321 = vmatprep.subr.mxu0 0.0
    %2322 = vmatpush1.msra.mxu0 0.0
    %2323 = vmatprep.subr.mxu0 0.0
    %2324 = vmatpush1.msra.mxu0 0.0
    %2325 = vmatprep.subr.mxu0 0.0
    %2326 = vmatpush1.msra.mxu0 0.0
    %2327 = vmatprep.subr.mxu0 0.0
    %2328 = vmatpush1.msra.mxu0 0.0
    %2329 = vmatprep.subr.mxu0 0.0
    %2330 = vmatpush1.msra.mxu0 0.0
    %2331 = vmatprep.subr.mxu0 0.0
    %2332 = vmatpush1.msra.mxu0 0.0
    %2333 = vmatprep.subr.mxu0 0.0
    %2334 = vmatpush1.msra.mxu0 0.0
    %2335 = vmatprep.subr.mxu0 0.0
    %2336 = vmatpush1.msra.mxu0 0.0
    %2337 = vmatprep.subr.mxu0 0.0
    %2338 = vmatpush1.msra.mxu0 0.0
    %2339 = vmatprep.subr.mxu0 0.0
    %2340 = vmatpush1.msra.mxu0 0.0
    %2341 = vmatprep.subr.mxu0 0.0
    %2342 = vmatpush1.msra.mxu0 0.0
    %2343 = vmatprep.subr.mxu0 0.0
    %2344 = vmatpush1.msra.mxu0 0.0
    %2345 = vmatprep.subr.mxu0 0.0
    %2346 = vmatpush1.msra.mxu0 0.0
    %2347 = vmatprep.subr.mxu0 0.0
    %2348 = vmatpush1.msra.mxu0 0.0
    %2349 = vmatprep.subr.mxu0 0.0
    %2350 = vmatpush1.msra.mxu0 0.0
    %2351 = vmatprep.subr.mxu0 0.0
    %2352 = vmatpush1.msra.mxu0 0.0
    %2353 = vmatprep.subr.mxu0 0.0
    %2354 = vmatpush1.msra.mxu0 0.0
    %2355 = vmatprep.subr.mxu0 0.0
    %2356 = vmatpush1.msra.mxu0 0.0
    %2357 = vmatprep.subr.mxu0 0.0
    %2358 = vmatpush1.msra.mxu0 0.0
    %2359 = vmatprep.subr.mxu0 0.0
    %2360 = vmatpush1.msra.mxu0 0.0
    %2361 = vmatprep.subr.mxu0 0.0
    %2362 = vmatpush1.msra.mxu0 0.0
    %2363 = vmatprep.subr.mxu0 0.0
    %2364 = vmatpush1.msra.mxu0 0.0
    %2365 = vmatprep.subr.mxu0 0.0
    %2366 = vmatpush1.msra.mxu0 0.0
    %2367 = vmatprep.subr.mxu0 0.0
    %2368 = vmatpush1.msra.mxu0 0.0
    %2369 = vmatprep.mubr.f32.mxu0 0.0
    %2370 = vmatmul.mubr.f32.gmra.mrb[0].mxu0 %v2303
    %v2371 = vpop.f32.mrb[0].mxu0
    %v2372 = vadd.f32 %v192, %v2371
    %v2373 = vpop.f32.mrb[0].mxu0
    %2374 = vdwg.mxu0
    %v2377 = vunpack.c.l.s4 1966171168
    %v2378 = vunpack.c.0.s8 %v2377
    %v2379 = vlaneseq
    %v2380 = vshrl.u32 %v2379, 7
    %v2381 = vsub.s32 %v2378, %v2380
    %v2382 = vrot.slane %v2372, %v2381
    %v2383 = vcombine.high %v2382, %v2382
    %v2385 = vunpack.c.l.s4 1966171168
    %v2386 = vunpack.c.0.s8 %v2385
    %v2387 = vlaneseq
    %v2388 = vshrl.u32 %v2387, 7
    %v2389 = vsub.s32 %v2386, %v2388
    %v2390 = vrot.slane %v2382, %v2389
    %v2392 = vunpack.c.l.s4 1966171168
    %v2393 = vunpack.c.0.s8 %v2392
    %v2394 = vlaneseq
    %v2395 = vshrl.u32 %v2394, 7
    %v2396 = vsub.s32 %v2393, %v2395
    %v2397 = vrot.slane %v2383, %v2396
    %2400 = vst.msk [vmem:[%s9 + $0x4] sm:$0x1] %vm638, %v2390
    %2401 = vst.msk [vmem:[%s9 + $0xc] sm:$0x1] %vm638, %v2397
    %v2402 = vsel %vm641, %v2372, -inf
    %2403 = vmax.xlane.f32.xlu0 %v2402
    %v2404 = vpop.xlane.xlu0 %2403
    %vm2405 = vcmp.eq.f32.partialorder %v2372, %v2404
    %v2406 = vsel %vm2405, %v195, 16
    %v2407 = vsel %vm641, %v2406, 2147483647
    %v2408 = vand.u32 %v2407, 65535
    %v2409 = vshra.s32 %v2407, 16
    %v2410 = vcvt.s32.f32 %v2408
    %v2411 = vcvt.s32.f32 %v2409
    %2412 = vmin.xlane.f32.xlu0 %v2411
    %v2413 = vpop.xlane.xlu0 %2412
    %vm2414 = vcmp.eq.f32.partialorder %v2411, %v2413
    %v2415 = vsel %vm2414, %v2410, inf
    %2416 = vmin.xlane.f32.xlu0 %v2415
    %v2417 = vpop.xlane.xlu0 %2416
    %v2418 = vcvt.f32.s32 %v2417
    %v2419 = vcvt.f32.s32 %v2413
    %v2420 = vshll.u32 %v2419, 16
    %v2421 = vadd.s32 %v2420, %v2418
    %2422 = vmatprep.subr.mxu0 %v164
    %2423 = vmatpush1.msra.mxu0 %v163
    %2424 = vmatprep.subr.mxu0 %v166
    %2425 = vmatpush1.msra.mxu0 %v165
    %2426 = vmatprep.subr.mxu0 %v168
    %2427 = vmatpush1.msra.mxu0 %v167
    %2428 = vmatprep.subr.mxu0 %v170
    %2429 = vmatpush1.msra.mxu0 %v169
    %2430 = vmatprep.subr.mxu0 0.0
    %2431 = vmatpush1.msra.mxu0 0.0
    %2432 = vmatprep.subr.mxu0 0.0
    %2433 = vmatpush1.msra.mxu0 0.0
    %2434 = vmatprep.subr.mxu0 0.0
    %2435 = vmatpush1.msra.mxu0 0.0
    %2436 = vmatprep.subr.mxu0 0.0
    %2437 = vmatpush1.msra.mxu0 0.0
    %2438 = vmatprep.subr.mxu0 0.0
    %2439 = vmatpush1.msra.mxu0 0.0
    %2440 = vmatprep.subr.mxu0 0.0
    %2441 = vmatpush1.msra.mxu0 0.0
    %2442 = vmatprep.subr.mxu0 0.0
    %2443 = vmatpush1.msra.mxu0 0.0
    %2444 = vmatprep.subr.mxu0 0.0
    %2445 = vmatpush1.msra.mxu0 0.0
    %2446 = vmatprep.subr.mxu0 0.0
    %2447 = vmatpush1.msra.mxu0 0.0
    %2448 = vmatprep.subr.mxu0 0.0
    %2449 = vmatpush1.msra.mxu0 0.0
    %2450 = vmatprep.subr.mxu0 0.0
    %2451 = vmatpush1.msra.mxu0 0.0
    %2452 = vmatprep.subr.mxu0 0.0
    %2453 = vmatpush1.msra.mxu0 0.0
    %2454 = vmatprep.subr.mxu0 0.0
    %2455 = vmatpush1.msra.mxu0 0.0
    %2456 = vmatprep.subr.mxu0 0.0
    %2457 = vmatpush1.msra.mxu0 0.0
    %2458 = vmatprep.subr.mxu0 0.0
    %2459 = vmatpush1.msra.mxu0 0.0
    %2460 = vmatprep.subr.mxu0 0.0
    %2461 = vmatpush1.msra.mxu0 0.0
    %2462 = vmatprep.subr.mxu0 0.0
    %2463 = vmatpush1.msra.mxu0 0.0
    %2464 = vmatprep.subr.mxu0 0.0
    %2465 = vmatpush1.msra.mxu0 0.0
    %2466 = vmatprep.subr.mxu0 0.0
    %2467 = vmatpush1.msra.mxu0 0.0
    %2468 = vmatprep.subr.mxu0 0.0
    %2469 = vmatpush1.msra.mxu0 0.0
    %2470 = vmatprep.subr.mxu0 0.0
    %2471 = vmatpush1.msra.mxu0 0.0
    %2472 = vmatprep.subr.mxu0 0.0
    %2473 = vmatpush1.msra.mxu0 0.0
    %2474 = vmatprep.subr.mxu0 0.0
    %2475 = vmatpush1.msra.mxu0 0.0
    %2476 = vmatprep.subr.mxu0 0.0
    %2477 = vmatpush1.msra.mxu0 0.0
    %2478 = vmatprep.subr.mxu0 0.0
    %2479 = vmatpush1.msra.mxu0 0.0
    %2480 = vmatprep.subr.mxu0 0.0
    %2481 = vmatpush1.msra.mxu0 0.0
    %2482 = vmatprep.subr.mxu0 0.0
    %2483 = vmatpush1.msra.mxu0 0.0
    %2484 = vmatprep.subr.mxu0 0.0
    %2485 = vmatpush1.msra.mxu0 0.0
    %2486 = vmatprep.mubr.f32.mxu0 0.0
    %2487 = vmatmul.mubr.f32.gmra.mrb[0].mxu0 %v2303
    %v2488 = vpop.f32.mrb[0].mxu0
    %v2489 = vadd.f32 %v180, %v2488
    %v2490 = vpop.f32.mrb[0].mxu0
    %v2491 = vadd.f32 %v184, %v2490
    %2492 = vdwg.mxu0
    %v2495 = vunpack.c.l.s4 1966171168
    %v2496 = vunpack.c.0.s8 %v2495
    %v2497 = vlaneseq
    %v2498 = vshrl.u32 %v2497, 7
    %v2499 = vsub.s32 %v2496, %v2498
    %v2500 = vrot.slane %v2491, %v2499
    %v2501 = vcombine.high %v2500, %v2500
    %v2503 = vunpack.c.l.s4 1966171168
    %v2504 = vunpack.c.0.s8 %v2503
    %v2505 = vlaneseq
    %v2506 = vshrl.u32 %v2505, 7
    %v2507 = vsub.s32 %v2504, %v2506
    %v2508 = vrot.slane %v2500, %v2507
    %v2510 = vunpack.c.l.s4 1966171168
    %v2511 = vunpack.c.0.s8 %v2510
    %v2512 = vlaneseq
    %v2513 = vshrl.u32 %v2512, 7
    %v2514 = vsub.s32 %v2511, %v2513
    %v2515 = vrot.slane %v2501, %v2514
    %v2516 = vlaneseq
    %v2517 = vshrl.u32 %v2516, 7
    %v2518 = vsub.s32 0, %v2517
    %v2519 = vrot.slane %v2508, %v2518
    %v2520 = vlaneseq
    %v2521 = vshrl.u32 %v2520, 7
    %v2522 = vsub.s32 0, %v2521
    %v2523 = vrot.slane %v2515, %v2522
    %v2526 = vmul.f32 %v2519, %v145
    %v2527 = vmul.f32 %v2523, %v150
    %v2528 = vsel %vm305, %v2526, 0.0
    %2529 = vadd.xlane.f32.xlu0 %v2528
    %v2530 = vpop.xlane.xlu0 %2529
    %v2531 = vsel %vm305, %v2527, 0.0
    %2532 = vadd.xlane.f32.xlu0 %v2531
    %v2533 = vpop.xlane.xlu0 %2532
    %v2534 = vadd.f32 %v2530, %v324
    %v2535 = vadd.f32 %v2533, %v327
    %2538 = vset.pattern.permute.xlu0 0
    %2539 = vperm.xlu0 %2538, %v2534
    %v2540 = vpop.permute.xlu0 %2539
    %2541 = vset.pattern.permute.xlu0 0
    %2542 = vperm.xlu0 %2541, %v2535
    %v2543 = vpop.permute.xlu0 %2542
    %v2544 = vlaneseq
    %v2545 = vshrl.u32 %v2544, 7
    %v2546 = vsub.s32 %v195, %v2545
    %v2547 = vrot.slane %v2540, %v2546
    %v2548 = vlaneseq
    %v2549 = vshrl.u32 %v2548, 7
    %v2550 = vsub.s32 %v195, %v2549
    %v2551 = vrot.slane %v2543, %v2550
    %v2552 = vsel %vm348, %v2551, %v2547
    %v2554 = vsel %vm351, %v2552, -inf
    %2555 = vmax.xlane.f32.xlu0 %v2554
    %v2556 = vpop.xlane.xlu0 %2555
    %v2558 = vlaneseq
    %v2559 = vshrl.u32 %v2558, 7
    %v2560 = vsub.s32 0, %v2559
    %v2561 = vrot.slane %v2556, %v2560
    %v2562 = vlaneseq
    %v2563 = vshrl.u32 %v2562, 7
    %v2564 = vsub.s32 1, %v2563
    %v2565 = vrot.slane %v2556, %v2564
    %v2568 = vsub.f32 %v2534, %v2561
    %v2569 = vsub.f32 %v2535, %v2565
    %v2570 = vmul.f32 %v2568, 1.442695
    %v2571 = vpow.pop %v2570
    %v2572 = vmul.f32 %v2569, 1.442695
    %v2573 = vpow.pop %v2572
    %2576 = vset.pattern.permute.xlu0 0
    %2577 = vperm.xlu0 %2576, %v2571
    %v2578 = vpop.permute.xlu0 %2577
    %2579 = vset.pattern.permute.xlu0 0
    %2580 = vperm.xlu0 %2579, %v2573
    %v2581 = vpop.permute.xlu0 %2580
    %v2582 = vlaneseq
    %v2583 = vshrl.u32 %v2582, 7
    %v2584 = vsub.s32 %v195, %v2583
    %v2585 = vrot.slane %v2578, %v2584
    %v2586 = vlaneseq
    %v2587 = vshrl.u32 %v2586, 7
    %v2588 = vsub.s32 %v195, %v2587
    %v2589 = vrot.slane %v2581, %v2588
    %v2590 = vsel %vm348, %v2589, %v2585
    %v2592 = vsel %vm351, %v2590, 0.0
    %2593 = vadd.xlane.f32.xlu0 %v2592
    %v2594 = vpop.xlane.xlu0 %2593
    %v2595 = vrcp.pop %v2594
    %v2597 = vlaneseq
    %v2598 = vshrl.u32 %v2597, 7
    %v2599 = vsub.s32 0, %v2598
    %v2600 = vrot.slane %v2595, %v2599
    %v2601 = vlaneseq
    %v2602 = vshrl.u32 %v2601, 7
    %v2603 = vsub.s32 1, %v2602
    %v2604 = vrot.slane %v2595, %v2603
    %v2607 = vmul.f32 %v2571, %v2600
    %v2608 = vmul.f32 %v2573, %v2604
    %2610 = vset.pattern.permute.xlu0 0
    %2611 = vperm.xlu0 %2610, %v2607
    %v2612 = vpop.permute.xlu0 %2611
    %2615 = vset.pattern.permute.xlu0 0
    %2616 = vperm.xlu0 %2615, %v2608
    %v2617 = vpop.permute.xlu0 %2616
    %v2619 = vmul.f32 %v2612, %v58
    %v2620 = vmul.f32 %v2617, %v59
    %v2621 = vsel %vm71, %v2619, 0.0
    %v2622 = vrot.slane %v2621, 4
    %v2623 = vadd.f32 %v2621, %v2622
    %v2624 = vrot.slane %v2623, 2
    %v2625 = vadd.f32 %v2623, %v2624
    %v2626 = vrot.slane %v2625, 1
    %v2627 = vadd.f32 %v2625, %v2626
    %v2628 = vsel %vm71, %v2620, 0.0
    %v2629 = vrot.slane %v2628, 4
    %v2630 = vadd.f32 %v2628, %v2629
    %v2631 = vrot.slane %v2630, 2
    %v2632 = vadd.f32 %v2630, %v2631
    %v2633 = vrot.slane %v2632, 1
    %v2634 = vadd.f32 %v2632, %v2633
    %vm2635 = vcmp.eq.s32.totalorder %v195, %v2421
    %v2636 = vsel %vm2635, 1, 0
    %v2637 = vcvt.s32.f32 %v2636
    %v2640 = vsel %vm348, %v2634, %v2627
    %v2642 = vadd.f32 %v2637, %v2640
    %v2644 = vsel %vm71, %v2642, 0
    %2646 = vmatprep.subr.mxu0 0.0
    %2647 = vmatpush1.msra.mxu0 %v159
    %2648 = vmatprep.subr.mxu0 0.0
    %2649 = vmatpush1.msra.mxu0 %v160
    %2650 = vmatprep.subr.mxu0 0.0
    %2651 = vmatpush1.msra.mxu0 %v161
    %2652 = vmatprep.subr.mxu0 0.0
    %2653 = vmatpush1.msra.mxu0 %v162
    %2654 = vmatprep.subr.mxu0 0.0
    %2655 = vmatpush1.msra.mxu0 0.0
    %2656 = vmatprep.subr.mxu0 0.0
    %2657 = vmatpush1.msra.mxu0 0.0
    %2658 = vmatprep.subr.mxu0 0.0
    %2659 = vmatpush1.msra.mxu0 0.0
    %2660 = vmatprep.subr.mxu0 0.0
    %2661 = vmatpush1.msra.mxu0 0.0
    %2662 = vmatprep.subr.mxu0 0.0
    %2663 = vmatpush1.msra.mxu0 0.0
    %2664 = vmatprep.subr.mxu0 0.0
    %2665 = vmatpush1.msra.mxu0 0.0
    %2666 = vmatprep.subr.mxu0 0.0
    %2667 = vmatpush1.msra.mxu0 0.0
    %2668 = vmatprep.subr.mxu0 0.0
    %2669 = vmatpush1.msra.mxu0 0.0
    %2670 = vmatprep.subr.mxu0 0.0
    %2671 = vmatpush1.msra.mxu0 0.0
    %2672 = vmatprep.subr.mxu0 0.0
    %2673 = vmatpush1.msra.mxu0 0.0
    %2674 = vmatprep.subr.mxu0 0.0
    %2675 = vmatpush1.msra.mxu0 0.0
    %2676 = vmatprep.subr.mxu0 0.0
    %2677 = vmatpush1.msra.mxu0 0.0
    %2678 = vmatprep.subr.mxu0 0.0
    %2679 = vmatpush1.msra.mxu0 0.0
    %2680 = vmatprep.subr.mxu0 0.0
    %2681 = vmatpush1.msra.mxu0 0.0
    %2682 = vmatprep.subr.mxu0 0.0
    %2683 = vmatpush1.msra.mxu0 0.0
    %2684 = vmatprep.subr.mxu0 0.0
    %2685 = vmatpush1.msra.mxu0 0.0
    %2686 = vmatprep.subr.mxu0 0.0
    %2687 = vmatpush1.msra.mxu0 0.0
    %2688 = vmatprep.subr.mxu0 0.0
    %2689 = vmatpush1.msra.mxu0 0.0
    %2690 = vmatprep.subr.mxu0 0.0
    %2691 = vmatpush1.msra.mxu0 0.0
    %2692 = vmatprep.subr.mxu0 0.0
    %2693 = vmatpush1.msra.mxu0 0.0
    %2694 = vmatprep.subr.mxu0 0.0
    %2695 = vmatpush1.msra.mxu0 0.0
    %2696 = vmatprep.subr.mxu0 0.0
    %2697 = vmatpush1.msra.mxu0 0.0
    %2698 = vmatprep.subr.mxu0 0.0
    %2699 = vmatpush1.msra.mxu0 0.0
    %2700 = vmatprep.subr.mxu0 0.0
    %2701 = vmatpush1.msra.mxu0 0.0
    %2702 = vmatprep.subr.mxu0 0.0
    %2703 = vmatpush1.msra.mxu0 0.0
    %2704 = vmatprep.subr.mxu0 0.0
    %2705 = vmatpush1.msra.mxu0 0.0
    %2706 = vmatprep.subr.mxu0 0.0
    %2707 = vmatpush1.msra.mxu0 0.0
    %2708 = vmatprep.subr.mxu0 0.0
    %2709 = vmatpush1.msra.mxu0 0.0
    %2710 = vmatprep.mubr.f32.mxu0 0.0
    %2711 = vmatmul.mubr.f32.gmra.mrb[0].mxu0 %v2644
    %v2712 = vpop.f32.mrb[0].mxu0
    %v2713 = vadd.f32 %v2489, %v2712
    %v2714 = vpop.f32.mrb[0].mxu0
    %2715 = vdwg.mxu0
    %v2716 = vxor.u32 %v2713, 2147483648
    %v2717 = vmul.f32 %v2716, 1.442695
    %v2718 = vpow.pop %v2717
    %v2719 = vadd.f32 %v2718, 1.0
    %v2720 = vrcp.pop %v2719
    %v2721 = vmul.f32 1.0, %v2720
    %v2722 = vtanh.pop %v2713
    %v2723 = vmul.f32 %v2721, %v2293
    %2725 = vrot.lane.b32.xlu0 %v2722, 64
    %v2726 = vpop.permute.xlu0 %2725
    %v2728 = vmul.f32 %v2721, %v2726
    %2730 = vrot.lane.b32.xlu0 %v2728, 32
    %v2731 = vpop.permute.xlu0 %2730
    %v2733 = vadd.f32 %v2723, %v2731
    %v2734 = vtanh.pop %v2733
    %2736 = vrot.lane.b32.xlu0 %v2734, 64
    %v2737 = vpop.permute.xlu0 %2736
    %v2739 = vmul.f32 %v2721, %v2737
    %2741 = vrot.lane.b32.xlu0 %v2739, 32
    %v2742 = vpop.permute.xlu0 %2741
    %v2743 = vsel %vm71, %v2742, 0
    %2745 = vmatprep.subr.mxu0 0.0
    %2746 = vmatpush1.msra.mxu0 %v171
    %2747 = vmatprep.subr.mxu0 0.0
    %2748 = vmatpush1.msra.mxu0 %v172
    %2749 = vmatprep.subr.mxu0 0.0
    %2750 = vmatpush1.msra.mxu0 %v173
    %2751 = vmatprep.subr.mxu0 0.0
    %2752 = vmatpush1.msra.mxu0 %v174
    %2753 = vmatprep.subr.mxu0 0.0
    %2754 = vmatpush1.msra.mxu0 0.0
    %2755 = vmatprep.subr.mxu0 0.0
    %2756 = vmatpush1.msra.mxu0 0.0
    %2757 = vmatprep.subr.mxu0 0.0
    %2758 = vmatpush1.msra.mxu0 0.0
    %2759 = vmatprep.subr.mxu0 0.0
    %2760 = vmatpush1.msra.mxu0 0.0
    %2761 = vmatprep.subr.mxu0 0.0
    %2762 = vmatpush1.msra.mxu0 0.0
    %2763 = vmatprep.subr.mxu0 0.0
    %2764 = vmatpush1.msra.mxu0 0.0
    %2765 = vmatprep.subr.mxu0 0.0
    %2766 = vmatpush1.msra.mxu0 0.0
    %2767 = vmatprep.subr.mxu0 0.0
    %2768 = vmatpush1.msra.mxu0 0.0
    %2769 = vmatprep.subr.mxu0 0.0
    %2770 = vmatpush1.msra.mxu0 0.0
    %2771 = vmatprep.subr.mxu0 0.0
    %2772 = vmatpush1.msra.mxu0 0.0
    %2773 = vmatprep.subr.mxu0 0.0
    %2774 = vmatpush1.msra.mxu0 0.0
    %2775 = vmatprep.subr.mxu0 0.0
    %2776 = vmatpush1.msra.mxu0 0.0
    %2777 = vmatprep.subr.mxu0 0.0
    %2778 = vmatpush1.msra.mxu0 0.0
    %2779 = vmatprep.subr.mxu0 0.0
    %2780 = vmatpush1.msra.mxu0 0.0
    %2781 = vmatprep.subr.mxu0 0.0
    %2782 = vmatpush1.msra.mxu0 0.0
    %2783 = vmatprep.subr.mxu0 0.0
    %2784 = vmatpush1.msra.mxu0 0.0
    %2785 = vmatprep.subr.mxu0 0.0
    %2786 = vmatpush1.msra.mxu0 0.0
    %2787 = vmatprep.subr.mxu0 0.0
    %2788 = vmatpush1.msra.mxu0 0.0
    %2789 = vmatprep.subr.mxu0 0.0
    %2790 = vmatpush1.msra.mxu0 0.0
    %2791 = vmatprep.subr.mxu0 0.0
    %2792 = vmatpush1.msra.mxu0 0.0
    %2793 = vmatprep.subr.mxu0 0.0
    %2794 = vmatpush1.msra.mxu0 0.0
    %2795 = vmatprep.subr.mxu0 0.0
    %2796 = vmatpush1.msra.mxu0 0.0
    %2797 = vmatprep.subr.mxu0 0.0
    %2798 = vmatpush1.msra.mxu0 0.0
    %2799 = vmatprep.subr.mxu0 0.0
    %2800 = vmatpush1.msra.mxu0 0.0
    %2801 = vmatprep.subr.mxu0 0.0
    %2802 = vmatpush1.msra.mxu0 0.0
    %2803 = vmatprep.subr.mxu0 0.0
    %2804 = vmatpush1.msra.mxu0 0.0
    %2805 = vmatprep.subr.mxu0 0.0
    %2806 = vmatpush1.msra.mxu0 0.0
    %2807 = vmatprep.subr.mxu0 0.0
    %2808 = vmatpush1.msra.mxu0 0.0
    %2809 = vmatprep.mubr.f32.mxu0 0.0
    %2810 = vmatmul.mubr.f32.gmra.mrb[0].mxu0 %v2743
    %v2811 = vpop.f32.mrb[0].mxu0
    %v2812 = vadd.f32 %v192, %v2811
    %v2813 = vpop.f32.mrb[0].mxu0
    %2814 = vdwg.mxu0
    %v2817 = vunpack.c.l.s4 1966171168
    %v2818 = vunpack.c.0.s8 %v2817
    %v2819 = vlaneseq
    %v2820 = vshrl.u32 %v2819, 7
    %v2821 = vsub.s32 %v2818, %v2820
    %v2822 = vrot.slane %v2812, %v2821
    %v2823 = vcombine.high %v2822, %v2822
    %v2825 = vunpack.c.l.s4 1966171168
    %v2826 = vunpack.c.0.s8 %v2825
    %v2827 = vlaneseq
    %v2828 = vshrl.u32 %v2827, 7
    %v2829 = vsub.s32 %v2826, %v2828
    %v2830 = vrot.slane %v2822, %v2829
    %v2832 = vunpack.c.l.s4 1966171168
    %v2833 = vunpack.c.0.s8 %v2832
    %v2834 = vlaneseq
    %v2835 = vshrl.u32 %v2834, 7
    %v2836 = vsub.s32 %v2833, %v2835
    %v2837 = vrot.slane %v2823, %v2836
    %2840 = vst.msk [vmem:[%s9 + $0x5] sm:$0x1] %vm638, %v2830
    %2841 = vst.msk [vmem:[%s9 + $0xd] sm:$0x1] %vm638, %v2837
    %v2842 = vsel %vm641, %v2812, -inf
    %2843 = vmax.xlane.f32.xlu0 %v2842
    %v2844 = vpop.xlane.xlu0 %2843
    %vm2845 = vcmp.eq.f32.partialorder %v2812, %v2844
    %v2846 = vsel %vm2845, %v195, 16
    %v2847 = vsel %vm641, %v2846, 2147483647
    %v2848 = vand.u32 %v2847, 65535
    %v2849 = vshra.s32 %v2847, 16
    %v2850 = vcvt.s32.f32 %v2848
    %v2851 = vcvt.s32.f32 %v2849
    %2852 = vmin.xlane.f32.xlu0 %v2851
    %v2853 = vpop.xlane.xlu0 %2852
    %vm2854 = vcmp.eq.f32.partialorder %v2851, %v2853
    %v2855 = vsel %vm2854, %v2850, inf
    %2856 = vmin.xlane.f32.xlu0 %v2855
    %v2857 = vpop.xlane.xlu0 %2856
    %v2858 = vcvt.f32.s32 %v2857
    %v2859 = vcvt.f32.s32 %v2853
    %v2860 = vshll.u32 %v2859, 16
    %v2861 = vadd.s32 %v2860, %v2858
    %2862 = vmatprep.subr.mxu0 %v164
    %2863 = vmatpush1.msra.mxu0 %v163
    %2864 = vmatprep.subr.mxu0 %v166
    %2865 = vmatpush1.msra.mxu0 %v165
    %2866 = vmatprep.subr.mxu0 %v168
    %2867 = vmatpush1.msra.mxu0 %v167
    %2868 = vmatprep.subr.mxu0 %v170
    %2869 = vmatpush1.msra.mxu0 %v169
    %2870 = vmatprep.subr.mxu0 0.0
    %2871 = vmatpush1.msra.mxu0 0.0
    %2872 = vmatprep.subr.mxu0 0.0
    %2873 = vmatpush1.msra.mxu0 0.0
    %2874 = vmatprep.subr.mxu0 0.0
    %2875 = vmatpush1.msra.mxu0 0.0
    %2876 = vmatprep.subr.mxu0 0.0
    %2877 = vmatpush1.msra.mxu0 0.0
    %2878 = vmatprep.subr.mxu0 0.0
    %2879 = vmatpush1.msra.mxu0 0.0
    %2880 = vmatprep.subr.mxu0 0.0
    %2881 = vmatpush1.msra.mxu0 0.0
    %2882 = vmatprep.subr.mxu0 0.0
    %2883 = vmatpush1.msra.mxu0 0.0
    %2884 = vmatprep.subr.mxu0 0.0
    %2885 = vmatpush1.msra.mxu0 0.0
    %2886 = vmatprep.subr.mxu0 0.0
    %2887 = vmatpush1.msra.mxu0 0.0
    %2888 = vmatprep.subr.mxu0 0.0
    %2889 = vmatpush1.msra.mxu0 0.0
    %2890 = vmatprep.subr.mxu0 0.0
    %2891 = vmatpush1.msra.mxu0 0.0
    %2892 = vmatprep.subr.mxu0 0.0
    %2893 = vmatpush1.msra.mxu0 0.0
    %2894 = vmatprep.subr.mxu0 0.0
    %2895 = vmatpush1.msra.mxu0 0.0
    %2896 = vmatprep.subr.mxu0 0.0
    %2897 = vmatpush1.msra.mxu0 0.0
    %2898 = vmatprep.subr.mxu0 0.0
    %2899 = vmatpush1.msra.mxu0 0.0
    %2900 = vmatprep.subr.mxu0 0.0
    %2901 = vmatpush1.msra.mxu0 0.0
    %2902 = vmatprep.subr.mxu0 0.0
    %2903 = vmatpush1.msra.mxu0 0.0
    %2904 = vmatprep.subr.mxu0 0.0
    %2905 = vmatpush1.msra.mxu0 0.0
    %2906 = vmatprep.subr.mxu0 0.0
    %2907 = vmatpush1.msra.mxu0 0.0
    %2908 = vmatprep.subr.mxu0 0.0
    %2909 = vmatpush1.msra.mxu0 0.0
    %2910 = vmatprep.subr.mxu0 0.0
    %2911 = vmatpush1.msra.mxu0 0.0
    %2912 = vmatprep.subr.mxu0 0.0
    %2913 = vmatpush1.msra.mxu0 0.0
    %2914 = vmatprep.subr.mxu0 0.0
    %2915 = vmatpush1.msra.mxu0 0.0
    %2916 = vmatprep.subr.mxu0 0.0
    %2917 = vmatpush1.msra.mxu0 0.0
    %2918 = vmatprep.subr.mxu0 0.0
    %2919 = vmatpush1.msra.mxu0 0.0
    %2920 = vmatprep.subr.mxu0 0.0
    %2921 = vmatpush1.msra.mxu0 0.0
    %2922 = vmatprep.subr.mxu0 0.0
    %2923 = vmatpush1.msra.mxu0 0.0
    %2924 = vmatprep.subr.mxu0 0.0
    %2925 = vmatpush1.msra.mxu0 0.0
    %2926 = vmatprep.mubr.f32.mxu0 0.0
    %2927 = vmatmul.mubr.f32.gmra.mrb[0].mxu0 %v2743
    %v2928 = vpop.f32.mrb[0].mxu0
    %v2929 = vadd.f32 %v180, %v2928
    %v2930 = vpop.f32.mrb[0].mxu0
    %v2931 = vadd.f32 %v184, %v2930
    %2932 = vdwg.mxu0
    %v2935 = vunpack.c.l.s4 1966171168
    %v2936 = vunpack.c.0.s8 %v2935
    %v2937 = vlaneseq
    %v2938 = vshrl.u32 %v2937, 7
    %v2939 = vsub.s32 %v2936, %v2938
    %v2940 = vrot.slane %v2931, %v2939
    %v2941 = vcombine.high %v2940, %v2940
    %v2943 = vunpack.c.l.s4 1966171168
    %v2944 = vunpack.c.0.s8 %v2943
    %v2945 = vlaneseq
    %v2946 = vshrl.u32 %v2945, 7
    %v2947 = vsub.s32 %v2944, %v2946
    %v2948 = vrot.slane %v2940, %v2947
    %v2950 = vunpack.c.l.s4 1966171168
    %v2951 = vunpack.c.0.s8 %v2950
    %v2952 = vlaneseq
    %v2953 = vshrl.u32 %v2952, 7
    %v2954 = vsub.s32 %v2951, %v2953
    %v2955 = vrot.slane %v2941, %v2954
    %v2956 = vlaneseq
    %v2957 = vshrl.u32 %v2956, 7
    %v2958 = vsub.s32 0, %v2957
    %v2959 = vrot.slane %v2948, %v2958
    %v2960 = vlaneseq
    %v2961 = vshrl.u32 %v2960, 7
    %v2962 = vsub.s32 0, %v2961
    %v2963 = vrot.slane %v2955, %v2962
    %v2966 = vmul.f32 %v2959, %v145
    %v2967 = vmul.f32 %v2963, %v150
    %v2968 = vsel %vm305, %v2966, 0.0
    %2969 = vadd.xlane.f32.xlu0 %v2968
    %v2970 = vpop.xlane.xlu0 %2969
    %v2971 = vsel %vm305, %v2967, 0.0
    %2972 = vadd.xlane.f32.xlu0 %v2971
    %v2973 = vpop.xlane.xlu0 %2972
    %v2974 = vadd.f32 %v2970, %v324
    %v2975 = vadd.f32 %v2973, %v327
    %2978 = vset.pattern.permute.xlu0 0
    %2979 = vperm.xlu0 %2978, %v2974
    %v2980 = vpop.permute.xlu0 %2979
    %2981 = vset.pattern.permute.xlu0 0
    %2982 = vperm.xlu0 %2981, %v2975
    %v2983 = vpop.permute.xlu0 %2982
    %v2984 = vlaneseq
    %v2985 = vshrl.u32 %v2984, 7
    %v2986 = vsub.s32 %v195, %v2985
    %v2987 = vrot.slane %v2980, %v2986
    %v2988 = vlaneseq
    %v2989 = vshrl.u32 %v2988, 7
    %v2990 = vsub.s32 %v195, %v2989
    %v2991 = vrot.slane %v2983, %v2990
    %v2992 = vsel %vm348, %v2991, %v2987
    %v2994 = vsel %vm351, %v2992, -inf
    %2995 = vmax.xlane.f32.xlu0 %v2994
    %v2996 = vpop.xlane.xlu0 %2995
    %v2998 = vlaneseq
    %v2999 = vshrl.u32 %v2998, 7
    %v3000 = vsub.s32 0, %v2999
    %v3001 = vrot.slane %v2996, %v3000
    %v3002 = vlaneseq
    %v3003 = vshrl.u32 %v3002, 7
    %v3004 = vsub.s32 1, %v3003
    %v3005 = vrot.slane %v2996, %v3004
    %v3008 = vsub.f32 %v2974, %v3001
    %v3009 = vsub.f32 %v2975, %v3005
    %v3010 = vmul.f32 %v3008, 1.442695
    %v3011 = vpow.pop %v3010
    %v3012 = vmul.f32 %v3009, 1.442695
    %v3013 = vpow.pop %v3012
    %3016 = vset.pattern.permute.xlu0 0
    %3017 = vperm.xlu0 %3016, %v3011
    %v3018 = vpop.permute.xlu0 %3017
    %3019 = vset.pattern.permute.xlu0 0
    %3020 = vperm.xlu0 %3019, %v3013
    %v3021 = vpop.permute.xlu0 %3020
    %v3022 = vlaneseq
    %v3023 = vshrl.u32 %v3022, 7
    %v3024 = vsub.s32 %v195, %v3023
    %v3025 = vrot.slane %v3018, %v3024
    %v3026 = vlaneseq
    %v3027 = vshrl.u32 %v3026, 7
    %v3028 = vsub.s32 %v195, %v3027
    %v3029 = vrot.slane %v3021, %v3028
    %v3030 = vsel %vm348, %v3029, %v3025
    %v3032 = vsel %vm351, %v3030, 0.0
    %3033 = vadd.xlane.f32.xlu0 %v3032
    %v3034 = vpop.xlane.xlu0 %3033
    %v3035 = vrcp.pop %v3034
    %v3037 = vlaneseq
    %v3038 = vshrl.u32 %v3037, 7
    %v3039 = vsub.s32 0, %v3038
    %v3040 = vrot.slane %v3035, %v3039
    %v3041 = vlaneseq
    %v3042 = vshrl.u32 %v3041, 7
    %v3043 = vsub.s32 1, %v3042
    %v3044 = vrot.slane %v3035, %v3043
    %v3047 = vmul.f32 %v3011, %v3040
    %v3048 = vmul.f32 %v3013, %v3044
    %3050 = vset.pattern.permute.xlu0 0
    %3051 = vperm.xlu0 %3050, %v3047
    %v3052 = vpop.permute.xlu0 %3051
    %3055 = vset.pattern.permute.xlu0 0
    %3056 = vperm.xlu0 %3055, %v3048
    %v3057 = vpop.permute.xlu0 %3056
    %v3059 = vmul.f32 %v3052, %v58
    %v3060 = vmul.f32 %v3057, %v59
    %v3061 = vsel %vm71, %v3059, 0.0
    %v3062 = vrot.slane %v3061, 4
    %v3063 = vadd.f32 %v3061, %v3062
    %v3064 = vrot.slane %v3063, 2
    %v3065 = vadd.f32 %v3063, %v3064
    %v3066 = vrot.slane %v3065, 1
    %v3067 = vadd.f32 %v3065, %v3066
    %v3068 = vsel %vm71, %v3060, 0.0
    %v3069 = vrot.slane %v3068, 4
    %v3070 = vadd.f32 %v3068, %v3069
    %v3071 = vrot.slane %v3070, 2
    %v3072 = vadd.f32 %v3070, %v3071
    %v3073 = vrot.slane %v3072, 1
    %v3074 = vadd.f32 %v3072, %v3073
    %vm3075 = vcmp.eq.s32.totalorder %v195, %v2861
    %v3076 = vsel %vm3075, 1, 0
    %v3077 = vcvt.s32.f32 %v3076
    %v3080 = vsel %vm348, %v3074, %v3067
    %v3082 = vadd.f32 %v3077, %v3080
    %v3084 = vsel %vm71, %v3082, 0
    %3086 = vmatprep.subr.mxu0 0.0
    %3087 = vmatpush1.msra.mxu0 %v159
    %3088 = vmatprep.subr.mxu0 0.0
    %3089 = vmatpush1.msra.mxu0 %v160
    %3090 = vmatprep.subr.mxu0 0.0
    %3091 = vmatpush1.msra.mxu0 %v161
    %3092 = vmatprep.subr.mxu0 0.0
    %3093 = vmatpush1.msra.mxu0 %v162
    %3094 = vmatprep.subr.mxu0 0.0
    %3095 = vmatpush1.msra.mxu0 0.0
    %3096 = vmatprep.subr.mxu0 0.0
    %3097 = vmatpush1.msra.mxu0 0.0
    %3098 = vmatprep.subr.mxu0 0.0
    %3099 = vmatpush1.msra.mxu0 0.0
    %3100 = vmatprep.subr.mxu0 0.0
    %3101 = vmatpush1.msra.mxu0 0.0
    %3102 = vmatprep.subr.mxu0 0.0
    %3103 = vmatpush1.msra.mxu0 0.0
    %3104 = vmatprep.subr.mxu0 0.0
    %3105 = vmatpush1.msra.mxu0 0.0
    %3106 = vmatprep.subr.mxu0 0.0
    %3107 = vmatpush1.msra.mxu0 0.0
    %3108 = vmatprep.subr.mxu0 0.0
    %3109 = vmatpush1.msra.mxu0 0.0
    %3110 = vmatprep.subr.mxu0 0.0
    %3111 = vmatpush1.msra.mxu0 0.0
    %3112 = vmatprep.subr.mxu0 0.0
    %3113 = vmatpush1.msra.mxu0 0.0
    %3114 = vmatprep.subr.mxu0 0.0
    %3115 = vmatpush1.msra.mxu0 0.0
    %3116 = vmatprep.subr.mxu0 0.0
    %3117 = vmatpush1.msra.mxu0 0.0
    %3118 = vmatprep.subr.mxu0 0.0
    %3119 = vmatpush1.msra.mxu0 0.0
    %3120 = vmatprep.subr.mxu0 0.0
    %3121 = vmatpush1.msra.mxu0 0.0
    %3122 = vmatprep.subr.mxu0 0.0
    %3123 = vmatpush1.msra.mxu0 0.0
    %3124 = vmatprep.subr.mxu0 0.0
    %3125 = vmatpush1.msra.mxu0 0.0
    %3126 = vmatprep.subr.mxu0 0.0
    %3127 = vmatpush1.msra.mxu0 0.0
    %3128 = vmatprep.subr.mxu0 0.0
    %3129 = vmatpush1.msra.mxu0 0.0
    %3130 = vmatprep.subr.mxu0 0.0
    %3131 = vmatpush1.msra.mxu0 0.0
    %3132 = vmatprep.subr.mxu0 0.0
    %3133 = vmatpush1.msra.mxu0 0.0
    %3134 = vmatprep.subr.mxu0 0.0
    %3135 = vmatpush1.msra.mxu0 0.0
    %3136 = vmatprep.subr.mxu0 0.0
    %3137 = vmatpush1.msra.mxu0 0.0
    %3138 = vmatprep.subr.mxu0 0.0
    %3139 = vmatpush1.msra.mxu0 0.0
    %3140 = vmatprep.subr.mxu0 0.0
    %3141 = vmatpush1.msra.mxu0 0.0
    %3142 = vmatprep.subr.mxu0 0.0
    %3143 = vmatpush1.msra.mxu0 0.0
    %3144 = vmatprep.subr.mxu0 0.0
    %3145 = vmatpush1.msra.mxu0 0.0
    %3146 = vmatprep.subr.mxu0 0.0
    %3147 = vmatpush1.msra.mxu0 0.0
    %3148 = vmatprep.subr.mxu0 0.0
    %3149 = vmatpush1.msra.mxu0 0.0
    %3150 = vmatprep.mubr.f32.mxu0 0.0
    %3151 = vmatmul.mubr.f32.gmra.mrb[0].mxu0 %v3084
    %v3152 = vpop.f32.mrb[0].mxu0
    %v3153 = vadd.f32 %v2929, %v3152
    %v3154 = vpop.f32.mrb[0].mxu0
    %3155 = vdwg.mxu0
    %v3156 = vxor.u32 %v3153, 2147483648
    %v3157 = vmul.f32 %v3156, 1.442695
    %v3158 = vpow.pop %v3157
    %v3159 = vadd.f32 %v3158, 1.0
    %v3160 = vrcp.pop %v3159
    %v3161 = vmul.f32 1.0, %v3160
    %v3162 = vtanh.pop %v3153
    %v3163 = vmul.f32 %v3161, %v2733
    %3165 = vrot.lane.b32.xlu0 %v3162, 64
    %v3166 = vpop.permute.xlu0 %3165
    %v3168 = vmul.f32 %v3161, %v3166
    %3170 = vrot.lane.b32.xlu0 %v3168, 32
    %v3171 = vpop.permute.xlu0 %3170
    %v3173 = vadd.f32 %v3163, %v3171
    %v3174 = vtanh.pop %v3173
    %3176 = vrot.lane.b32.xlu0 %v3174, 64
    %v3177 = vpop.permute.xlu0 %3176
    %v3179 = vmul.f32 %v3161, %v3177
    %3181 = vrot.lane.b32.xlu0 %v3179, 32
    %v3182 = vpop.permute.xlu0 %3181
    %v3183 = vsel %vm71, %v3182, 0
    %3185 = vmatprep.subr.mxu0 0.0
    %3186 = vmatpush1.msra.mxu0 %v171
    %3187 = vmatprep.subr.mxu0 0.0
    %3188 = vmatpush1.msra.mxu0 %v172
    %3189 = vmatprep.subr.mxu0 0.0
    %3190 = vmatpush1.msra.mxu0 %v173
    %3191 = vmatprep.subr.mxu0 0.0
    %3192 = vmatpush1.msra.mxu0 %v174
    %3193 = vmatprep.subr.mxu0 0.0
    %3194 = vmatpush1.msra.mxu0 0.0
    %3195 = vmatprep.subr.mxu0 0.0
    %3196 = vmatpush1.msra.mxu0 0.0
    %3197 = vmatprep.subr.mxu0 0.0
    %3198 = vmatpush1.msra.mxu0 0.0
    %3199 = vmatprep.subr.mxu0 0.0
    %3200 = vmatpush1.msra.mxu0 0.0
    %3201 = vmatprep.subr.mxu0 0.0
    %3202 = vmatpush1.msra.mxu0 0.0
    %3203 = vmatprep.subr.mxu0 0.0
    %3204 = vmatpush1.msra.mxu0 0.0
    %3205 = vmatprep.subr.mxu0 0.0
    %3206 = vmatpush1.msra.mxu0 0.0
    %3207 = vmatprep.subr.mxu0 0.0
    %3208 = vmatpush1.msra.mxu0 0.0
    %3209 = vmatprep.subr.mxu0 0.0
    %3210 = vmatpush1.msra.mxu0 0.0
    %3211 = vmatprep.subr.mxu0 0.0
    %3212 = vmatpush1.msra.mxu0 0.0
    %3213 = vmatprep.subr.mxu0 0.0
    %3214 = vmatpush1.msra.mxu0 0.0
    %3215 = vmatprep.subr.mxu0 0.0
    %3216 = vmatpush1.msra.mxu0 0.0
    %3217 = vmatprep.subr.mxu0 0.0
    %3218 = vmatpush1.msra.mxu0 0.0
    %3219 = vmatprep.subr.mxu0 0.0
    %3220 = vmatpush1.msra.mxu0 0.0
    %3221 = vmatprep.subr.mxu0 0.0
    %3222 = vmatpush1.msra.mxu0 0.0
    %3223 = vmatprep.subr.mxu0 0.0
    %3224 = vmatpush1.msra.mxu0 0.0
    %3225 = vmatprep.subr.mxu0 0.0
    %3226 = vmatpush1.msra.mxu0 0.0
    %3227 = vmatprep.subr.mxu0 0.0
    %3228 = vmatpush1.msra.mxu0 0.0
    %3229 = vmatprep.subr.mxu0 0.0
    %3230 = vmatpush1.msra.mxu0 0.0
    %3231 = vmatprep.subr.mxu0 0.0
    %3232 = vmatpush1.msra.mxu0 0.0
    %3233 = vmatprep.subr.mxu0 0.0
    %3234 = vmatpush1.msra.mxu0 0.0
    %3235 = vmatprep.subr.mxu0 0.0
    %3236 = vmatpush1.msra.mxu0 0.0
    %3237 = vmatprep.subr.mxu0 0.0
    %3238 = vmatpush1.msra.mxu0 0.0
    %3239 = vmatprep.subr.mxu0 0.0
    %3240 = vmatpush1.msra.mxu0 0.0
    %3241 = vmatprep.subr.mxu0 0.0
    %3242 = vmatpush1.msra.mxu0 0.0
    %3243 = vmatprep.subr.mxu0 0.0
    %3244 = vmatpush1.msra.mxu0 0.0
    %3245 = vmatprep.subr.mxu0 0.0
    %3246 = vmatpush1.msra.mxu0 0.0
    %3247 = vmatprep.subr.mxu0 0.0
    %3248 = vmatpush1.msra.mxu0 0.0
    %3249 = vmatprep.mubr.f32.mxu0 0.0
    %3250 = vmatmul.mubr.f32.gmra.mrb[0].mxu0 %v3183
    %v3251 = vpop.f32.mrb[0].mxu0
    %v3252 = vadd.f32 %v192, %v3251
    %v3253 = vpop.f32.mrb[0].mxu0
    %3254 = vdwg.mxu0
    %v3257 = vunpack.c.l.s4 1966171168
    %v3258 = vunpack.c.0.s8 %v3257
    %v3259 = vlaneseq
    %v3260 = vshrl.u32 %v3259, 7
    %v3261 = vsub.s32 %v3258, %v3260
    %v3262 = vrot.slane %v3252, %v3261
    %v3263 = vcombine.high %v3262, %v3262
    %v3265 = vunpack.c.l.s4 1966171168
    %v3266 = vunpack.c.0.s8 %v3265
    %v3267 = vlaneseq
    %v3268 = vshrl.u32 %v3267, 7
    %v3269 = vsub.s32 %v3266, %v3268
    %v3270 = vrot.slane %v3262, %v3269
    %v3272 = vunpack.c.l.s4 1966171168
    %v3273 = vunpack.c.0.s8 %v3272
    %v3274 = vlaneseq
    %v3275 = vshrl.u32 %v3274, 7
    %v3276 = vsub.s32 %v3273, %v3275
    %v3277 = vrot.slane %v3263, %v3276
    %3280 = vst.msk [vmem:[%s9 + $0x6] sm:$0x1] %vm638, %v3270
    %3281 = vst.msk [vmem:[%s9 + $0xe] sm:$0x1] %vm638, %v3277
    // Predicated region
    $region46: #{tpu_custom_call.1} parent=1 // pred_check
      _
    $region47: #{tpu_custom_call.1} parent=1 // pred_check_branch
      %3283 = sbr.rel (0) target = $region49
    $region48: #{tpu_custom_call.1} parent=1 // pred_region
      _
    $region49: #{tpu_custom_call.1} parent=1 // pred_fallthru
      _
    // Predicated region
    $region50: #{tpu_custom_call.1} parent=1 // pred_check
      _
    $region51: #{tpu_custom_call.1} parent=1 // pred_check_branch
      %3285 = sbr.rel (0) target = $region53
    $region52: #{tpu_custom_call.1} parent=1 // pred_region
      _
    $region53: #{tpu_custom_call.1} parent=1 // pred_fallthru
      _
    %3286 = vsyncpa [#allocation3], 1
    %3287 = vsyncpa [#allocation5], 1

</llo_original>
